<compile_context>
chip_gen: v7x
topology: tpu7x:2x2x1
jax: 0.10.0
libtpu: 0.0.40
codegen_flags: <defaults>
</compile_context>

<pallas_src>
import functools

import jax
import jax.numpy as jnp
from jax.experimental import pallas as pl
from jax.experimental.pallas import tpu as pltpu


# ----------------------------- fused kernel ---------------------------------
def _disc_fused_kernel(p1_ref, w1_ref, b1_ref, w2_ref, b2_ref, w3_ref, b3_ref,
                       wl1_ref, bl1_ref, wl2_ref, bl2_ref, o_ref, *, batch):
    f32 = jnp.float32
    hi = jax.lax.Precision.HIGHEST
    N = batch

    def leaky(v):
        return jnp.where(v > 0, v, 0.2 * v)

    # ---- layer 1: Conv1d(1->64,k4,s2,p1) + MaxPool(2,2) + LeakyReLU --------
    # p1 rows are ordered (parity e, batch n, phase r, m); row e*16N+n*16+r*4+m
    # holds the taps of conv output position 8m+2r+e.
    c1 = jnp.dot(p1_ref[...], w1_ref[...], precision=hi,
                 preferred_element_type=f32)                      # (32N, 64)
    half1 = 16 * N
    pool1 = jnp.maximum(c1[0:half1, :], c1[half1:2 * half1, :]) + b1_ref[...]
    a1 = leaky(pool1)          # (16N, 64); row n*16 + r*4 + m  <->  (n, pos=4m+r)

    zrow = jnp.zeros((1, a1.shape[1]), f32)

    def phase(n, r):           # activations at positions 4m+r, m=0..3 -> (4, 64)
        s = n * 16 + r * 4
        return a1[s:s + 4, :]

    # ---- layer 2 patches (stride-parity decomposition, static slices only) -
    even_blocks, odd_blocks = [], []
    for n in range(N):
        ph0, ph1, ph2, ph3 = (phase(n, 0), phase(n, 1), phase(n, 2), phase(n, 3))
        ph3_dn = jnp.concatenate([zrow, ph3[0:3, :]], axis=0)     # pos 4m-1 (left pad)
        ph0_up = jnp.concatenate([ph0[1:4, :], zrow], axis=0)     # pos 4m+4 (right pad)
        # conv2 output at lo=2m   uses a1 positions {4m-1, 4m, 4m+1, 4m+2}
        even_blocks.append(jnp.concatenate([ph3_dn, ph0, ph1, ph2], axis=1))   # (4, 256)
        # conv2 output at lo=2m+1 uses a1 positions {4m+1, 4m+2, 4m+3, 4m+4}
        odd_blocks.append(jnp.concatenate([ph1, ph2, ph3, ph0_up], axis=1))    # (4, 256)
    p2 = jnp.concatenate(even_blocks + odd_blocks, axis=0)        # (8N, 256)

    # ---- layer 2: Conv1d(64->128,k4,s2,p1) + MaxPool(2,2) + LeakyReLU ------
    c2 = jnp.dot(p2, w2_ref[...], precision=hi,
                 preferred_element_type=f32)                      # (8N, 128)
    half2 = 4 * N
    pool2 = jnp.maximum(c2[0:half2, :], c2[half2:2 * half2, :]) + b2_ref[...]
    a2 = leaky(pool2)          # (4N, 128); row n*4 + m  <->  (n, pos=m)

    # ---- layer 3: Conv1d(128->128,k4,s1,p0) on length 4 -> length 1 --------
    p3 = jnp.concatenate(
        [jnp.concatenate([a2[n * 4 + k:n * 4 + k + 1, :] for k in range(4)], axis=1)
         for n in range(N)], axis=0)                              # (N, 512)
    c3 = jnp.dot(p3, w3_ref[...], precision=hi,
                 preferred_element_type=f32) + b3_ref[...]        # (N, 128)  == squeeze()

    # ---- linear head: Linear(128,24)+Tanh, Linear(24,1)+Sigmoid ------------
    h = jnp.tanh(jnp.dot(c3, wl1_ref[...], precision=hi,
                         preferred_element_type=f32) + bl1_ref[...])          # (N, 24)
    logit = jnp.dot(h, wl2_ref[...], precision=hi,
                    preferred_element_type=f32) + bl2_ref[...]                # (N, 1)
    o_ref[...] = 1.0 / (1.0 + jnp.exp(-logit))


# ------------------------------ wrappers -------------------------------------
def _full_spec(shape):
    return pl.BlockSpec(shape, lambda i: (0,) * len(shape))


def prepare_params(params):
    """One-time (hoisted) weight re-layout: PyTorch conv/linear weights -> matmul mats."""
    (w1, b1), (w2, b2), (w3, b3), (wl1, bl1), (wl2, bl2) = params
    w1m = jnp.transpose(w1[:, 0, :])                               # (4, 64)   [k, co]
    w2m = jnp.transpose(w2, (2, 1, 0)).reshape(4 * 64, 128)        # [k*64+ci, co]
    w3m = jnp.transpose(w3, (2, 1, 0)).reshape(4 * 128, 128)       # [k*128+ci, co]
    wl1m = wl1.T                                                   # (128, 24)
    wl2m = wl2.T                                                   # (24, 1)
    return (w1m, b1.reshape(1, -1), w2m, b2.reshape(1, -1),
            w3m, b3.reshape(1, -1), wl1m, bl1.reshape(1, -1),
            wl2m, bl2.reshape(1, -1))


def build_layer1_patches(x):
    """x: (N,1,64) -> (32N, 4) patch matrix, rows ordered (parity, n, phase r, m)."""
    # TODO(synk): this input-only im2col stays in the wrapper (single tiny gather);
    # moving it in-kernel would need strided ref reads, no benefit at this size.
    N = x.shape[0]
    x_pad = jnp.pad(x[:, 0, :], ((0, 0), (1, 1)))                  # (N, 66)
    e = jnp.arange(2).reshape(2, 1, 1, 1, 1)
    n = jnp.arange(N).reshape(1, N, 1, 1, 1)
    r = jnp.arange(4).reshape(1, 1, 4, 1, 1)
    m = jnp.arange(4).reshape(1, 1, 1, 4, 1)
    k = jnp.arange(4).reshape(1, 1, 1, 1, 4)
    pos = 16 * m + 4 * r + 2 * e + k                               # taps for c1[8m+2r+e]
    patches = x_pad[n, pos]                                        # (2, N, 4, 4, 4)
    return patches.reshape(2 * N * 16, 4)


def discriminator_forward(x, prepared):
    N = x.shape[0]
    p1 = build_layer1_patches(x)
    args = (p1,) + tuple(prepared)
    kernel = functools.partial(_disc_fused_kernel, batch=N)
    return pl.pallas_call(
        kernel,
        out_shape=jax.ShapeDtypeStruct((N, 1), jnp.float32),
        grid=(1,),
        in_specs=[_full_spec(a.shape) for a in args],
        out_specs=_full_spec((N, 1)),
        compiler_params=pltpu.CompilerParams(dimension_semantics=("arbitrary",)),
    )(*args)


# ------------------------------ reference ------------------------------------
def reference_forward(x, params):
    (w1, b1), (w2, b2), (w3, b3), (wl1, bl1), (wl2, bl2) = params
    hi = jax.lax.Precision.HIGHEST

    def conv(h, w, b, stride, pad):
        y = jax.lax.conv_general_dilated(
            h, w, window_strides=(stride,), padding=[(pad, pad)],
            dimension_numbers=("NCH", "OIH", "NCH"), precision=hi)
        return y + b.reshape(1, -1, 1)

    def pool(h):
        n, c, l = h.shape
        return jnp.max(h.reshape(n, c, l // 2, 2), axis=-1)

    def leaky(h):
        return jnp.where(h > 0, h, 0.2 * h)

    h = leaky(pool(conv(x, w1, b1, 2, 1)))
    h = leaky(pool(conv(h, w2, b2, 2, 1)))
    h = conv(h, w3, b3, 1, 0)
    h = jnp.squeeze(h, axis=-1)                                    # (N, 128)
    h = jnp.tanh(jnp.dot(h, wl1.T, precision=hi) + bl1)
    return jax.nn.sigmoid(jnp.dot(h, wl2.T, precision=hi) + bl2)


# ------------------------------- params --------------------------------------
def init_params(key):
    def uinit(k, shape, fan_in):
        bound = 1.0 / float(fan_in) ** 0.5
        return jax.random.uniform(k, shape, jnp.float32, -bound, bound)

    specs = [("conv", 1, 64, 4), ("conv", 64, 128, 4), ("conv", 128, 128, 4),
             ("lin", 128, 24, None), ("lin", 24, 1, None)]
    params = []
    for kind, cin, cout, ksz in specs:
        key, kw, kb = jax.random.split(key, 3)
        if kind == "conv":
            fan = cin * ksz
            w = uinit(kw, (cout, cin, ksz), fan)     # PyTorch Conv1d layout (O, I, K)
        else:
            fan = cin
            w = uinit(kw, (cout, cin), fan)          # PyTorch Linear layout (out, in)
        b = uinit(kb, (cout,), fan)
        params.append((w, b))
    return params


if __name__ == "__main__":
    key = jax.random.PRNGKey(0)
    kx, kp = jax.random.split(key)
    # L=64 is the length the architecture requires so the last conv yields length 1.
    x = jax.random.normal(kx, (2, 1, 64), jnp.float32)
    params = init_params(kp)
    prepared = prepare_params(params)

    out = discriminator_forward(x, prepared)
    out = jax.block_until_ready(out)

    ref = reference_forward(x, params)
    assert out.shape == (2, 1), out.shape
    max_err = float(jnp.max(jnp.abs(out - ref)))
    assert jnp.allclose(out, ref, atol=5e-3, rtol=5e-3), max_err
    print("KERNEL_OK")
</pallas_src>

<mosaic_0001>
module attributes {stable_mosaic.version = 11 : i64} {
  func.func @_disc_fused_kernel(%arg0: i32, %arg1: memref<64x4xf32, #tpu.memory_space<vmem>>, %arg2: memref<4x64xf32, #tpu.memory_space<vmem>>, %arg3: memref<1x64xf32, #tpu.memory_space<vmem>>, %arg4: memref<256x128xf32, #tpu.memory_space<vmem>>, %arg5: memref<1x128xf32, #tpu.memory_space<vmem>>, %arg6: memref<512x128xf32, #tpu.memory_space<vmem>>, %arg7: memref<1x128xf32, #tpu.memory_space<vmem>>, %arg8: memref<128x24xf32, #tpu.memory_space<vmem>>, %arg9: memref<1x24xf32, #tpu.memory_space<vmem>>, %arg10: memref<24x1xf32, #tpu.memory_space<vmem>>, %arg11: memref<1x1xf32, #tpu.memory_space<vmem>>, %arg12: memref<2x1xf32, #tpu.memory_space<vmem>>) attributes {dimension_semantics = [#tpu.dimension_semantics<arbitrary>], iteration_bounds = array<i64: 1>, scalar_prefetch = 0 : i64, scratch_operands = 0 : i64, tpu.core_type = #tpu.core_type<tc>, window_params = [{pipeline_mode = #tpu.pipeline_mode<synchronous>, transform_indices = @transform_0, window_bounds = array<i64: 64, 4>}, {pipeline_mode = #tpu.pipeline_mode<synchronous>, transform_indices = @transform_1, window_bounds = array<i64: 4, 64>}, {pipeline_mode = #tpu.pipeline_mode<synchronous>, transform_indices = @transform_2, window_bounds = array<i64: 1, 64>}, {pipeline_mode = #tpu.pipeline_mode<synchronous>, transform_indices = @transform_3, window_bounds = array<i64: 256, 128>}, {pipeline_mode = #tpu.pipeline_mode<synchronous>, transform_indices = @transform_4, window_bounds = array<i64: 1, 128>}, {pipeline_mode = #tpu.pipeline_mode<synchronous>, transform_indices = @transform_5, window_bounds = array<i64: 512, 128>}, {pipeline_mode = #tpu.pipeline_mode<synchronous>, transform_indices = @transform_6, window_bounds = array<i64: 1, 128>}, {pipeline_mode = #tpu.pipeline_mode<synchronous>, transform_indices = @transform_7, window_bounds = array<i64: 128, 24>}, {pipeline_mode = #tpu.pipeline_mode<synchronous>, transform_indices = @transform_8, window_bounds = array<i64: 1, 24>}, {pipeline_mode = #tpu.pipeline_mode<synchronous>, transform_indices = @transform_9, window_bounds = array<i64: 24, 1>}, {pipeline_mode = #tpu.pipeline_mode<synchronous>, transform_indices = @transform_10, window_bounds = array<i64: 1, 1>}, {pipeline_mode = #tpu.pipeline_mode<synchronous>, transform_indices = @transform_11, window_bounds = array<i64: 2, 1>}]} {
    %c0 = arith.constant 0 : index
    %c0_0 = arith.constant 0 : index
    %0 = vector.load %arg1[%c0, %c0_0] : memref<64x4xf32, #tpu.memory_space<vmem>>, vector<64x4xf32>
    %c0_1 = arith.constant 0 : index
    %c0_2 = arith.constant 0 : index
    %1 = vector.load %arg2[%c0_1, %c0_2] : memref<4x64xf32, #tpu.memory_space<vmem>>, vector<4x64xf32>
    %cst = arith.constant dense<0.000000e+00> : vector<64x64xf32>
    %2 = tpu.matmul %0, %1, %cst {dimension_numbers = #tpu.dot_dimension_numbers<[1], [0], [0], [1], [0, 0, 1, 1], [], []>, precision = #tpu.contract_precision<fp32>} : vector<64x4xf32>, vector<4x64xf32>, vector<64x64xf32> -> vector<64x64xf32>
    %3 = vector.extract_strided_slice %2 {offsets = [0, 0], sizes = [32, 64], strides = [1, 1]} : vector<64x64xf32> to vector<32x64xf32>
    %4 = vector.extract_strided_slice %2 {offsets = [32, 0], sizes = [32, 64], strides = [1, 1]} : vector<64x64xf32> to vector<32x64xf32>
    %5 = arith.maximumf %3, %4 : vector<32x64xf32>
    %c0_3 = arith.constant 0 : index
    %c0_4 = arith.constant 0 : index
    %6 = vector.load %arg3[%c0_3, %c0_4] : memref<1x64xf32, #tpu.memory_space<vmem>>, vector<1x64xf32>
    %7 = vector.broadcast %6 : vector<1x64xf32> to vector<32x64xf32>
    %8 = arith.addf %5, %7 : vector<32x64xf32>
    %cst_5 = arith.constant 0.000000e+00 : f32
    %9 = vector.broadcast %cst_5 : f32 to vector<32x64xf32>
    %10 = arith.cmpf ogt, %8, %9 : vector<32x64xf32>
    %cst_6 = arith.constant 2.000000e-01 : f32
    %11 = vector.broadcast %cst_6 : f32 to vector<32x64xf32>
    %12 = arith.mulf %11, %8 : vector<32x64xf32>
    %13 = arith.select %10, %8, %12 : vector<32x64xi1>, vector<32x64xf32>
    %cst_7 = arith.constant 0.000000e+00 : f32
    %14 = vector.broadcast %cst_7 : f32 to vector<1x64xf32>
    %15 = vector.extract_strided_slice %13 {offsets = [0, 0], sizes = [4, 64], strides = [1, 1]} : vector<32x64xf32> to vector<4x64xf32>
    %16 = vector.extract_strided_slice %13 {offsets = [4, 0], sizes = [4, 64], strides = [1, 1]} : vector<32x64xf32> to vector<4x64xf32>
    %17 = vector.extract_strided_slice %13 {offsets = [8, 0], sizes = [4, 64], strides = [1, 1]} : vector<32x64xf32> to vector<4x64xf32>
    %18 = vector.extract_strided_slice %13 {offsets = [12, 0], sizes = [4, 64], strides = [1, 1]} : vector<32x64xf32> to vector<4x64xf32>
    %19 = vector.extract_strided_slice %18 {offsets = [0, 0], sizes = [3, 64], strides = [1, 1]} : vector<4x64xf32> to vector<3x64xf32>
    %20 = tpu.concatenate %14, %19 in 0 : vector<1x64xf32>, vector<3x64xf32> -> vector<4x64xf32>
    %21 = vector.extract_strided_slice %15 {offsets = [1, 0], sizes = [3, 64], strides = [1, 1]} : vector<4x64xf32> to vector<3x64xf32>
    %22 = tpu.concatenate %21, %14 in 0 : vector<3x64xf32>, vector<1x64xf32> -> vector<4x64xf32>
    %23 = tpu.concatenate %20, %15, %16, %17 in 1 : vector<4x64xf32>, vector<4x64xf32>, vector<4x64xf32>, vector<4x64xf32> -> vector<4x256xf32>
    %24 = tpu.concatenate %16, %17, %18, %22 in 1 : vector<4x64xf32>, vector<4x64xf32>, vector<4x64xf32>, vector<4x64xf32> -> vector<4x256xf32>
    %25 = vector.extract_strided_slice %13 {offsets = [16, 0], sizes = [4, 64], strides = [1, 1]} : vector<32x64xf32> to vector<4x64xf32>
    %26 = vector.extract_strided_slice %13 {offsets = [20, 0], sizes = [4, 64], strides = [1, 1]} : vector<32x64xf32> to vector<4x64xf32>
    %27 = vector.extract_strided_slice %13 {offsets = [24, 0], sizes = [4, 64], strides = [1, 1]} : vector<32x64xf32> to vector<4x64xf32>
    %28 = vector.extract_strided_slice %13 {offsets = [28, 0], sizes = [4, 64], strides = [1, 1]} : vector<32x64xf32> to vector<4x64xf32>
    %29 = vector.extract_strided_slice %28 {offsets = [0, 0], sizes = [3, 64], strides = [1, 1]} : vector<4x64xf32> to vector<3x64xf32>
    %30 = tpu.concatenate %14, %29 in 0 : vector<1x64xf32>, vector<3x64xf32> -> vector<4x64xf32>
    %31 = vector.extract_strided_slice %25 {offsets = [1, 0], sizes = [3, 64], strides = [1, 1]} : vector<4x64xf32> to vector<3x64xf32>
    %32 = tpu.concatenate %31, %14 in 0 : vector<3x64xf32>, vector<1x64xf32> -> vector<4x64xf32>
    %33 = tpu.concatenate %30, %25, %26, %27 in 1 : vector<4x64xf32>, vector<4x64xf32>, vector<4x64xf32>, vector<4x64xf32> -> vector<4x256xf32>
    %34 = tpu.concatenate %26, %27, %28, %32 in 1 : vector<4x64xf32>, vector<4x64xf32>, vector<4x64xf32>, vector<4x64xf32> -> vector<4x256xf32>
    %35 = tpu.concatenate %23, %33, %24, %34 in 0 : vector<4x256xf32>, vector<4x256xf32>, vector<4x256xf32>, vector<4x256xf32> -> vector<16x256xf32>
    %c0_8 = arith.constant 0 : index
    %c0_9 = arith.constant 0 : index
    %36 = vector.load %arg4[%c0_8, %c0_9] : memref<256x128xf32, #tpu.memory_space<vmem>>, vector<256x128xf32>
    %cst_10 = arith.constant dense<0.000000e+00> : vector<16x128xf32>
    %37 = tpu.matmul %35, %36, %cst_10 {dimension_numbers = #tpu.dot_dimension_numbers<[1], [0], [0], [1], [0, 0, 1, 1], [], []>, precision = #tpu.contract_precision<fp32>} : vector<16x256xf32>, vector<256x128xf32>, vector<16x128xf32> -> vector<16x128xf32>
    %38 = vector.extract_strided_slice %37 {offsets = [0, 0], sizes = [8, 128], strides = [1, 1]} : vector<16x128xf32> to vector<8x128xf32>
    %39 = vector.extract_strided_slice %37 {offsets = [8, 0], sizes = [8, 128], strides = [1, 1]} : vector<16x128xf32> to vector<8x128xf32>
    %40 = arith.maximumf %38, %39 : vector<8x128xf32>
    %c0_11 = arith.constant 0 : index
    %c0_12 = arith.constant 0 : index
    %41 = vector.load %arg5[%c0_11, %c0_12] : memref<1x128xf32, #tpu.memory_space<vmem>>, vector<1x128xf32>
    %42 = vector.broadcast %41 : vector<1x128xf32> to vector<8x128xf32>
    %43 = arith.addf %40, %42 : vector<8x128xf32>
    %cst_13 = arith.constant 0.000000e+00 : f32
    %44 = vector.broadcast %cst_13 : f32 to vector<8x128xf32>
    %45 = arith.cmpf ogt, %43, %44 : vector<8x128xf32>
    %cst_14 = arith.constant 2.000000e-01 : f32
    %46 = vector.broadcast %cst_14 : f32 to vector<8x128xf32>
    %47 = arith.mulf %46, %43 : vector<8x128xf32>
    %48 = arith.select %45, %43, %47 : vector<8x128xi1>, vector<8x128xf32>
    %49 = vector.extract_strided_slice %48 {offsets = [0, 0], sizes = [1, 128], strides = [1, 1]} : vector<8x128xf32> to vector<1x128xf32>
    %50 = vector.extract_strided_slice %48 {offsets = [1, 0], sizes = [1, 128], strides = [1, 1]} : vector<8x128xf32> to vector<1x128xf32>
    %51 = vector.extract_strided_slice %48 {offsets = [2, 0], sizes = [1, 128], strides = [1, 1]} : vector<8x128xf32> to vector<1x128xf32>
    %52 = vector.extract_strided_slice %48 {offsets = [3, 0], sizes = [1, 128], strides = [1, 1]} : vector<8x128xf32> to vector<1x128xf32>
    %53 = tpu.concatenate %49, %50, %51, %52 in 1 : vector<1x128xf32>, vector<1x128xf32>, vector<1x128xf32>, vector<1x128xf32> -> vector<1x512xf32>
    %54 = vector.extract_strided_slice %48 {offsets = [4, 0], sizes = [1, 128], strides = [1, 1]} : vector<8x128xf32> to vector<1x128xf32>
    %55 = vector.extract_strided_slice %48 {offsets = [5, 0], sizes = [1, 128], strides = [1, 1]} : vector<8x128xf32> to vector<1x128xf32>
    %56 = vector.extract_strided_slice %48 {offsets = [6, 0], sizes = [1, 128], strides = [1, 1]} : vector<8x128xf32> to vector<1x128xf32>
    %57 = vector.extract_strided_slice %48 {offsets = [7, 0], sizes = [1, 128], strides = [1, 1]} : vector<8x128xf32> to vector<1x128xf32>
    %58 = tpu.concatenate %54, %55, %56, %57 in 1 : vector<1x128xf32>, vector<1x128xf32>, vector<1x128xf32>, vector<1x128xf32> -> vector<1x512xf32>
    %59 = tpu.concatenate %53, %58 in 0 : vector<1x512xf32>, vector<1x512xf32> -> vector<2x512xf32>
    %c0_15 = arith.constant 0 : index
    %c0_16 = arith.constant 0 : index
    %60 = vector.load %arg6[%c0_15, %c0_16] : memref<512x128xf32, #tpu.memory_space<vmem>>, vector<512x128xf32>
    %cst_17 = arith.constant dense<0.000000e+00> : vector<2x128xf32>
    %61 = tpu.matmul %59, %60, %cst_17 {dimension_numbers = #tpu.dot_dimension_numbers<[1], [0], [0], [1], [0, 0, 1, 1], [], []>, precision = #tpu.contract_precision<fp32>} : vector<2x512xf32>, vector<512x128xf32>, vector<2x128xf32> -> vector<2x128xf32>
    %c0_18 = arith.constant 0 : index
    %c0_19 = arith.constant 0 : index
    %62 = vector.load %arg7[%c0_18, %c0_19] : memref<1x128xf32, #tpu.memory_space<vmem>>, vector<1x128xf32>
    %63 = vector.broadcast %62 : vector<1x128xf32> to vector<2x128xf32>
    %64 = arith.addf %61, %63 : vector<2x128xf32>
    %c0_20 = arith.constant 0 : index
    %c0_21 = arith.constant 0 : index
    %65 = vector.load %arg8[%c0_20, %c0_21] : memref<128x24xf32, #tpu.memory_space<vmem>>, vector<128x24xf32>
    %cst_22 = arith.constant dense<0.000000e+00> : vector<2x24xf32>
    %66 = tpu.matmul %64, %65, %cst_22 {dimension_numbers = #tpu.dot_dimension_numbers<[1], [0], [0], [1], [0, 0, 1, 1], [], []>, precision = #tpu.contract_precision<fp32>} : vector<2x128xf32>, vector<128x24xf32>, vector<2x24xf32> -> vector<2x24xf32>
    %c0_23 = arith.constant 0 : index
    %c0_24 = arith.constant 0 : index
    %67 = vector.load %arg9[%c0_23, %c0_24] : memref<1x24xf32, #tpu.memory_space<vmem>>, vector<1x24xf32>
    %68 = vector.broadcast %67 : vector<1x24xf32> to vector<2x24xf32>
    %69 = arith.addf %66, %68 : vector<2x24xf32>
    %70 = math.tanh %69 : vector<2x24xf32>
    %c0_25 = arith.constant 0 : index
    %c0_26 = arith.constant 0 : index
    %71 = vector.load %arg10[%c0_25, %c0_26] : memref<24x1xf32, #tpu.memory_space<vmem>>, vector<24x1xf32>
    %cst_27 = arith.constant dense<0.000000e+00> : vector<2x1xf32>
    %72 = tpu.matmul %70, %71, %cst_27 {dimension_numbers = #tpu.dot_dimension_numbers<[1], [0], [0], [1], [0, 0, 1, 1], [], []>, precision = #tpu.contract_precision<fp32>} : vector<2x24xf32>, vector<24x1xf32>, vector<2x1xf32> -> vector<2x1xf32>
    %c0_28 = arith.constant 0 : index
    %c0_29 = arith.constant 0 : index
    %73 = vector.load %arg11[%c0_28, %c0_29] : memref<1x1xf32, #tpu.memory_space<vmem>>, vector<1x1xf32>
    %74 = vector.broadcast %73 : vector<1x1xf32> to vector<2x1xf32>
    %75 = arith.addf %72, %74 : vector<2x1xf32>
    %cst_30 = arith.constant 0.000000e+00 : f32
    %76 = vector.broadcast %cst_30 : f32 to vector<2x1xf32>
    %77 = arith.subf %76, %75 : vector<2x1xf32>
    %78 = math.exp %77 : vector<2x1xf32>
    %cst_31 = arith.constant 1.000000e+00 : f32
    %79 = vector.broadcast %cst_31 : f32 to vector<2x1xf32>
    %80 = arith.addf %79, %78 : vector<2x1xf32>
    %cst_32 = arith.constant 1.000000e+00 : f32
    %81 = vector.broadcast %cst_32 : f32 to vector<2x1xf32>
    %82 = arith.divf %81, %80 : vector<2x1xf32>
    %c0_33 = arith.constant 0 : index
    %c0_34 = arith.constant 0 : index
    %83 = vector.load %arg12[%c0_33, %c0_34] : memref<2x1xf32, #tpu.memory_space<vmem>>, vector<2x1xf32>
    tpu.vector_store %arg12[%c0_33, %c0_34], %82 {strides = array<i32>} : memref<2x1xf32, #tpu.memory_space<vmem>>, vector<2x1xf32>,
    return
  }
  func.func @transform_0(%arg0: i32) -> (i32, i32) {
    %c0_i32 = arith.constant 0 : i32
    %c0_i32_0 = arith.constant 0 : i32
    %c0_i32_1 = arith.constant 0 : i32
    return %c0_i32, %c0_i32_0 : i32, i32
  }
  func.func @transform_1(%arg0: i32) -> (i32, i32) {
    %c0_i32 = arith.constant 0 : i32
    %c0_i32_0 = arith.constant 0 : i32
    %c0_i32_1 = arith.constant 0 : i32
    return %c0_i32, %c0_i32_0 : i32, i32
  }
  func.func @transform_2(%arg0: i32) -> (i32, i32) {
    %c0_i32 = arith.constant 0 : i32
    %c0_i32_0 = arith.constant 0 : i32
    %c0_i32_1 = arith.constant 0 : i32
    return %c0_i32, %c0_i32_0 : i32, i32
  }
  func.func @transform_3(%arg0: i32) -> (i32, i32) {
    %c0_i32 = arith.constant 0 : i32
    %c0_i32_0 = arith.constant 0 : i32
    %c0_i32_1 = arith.constant 0 : i32
    return %c0_i32, %c0_i32_0 : i32, i32
  }
  func.func @transform_4(%arg0: i32) -> (i32, i32) {
    %c0_i32 = arith.constant 0 : i32
    %c0_i32_0 = arith.constant 0 : i32
    %c0_i32_1 = arith.constant 0 : i32
    return %c0_i32, %c0_i32_0 : i32, i32
  }
  func.func @transform_5(%arg0: i32) -> (i32, i32) {
    %c0_i32 = arith.constant 0 : i32
    %c0_i32_0 = arith.constant 0 : i32
    %c0_i32_1 = arith.constant 0 : i32
    return %c0_i32, %c0_i32_0 : i32, i32
  }
  func.func @transform_6(%arg0: i32) -> (i32, i32) {
    %c0_i32 = arith.constant 0 : i32
    %c0_i32_0 = arith.constant 0 : i32
    %c0_i32_1 = arith.constant 0 : i32
    return %c0_i32, %c0_i32_0 : i32, i32
  }
  func.func @transform_7(%arg0: i32) -> (i32, i32) {
    %c0_i32 = arith.constant 0 : i32
    %c0_i32_0 = arith.constant 0 : i32
    %c0_i32_1 = arith.constant 0 : i32
    return %c0_i32, %c0_i32_0 : i32, i32
  }
  func.func @transform_8(%arg0: i32) -> (i32, i32) {
    %c0_i32 = arith.constant 0 : i32
    %c0_i32_0 = arith.constant 0 : i32
    %c0_i32_1 = arith.constant 0 : i32
    return %c0_i32, %c0_i32_0 : i32, i32
  }
  func.func @transform_9(%arg0: i32) -> (i32, i32) {
    %c0_i32 = arith.constant 0 : i32
    %c0_i32_0 = arith.constant 0 : i32
    %c0_i32_1 = arith.constant 0 : i32
    return %c0_i32, %c0_i32_0 : i32, i32
  }
  func.func @transform_10(%arg0: i32) -> (i32, i32) {
    %c0_i32 = arith.constant 0 : i32
    %c0_i32_0 = arith.constant 0 : i32
    %c0_i32_1 = arith.constant 0 : i32
    return %c0_i32, %c0_i32_0 : i32, i32
  }
  func.func @transform_11(%arg0: i32) -> (i32, i32) {
    %c0_i32 = arith.constant 0 : i32
    %c0_i32_0 = arith.constant 0 : i32
    %c0_i32_1 = arith.constant 0 : i32
    return %c0_i32, %c0_i32_0 : i32, i32
  }
}

</mosaic_0001>

<llo_original>
// kernel: tpu_custom_call.1
$region0: #{tpu_custom_call.1}
  #allocation0 [shape = 'u32[]', space=smem, size = 0x4, offset = 0x4, fixed_abs, tag = 'smem constant byte address 0x4 - core index']
  #allocation1 [shape = 'u32[144,128]{1,0:T(1,128)}', space=vmem, size = 0x12000, scoped, tag = 'internal scratch']
  #allocation2 [shape = 'f32[1,1]{1,0:T(1,128)S(1)}', space=vmem, size = 0x200, scoped, tag = 'scoped memory for tpu_custom_call.1']
  %s0 = inlined_call_operand.vmem [shape: f32[64,4], index: 0, kind: input, shape index: {}]
  %s1 = inlined_call_operand.vmem [shape: f32[4,64], index: 1, kind: input, shape index: {}]
  %s2 = inlined_call_operand.hbm [shape: f32[1,64], index: 2, kind: input, shape index: {}]
  %s3 = inlined_call_operand.vmem [shape: f32[256,128], index: 3, kind: input, shape index: {}]
  %s4 = inlined_call_operand.vmem [shape: f32[1,128], index: 4, kind: input, shape index: {}]
  %s5 = inlined_call_operand.hbm [shape: f32[512,128], index: 5, kind: input, shape index: {}]
  %s6 = inlined_call_operand.vmem [shape: f32[1,128], index: 6, kind: input, shape index: {}]
  %s7 = inlined_call_operand.vmem [shape: f32[128,24], index: 7, kind: input, shape index: {}]
  %s8 = inlined_call_operand.vmem [shape: f32[1,24], index: 8, kind: input, shape index: {}]
  %s9 = inlined_call_operand.vmem [shape: f32[24,1], index: 9, kind: input, shape index: {}]
  %s10 = inlined_call_operand.<no memory space> [shape: f32[1,1], index: 10, kind: input, shape index: {}]
  %s11 = inlined_call_operand.vmem [shape: f32[2,1], index: 11, kind: output, shape index: {}]
  %s12 = sld [smem:[#allocation0]]
  $region62: #{tpu_custom_call.1} parent=0
    _
  %s14 = ssub.s32 1, %s12
  %s15 = scalar_select 0, %s14, %s12
  %v16 = vstv %s10
  %17 = vst [vmem:[#allocation2] sm:$0x1] %v16
  $region1: #{tpu_custom_call.1} parent=0
    #allocation3 [shape = 'u8[512]{0}', space=vmem, size = 0x400, scoped, tag = 'input window, operand 2, single buffered']
    #allocation4 [shape = 's32[1]{0}', space=sflag, size = 0x4, scoped, tag = 'scoped memory for tpu_custom_call.1']
    #allocation5 [shape = 'u8[262144]{0}', space=vmem, size = 0x40000, scoped, tag = 'input window, operand 5, single buffered']
    #allocation6 [shape = 's32[1]{0}', space=sflag, size = 0x4, scoped, tag = 'scoped memory for tpu_custom_call.1']
    %18 = vsyncpa [#allocation4], 0
    %19 = vsyncpa [#allocation6], 0
    // Predicated region
    $region2: #{tpu_custom_call.1} parent=1 // pred_check
      _
    $region3: #{tpu_custom_call.1} parent=1 // pred_check_branch
      %21 = sbr.rel (0) target = $region5
    $region4: #{tpu_custom_call.1} parent=1 // pred_region
      _
    $region5: #{tpu_custom_call.1} parent=1 // pred_fallthru
      _
    // Predicated region
    $region6: #{tpu_custom_call.1} parent=1 // pred_check
      _
    $region7: #{tpu_custom_call.1} parent=1 // pred_check_branch
      %23 = sbr.rel (0) target = $region9
    $region8: #{tpu_custom_call.1} parent=1 // pred_region
      _
    $region9: #{tpu_custom_call.1} parent=1 // pred_fallthru
      _
    // Predicated region
    $region10: #{tpu_custom_call.1} parent=1 // pred_check
      _
    $region11: #{tpu_custom_call.1} parent=1 // pred_check_branch
      %25 = sbr.rel (0) target = $region13
    $region12: #{tpu_custom_call.1} parent=1 // pred_region
      %s27 = ssub.s32 16, 16
      %28 = vsyncadd [#allocation4], %s27
      %s30 = sshll.u32 [#allocation3], 4
      %s31 = int_to_ptr.vmem [resolvable:$true] %s30
      %33 = dma.hbm_to_vmem [thread:$0]  %s2, 16, %s31, [#allocation4]
    $region13: #{tpu_custom_call.1} parent=1 // pred_fallthru
      _
    // Predicated region
    $region14: #{tpu_custom_call.1} parent=1 // pred_check
      _
    $region15: #{tpu_custom_call.1} parent=1 // pred_check_branch
      %35 = sbr.rel (0) target = $region17
    $region16: #{tpu_custom_call.1} parent=1 // pred_region
      _
    $region17: #{tpu_custom_call.1} parent=1 // pred_fallthru
      _
    // Predicated region
    $region18: #{tpu_custom_call.1} parent=1 // pred_check
      _
    $region19: #{tpu_custom_call.1} parent=1 // pred_check_branch
      %37 = sbr.rel (0) target = $region21
    $region20: #{tpu_custom_call.1} parent=1 // pred_region
      _
    $region21: #{tpu_custom_call.1} parent=1 // pred_fallthru
      _
    // Predicated region
    $region22: #{tpu_custom_call.1} parent=1 // pred_check
      _
    $region23: #{tpu_custom_call.1} parent=1 // pred_check_branch
      %39 = sbr.rel (0) target = $region25
    $region24: #{tpu_custom_call.1} parent=1 // pred_region
      %s41 = ssub.s32 8192, 8192
      %42 = vsyncadd [#allocation6], %s41
      %s43 = sshll.u32 [#allocation5], 4
      %s44 = int_to_ptr.vmem [resolvable:$true] %s43
      %49 = dma.hbm_to_vmem [thread:$0]  %s5, 8192, %s44, [#allocation6], 128, 128, 8
    $region25: #{tpu_custom_call.1} parent=1 // pred_fallthru
      _
    // Predicated region
    $region26: #{tpu_custom_call.1} parent=1 // pred_check
      _
    $region27: #{tpu_custom_call.1} parent=1 // pred_check_branch
      %51 = sbr.rel (0) target = $region29
    $region28: #{tpu_custom_call.1} parent=1 // pred_region
      _
    $region29: #{tpu_custom_call.1} parent=1 // pred_fallthru
      _
    // Predicated region
    $region30: #{tpu_custom_call.1} parent=1 // pred_check
      _
    $region31: #{tpu_custom_call.1} parent=1 // pred_check_branch
      %53 = sbr.rel (0) target = $region33
    $region32: #{tpu_custom_call.1} parent=1 // pred_region
      _
    $region33: #{tpu_custom_call.1} parent=1 // pred_fallthru
      _
    // Predicated region
    $region34: #{tpu_custom_call.1} parent=1 // pred_check
      _
    $region35: #{tpu_custom_call.1} parent=1 // pred_check_branch
      %55 = sbr.rel (0) target = $region37
    $region36: #{tpu_custom_call.1} parent=1 // pred_region
      _
    $region37: #{tpu_custom_call.1} parent=1 // pred_fallthru
      _
    // Predicated region
    $region38: #{tpu_custom_call.1} parent=1 // pred_check
      _
    $region39: #{tpu_custom_call.1} parent=1 // pred_check_branch
      %57 = sbr.rel (0) target = $region41
    $region40: #{tpu_custom_call.1} parent=1 // pred_region
      _
    $region41: #{tpu_custom_call.1} parent=1 // pred_fallthru
      _
    // Predicated region
    $region42: #{tpu_custom_call.1} parent=1 // pred_check
      _
    $region43: #{tpu_custom_call.1} parent=1 // pred_check_branch
      %59 = sbr.rel (0) target = $region45
    $region44: #{tpu_custom_call.1} parent=1 // pred_region
      _
    $region45: #{tpu_custom_call.1} parent=1 // pred_fallthru
      _
    // Predicated region
    $region46: #{tpu_custom_call.1} parent=1 // pred_check
      _
    $region47: #{tpu_custom_call.1} parent=1 // pred_check_branch
      %61 = sbr.rel (0) target = $region49
    $region48: #{tpu_custom_call.1} parent=1 // pred_region
      %62 = dma.done [#allocation4], 16
    $region49: #{tpu_custom_call.1} parent=1 // pred_fallthru
      _
    // Predicated region
    $region50: #{tpu_custom_call.1} parent=1 // pred_check
      _
    $region51: #{tpu_custom_call.1} parent=1 // pred_check_branch
      %64 = sbr.rel (0) target = $region53
    $region52: #{tpu_custom_call.1} parent=1 // pred_region
      %65 = dma.done [#allocation6], 8192
    $region53: #{tpu_custom_call.1} parent=1 // pred_fallthru
      _
    %v66 = vld [vmem:[%s0] sm:$0xff]
    %v67 = vld [vmem:[%s0 + $0x8] sm:$0xff]
    %v68 = vld [vmem:[%s0 + $0x10] sm:$0xff]
    %v69 = vld [vmem:[%s0 + $0x18] sm:$0xff]
    %v70 = vld [vmem:[%s0 + $0x20] sm:$0xff]
    %v71 = vld [vmem:[%s0 + $0x28] sm:$0xff]
    %v72 = vld [vmem:[%s0 + $0x30] sm:$0xff]
    %v73 = vld [vmem:[%s0 + $0x38] sm:$0xff]
    %v74 = vld [vmem:[%s1] sm:$0xf]
    %vm75 = vcmask 31744
    %v77 = vsel %vm75, %v66, 0
    %v80 = vsel %vm75, %v67, 0
    %v83 = vsel %vm75, %v68, 0
    %v86 = vsel %vm75, %v69, 0
    %v89 = vsel %vm75, %v70, 0
    %v92 = vsel %vm75, %v71, 0
    %v95 = vsel %vm75, %v72, 0
    %v98 = vsel %vm75, %v73, 0
    %vm100 = vcmask 1043456
    %v102 = vsel %vm100, %v74, 0
    %104 = vmatprep.subr.mxu0 0.0
    %v105 = vand.u32 %v102, 4294901760
    %106 = vmatpush1.msra.mxu0 %v105
    %107 = vmatprep.subr.mxu0 0.0
    %108 = vmatpush1.msra.mxu0 0.0
    %109 = vmatprep.subr.mxu0 0.0
    %110 = vmatpush1.msra.mxu0 0.0
    %111 = vmatprep.subr.mxu0 0.0
    %112 = vmatpush1.msra.mxu0 0.0
    %113 = vmatprep.subr.mxu0 0.0
    %114 = vmatpush1.msra.mxu0 0.0
    %115 = vmatprep.subr.mxu0 0.0
    %116 = vmatpush1.msra.mxu0 0.0
    %117 = vmatprep.subr.mxu0 0.0
    %118 = vmatpush1.msra.mxu0 0.0
    %119 = vmatprep.subr.mxu0 0.0
    %120 = vmatpush1.msra.mxu0 0.0
    %121 = vmatprep.subr.mxu0 0.0
    %122 = vmatpush1.msra.mxu0 0.0
    %123 = vmatprep.subr.mxu0 0.0
    %124 = vmatpush1.msra.mxu0 0.0
    %125 = vmatprep.subr.mxu0 0.0
    %126 = vmatpush1.msra.mxu0 0.0
    %127 = vmatprep.subr.mxu0 0.0
    %128 = vmatpush1.msra.mxu0 0.0
    %129 = vmatprep.subr.mxu0 0.0
    %130 = vmatpush1.msra.mxu0 0.0
    %131 = vmatprep.subr.mxu0 0.0
    %132 = vmatpush1.msra.mxu0 0.0
    %133 = vmatprep.subr.mxu0 0.0
    %134 = vmatpush1.msra.mxu0 0.0
    %135 = vmatprep.subr.mxu0 0.0
    %136 = vmatpush1.msra.mxu0 0.0
    %137 = vmatprep.subr.mxu0 0.0
    %138 = vmatpush1.msra.mxu0 0.0
    %139 = vmatprep.subr.mxu0 0.0
    %140 = vmatpush1.msra.mxu0 0.0
    %141 = vmatprep.subr.mxu0 0.0
    %142 = vmatpush1.msra.mxu0 0.0
    %143 = vmatprep.subr.mxu0 0.0
    %144 = vmatpush1.msra.mxu0 0.0
    %145 = vmatprep.subr.mxu0 0.0
    %146 = vmatpush1.msra.mxu0 0.0
    %147 = vmatprep.subr.mxu0 0.0
    %148 = vmatpush1.msra.mxu0 0.0
    %149 = vmatprep.subr.mxu0 0.0
    %150 = vmatpush1.msra.mxu0 0.0
    %151 = vmatprep.subr.mxu0 0.0
    %152 = vmatpush1.msra.mxu0 0.0
    %153 = vmatprep.subr.mxu0 0.0
    %154 = vmatpush1.msra.mxu0 0.0
    %155 = vmatprep.subr.mxu0 0.0
    %156 = vmatpush1.msra.mxu0 0.0
    %157 = vmatprep.subr.mxu0 0.0
    %158 = vmatpush1.msra.mxu0 0.0
    %159 = vmatprep.subr.mxu0 0.0
    %160 = vmatpush1.msra.mxu0 0.0
    %161 = vmatprep.subr.mxu0 0.0
    %162 = vmatpush1.msra.mxu0 0.0
    %163 = vmatprep.subr.mxu0 0.0
    %164 = vmatpush1.msra.mxu0 0.0
    %165 = vmatprep.subr.mxu0 0.0
    %166 = vmatpush1.msra.mxu0 0.0
    %167 = vmatprep.subr.mxu0 0.0
    %168 = vmatpush1.msra.mxu0 0.0
    %169 = vmatprep.mubr.f32.mxu0 0.0
    %v170 = vand.u32 %v77, 4294901760
    %v171 = vsub.f32 %v77, %v170
    %v172 = vand.u32 %v171, 4294901760
    %v173 = vsub.f32 %v171, %v172
    %v174 = vand.u32 %v173, 4294901760
    %175 = vmatmul.mubr.f32.gmra.mrb[0].mxu0 %v174
    %v176 = vpop.f32.mrb[0].mxu0
    %v177 = vadd.f32 0.0, %v176
    %v178 = vpop.f32.mrb[0].mxu0
    %179 = vmatprep.mubr.f32.mxu0 0.0
    %v180 = vand.u32 %v80, 4294901760
    %v181 = vsub.f32 %v80, %v180
    %v182 = vand.u32 %v181, 4294901760
    %v183 = vsub.f32 %v181, %v182
    %v184 = vand.u32 %v183, 4294901760
    %185 = vmatmul.mubr.f32.gmra.mrb[0].mxu0 %v184
    %v186 = vpop.f32.mrb[0].mxu0
    %v187 = vadd.f32 0.0, %v186
    %v188 = vpop.f32.mrb[0].mxu0
    %189 = vmatprep.mubr.f32.mxu0 0.0
    %v190 = vand.u32 %v83, 4294901760
    %v191 = vsub.f32 %v83, %v190
    %v192 = vand.u32 %v191, 4294901760
    %v193 = vsub.f32 %v191, %v192
    %v194 = vand.u32 %v193, 4294901760
    %195 = vmatmul.mubr.f32.gmra.mrb[0].mxu0 %v194
    %v196 = vpop.f32.mrb[0].mxu0
    %v197 = vadd.f32 0.0, %v196
    %v198 = vpop.f32.mrb[0].mxu0
    %199 = vmatprep.mubr.f32.mxu0 0.0
    %v200 = vand.u32 %v86, 4294901760
    %v201 = vsub.f32 %v86, %v200
    %v202 = vand.u32 %v201, 4294901760
    %v203 = vsub.f32 %v201, %v202
    %v204 = vand.u32 %v203, 4294901760
    %205 = vmatmul.mubr.f32.gmra.mrb[0].mxu0 %v204
    %v206 = vpop.f32.mrb[0].mxu0
    %v207 = vadd.f32 0.0, %v206
    %v208 = vpop.f32.mrb[0].mxu0
    %209 = vmatprep.mubr.f32.mxu0 0.0
    %v210 = vand.u32 %v89, 4294901760
    %v211 = vsub.f32 %v89, %v210
    %v212 = vand.u32 %v211, 4294901760
    %v213 = vsub.f32 %v211, %v212
    %v214 = vand.u32 %v213, 4294901760
    %215 = vmatmul.mubr.f32.gmra.mrb[0].mxu0 %v214
    %v216 = vpop.f32.mrb[0].mxu0
    %v217 = vadd.f32 0.0, %v216
    %v218 = vpop.f32.mrb[0].mxu0
    %219 = vmatprep.mubr.f32.mxu0 0.0
    %v220 = vand.u32 %v92, 4294901760
    %v221 = vsub.f32 %v92, %v220
    %v222 = vand.u32 %v221, 4294901760
    %v223 = vsub.f32 %v221, %v222
    %v224 = vand.u32 %v223, 4294901760
    %225 = vmatmul.mubr.f32.gmra.mrb[0].mxu0 %v224
    %v226 = vpop.f32.mrb[0].mxu0
    %v227 = vadd.f32 0.0, %v226
    %v228 = vpop.f32.mrb[0].mxu0
    %229 = vmatprep.mubr.f32.mxu0 0.0
    %v230 = vand.u32 %v95, 4294901760
    %v231 = vsub.f32 %v95, %v230
    %v232 = vand.u32 %v231, 4294901760
    %v233 = vsub.f32 %v231, %v232
    %v234 = vand.u32 %v233, 4294901760
    %235 = vmatmul.mubr.f32.gmra.mrb[0].mxu0 %v234
    %v236 = vpop.f32.mrb[0].mxu0
    %v237 = vadd.f32 0.0, %v236
    %v238 = vpop.f32.mrb[0].mxu0
    %239 = vmatprep.mubr.f32.mxu0 0.0
    %v240 = vand.u32 %v98, 4294901760
    %v241 = vsub.f32 %v98, %v240
    %v242 = vand.u32 %v241, 4294901760
    %v243 = vsub.f32 %v241, %v242
    %v244 = vand.u32 %v243, 4294901760
    %245 = vmatmul.mubr.f32.gmra.mrb[0].mxu0 %v244
    %v246 = vpop.f32.mrb[0].mxu0
    %v247 = vadd.f32 0.0, %v246
    %v248 = vpop.f32.mrb[0].mxu0
    %249 = vdwg.mxu0
    %250 = vmatprep.subr.mxu0 0.0
    %v251 = vand.u32 %v102, 4294901760
    %v252 = vsub.f32 %v102, %v251
    %v253 = vand.u32 %v252, 4294901760
    %v254 = vsub.f32 %v252, %v253
    %v255 = vand.u32 %v254, 4294901760
    %256 = vmatpush1.msra.mxu0 %v255
    %257 = vmatprep.subr.mxu0 0.0
    %258 = vmatpush1.msra.mxu0 0.0
    %259 = vmatprep.subr.mxu0 0.0
    %260 = vmatpush1.msra.mxu0 0.0
    %261 = vmatprep.subr.mxu0 0.0
    %262 = vmatpush1.msra.mxu0 0.0
    %263 = vmatprep.subr.mxu0 0.0
    %264 = vmatpush1.msra.mxu0 0.0
    %265 = vmatprep.subr.mxu0 0.0
    %266 = vmatpush1.msra.mxu0 0.0
    %267 = vmatprep.subr.mxu0 0.0
    %268 = vmatpush1.msra.mxu0 0.0
    %269 = vmatprep.subr.mxu0 0.0
    %270 = vmatpush1.msra.mxu0 0.0
    %271 = vmatprep.subr.mxu0 0.0
    %272 = vmatpush1.msra.mxu0 0.0
    %273 = vmatprep.subr.mxu0 0.0
    %274 = vmatpush1.msra.mxu0 0.0
    %275 = vmatprep.subr.mxu0 0.0
    %276 = vmatpush1.msra.mxu0 0.0
    %277 = vmatprep.subr.mxu0 0.0
    %278 = vmatpush1.msra.mxu0 0.0
    %279 = vmatprep.subr.mxu0 0.0
    %280 = vmatpush1.msra.mxu0 0.0
    %281 = vmatprep.subr.mxu0 0.0
    %282 = vmatpush1.msra.mxu0 0.0
    %283 = vmatprep.subr.mxu0 0.0
    %284 = vmatpush1.msra.mxu0 0.0
    %285 = vmatprep.subr.mxu0 0.0
    %286 = vmatpush1.msra.mxu0 0.0
    %287 = vmatprep.subr.mxu0 0.0
    %288 = vmatpush1.msra.mxu0 0.0
    %289 = vmatprep.subr.mxu0 0.0
    %290 = vmatpush1.msra.mxu0 0.0
    %291 = vmatprep.subr.mxu0 0.0
    %292 = vmatpush1.msra.mxu0 0.0
    %293 = vmatprep.subr.mxu0 0.0
    %294 = vmatpush1.msra.mxu0 0.0
    %295 = vmatprep.subr.mxu0 0.0
    %296 = vmatpush1.msra.mxu0 0.0
    %297 = vmatprep.subr.mxu0 0.0
    %298 = vmatpush1.msra.mxu0 0.0
    %299 = vmatprep.subr.mxu0 0.0
    %300 = vmatpush1.msra.mxu0 0.0
    %301 = vmatprep.subr.mxu0 0.0
    %302 = vmatpush1.msra.mxu0 0.0
    %303 = vmatprep.subr.mxu0 0.0
    %304 = vmatpush1.msra.mxu0 0.0
    %305 = vmatprep.subr.mxu0 0.0
    %306 = vmatpush1.msra.mxu0 0.0
    %307 = vmatprep.subr.mxu0 0.0
    %308 = vmatpush1.msra.mxu0 0.0
    %309 = vmatprep.subr.mxu0 0.0
    %310 = vmatpush1.msra.mxu0 0.0
    %311 = vmatprep.subr.mxu0 0.0
    %312 = vmatpush1.msra.mxu0 0.0
    %313 = vmatprep.subr.mxu0 0.0
    %314 = vmatpush1.msra.mxu0 0.0
    %315 = vmatprep.subr.mxu0 0.0
    %316 = vmatpush1.msra.mxu0 0.0
    %317 = vmatprep.subr.mxu0 0.0
    %318 = vmatpush1.msra.mxu0 0.0
    %319 = vmatprep.mubr.f32.mxu0 0.0
    %v320 = vand.u32 %v77, 4294901760
    %321 = vmatmul.mubr.f32.gmra.mrb[0].mxu0 %v320
    %v322 = vpop.f32.mrb[0].mxu0
    %v323 = vadd.f32 %v177, %v322
    %v324 = vpop.f32.mrb[0].mxu0
    %325 = vmatprep.mubr.f32.mxu0 0.0
    %v326 = vand.u32 %v80, 4294901760
    %327 = vmatmul.mubr.f32.gmra.mrb[0].mxu0 %v326
    %v328 = vpop.f32.mrb[0].mxu0
    %v329 = vadd.f32 %v187, %v328
    %v330 = vpop.f32.mrb[0].mxu0
    %331 = vmatprep.mubr.f32.mxu0 0.0
    %v332 = vand.u32 %v83, 4294901760
    %333 = vmatmul.mubr.f32.gmra.mrb[0].mxu0 %v332
    %v334 = vpop.f32.mrb[0].mxu0
    %v335 = vadd.f32 %v197, %v334
    %v336 = vpop.f32.mrb[0].mxu0
    %337 = vmatprep.mubr.f32.mxu0 0.0
    %v338 = vand.u32 %v86, 4294901760
    %339 = vmatmul.mubr.f32.gmra.mrb[0].mxu0 %v338
    %v340 = vpop.f32.mrb[0].mxu0
    %v341 = vadd.f32 %v207, %v340
    %v342 = vpop.f32.mrb[0].mxu0
    %343 = vmatprep.mubr.f32.mxu0 0.0
    %v344 = vand.u32 %v89, 4294901760
    %345 = vmatmul.mubr.f32.gmra.mrb[0].mxu0 %v344
    %v346 = vpop.f32.mrb[0].mxu0
    %v347 = vadd.f32 %v217, %v346
    %v348 = vpop.f32.mrb[0].mxu0
    %349 = vmatprep.mubr.f32.mxu0 0.0
    %v350 = vand.u32 %v92, 4294901760
    %351 = vmatmul.mubr.f32.gmra.mrb[0].mxu0 %v350
    %v352 = vpop.f32.mrb[0].mxu0
    %v353 = vadd.f32 %v227, %v352
    %v354 = vpop.f32.mrb[0].mxu0
    %355 = vmatprep.mubr.f32.mxu0 0.0
    %v356 = vand.u32 %v95, 4294901760
    %357 = vmatmul.mubr.f32.gmra.mrb[0].mxu0 %v356
    %v358 = vpop.f32.mrb[0].mxu0
    %v359 = vadd.f32 %v237, %v358
    %v360 = vpop.f32.mrb[0].mxu0
    %361 = vmatprep.mubr.f32.mxu0 0.0
    %v362 = vand.u32 %v98, 4294901760
    %363 = vmatmul.mubr.f32.gmra.mrb[0].mxu0 %v362
    %v364 = vpop.f32.mrb[0].mxu0
    %v365 = vadd.f32 %v247, %v364
    %v366 = vpop.f32.mrb[0].mxu0
    %367 = vdwg.mxu0
    %368 = vmatprep.subr.mxu0 0.0
    %v369 = vand.u32 %v102, 4294901760
    %v370 = vsub.f32 %v102, %v369
    %371 = vmatpush1.msra.mxu0 %v370
    %372 = vmatprep.subr.mxu0 0.0
    %373 = vmatpush1.msra.mxu0 0.0
    %374 = vmatprep.subr.mxu0 0.0
    %375 = vmatpush1.msra.mxu0 0.0
    %376 = vmatprep.subr.mxu0 0.0
    %377 = vmatpush1.msra.mxu0 0.0
    %378 = vmatprep.subr.mxu0 0.0
    %379 = vmatpush1.msra.mxu0 0.0
    %380 = vmatprep.subr.mxu0 0.0
    %381 = vmatpush1.msra.mxu0 0.0
    %382 = vmatprep.subr.mxu0 0.0
    %383 = vmatpush1.msra.mxu0 0.0
    %384 = vmatprep.subr.mxu0 0.0
    %385 = vmatpush1.msra.mxu0 0.0
    %386 = vmatprep.subr.mxu0 0.0
    %387 = vmatpush1.msra.mxu0 0.0
    %388 = vmatprep.subr.mxu0 0.0
    %389 = vmatpush1.msra.mxu0 0.0
    %390 = vmatprep.subr.mxu0 0.0
    %391 = vmatpush1.msra.mxu0 0.0
    %392 = vmatprep.subr.mxu0 0.0
    %393 = vmatpush1.msra.mxu0 0.0
    %394 = vmatprep.subr.mxu0 0.0
    %395 = vmatpush1.msra.mxu0 0.0
    %396 = vmatprep.subr.mxu0 0.0
    %397 = vmatpush1.msra.mxu0 0.0
    %398 = vmatprep.subr.mxu0 0.0
    %399 = vmatpush1.msra.mxu0 0.0
    %400 = vmatprep.subr.mxu0 0.0
    %401 = vmatpush1.msra.mxu0 0.0
    %402 = vmatprep.subr.mxu0 0.0
    %403 = vmatpush1.msra.mxu0 0.0
    %404 = vmatprep.subr.mxu0 0.0
    %405 = vmatpush1.msra.mxu0 0.0
    %406 = vmatprep.subr.mxu0 0.0
    %407 = vmatpush1.msra.mxu0 0.0
    %408 = vmatprep.subr.mxu0 0.0
    %409 = vmatpush1.msra.mxu0 0.0
    %410 = vmatprep.subr.mxu0 0.0
    %411 = vmatpush1.msra.mxu0 0.0
    %412 = vmatprep.subr.mxu0 0.0
    %413 = vmatpush1.msra.mxu0 0.0
    %414 = vmatprep.subr.mxu0 0.0
    %415 = vmatpush1.msra.mxu0 0.0
    %416 = vmatprep.subr.mxu0 0.0
    %417 = vmatpush1.msra.mxu0 0.0
    %418 = vmatprep.subr.mxu0 0.0
    %419 = vmatpush1.msra.mxu0 0.0
    %420 = vmatprep.subr.mxu0 0.0
    %421 = vmatpush1.msra.mxu0 0.0
    %422 = vmatprep.subr.mxu0 0.0
    %423 = vmatpush1.msra.mxu0 0.0
    %424 = vmatprep.subr.mxu0 0.0
    %425 = vmatpush1.msra.mxu0 0.0
    %426 = vmatprep.subr.mxu0 0.0
    %427 = vmatpush1.msra.mxu0 0.0
    %428 = vmatprep.subr.mxu0 0.0
    %429 = vmatpush1.msra.mxu0 0.0
    %430 = vmatprep.subr.mxu0 0.0
    %431 = vmatpush1.msra.mxu0 0.0
    %432 = vmatprep.subr.mxu0 0.0
    %433 = vmatpush1.msra.mxu0 0.0
    %434 = vmatprep.mubr.f32.mxu0 0.0
    %v435 = vand.u32 %v77, 4294901760
    %v436 = vsub.f32 %v77, %v435
    %437 = vmatmul.mubr.f32.gmra.mrb[0].mxu0 %v436
    %v438 = vpop.f32.mrb[0].mxu0
    %v439 = vadd.f32 %v323, %v438
    %v440 = vpop.f32.mrb[0].mxu0
    %441 = vmatprep.mubr.f32.mxu0 0.0
    %v442 = vand.u32 %v80, 4294901760
    %v443 = vsub.f32 %v80, %v442
    %444 = vmatmul.mubr.f32.gmra.mrb[0].mxu0 %v443
    %v445 = vpop.f32.mrb[0].mxu0
    %v446 = vadd.f32 %v329, %v445
    %v447 = vpop.f32.mrb[0].mxu0
    %448 = vmatprep.mubr.f32.mxu0 0.0
    %v449 = vand.u32 %v83, 4294901760
    %v450 = vsub.f32 %v83, %v449
    %451 = vmatmul.mubr.f32.gmra.mrb[0].mxu0 %v450
    %v452 = vpop.f32.mrb[0].mxu0
    %v453 = vadd.f32 %v335, %v452
    %v454 = vpop.f32.mrb[0].mxu0
    %455 = vmatprep.mubr.f32.mxu0 0.0
    %v456 = vand.u32 %v86, 4294901760
    %v457 = vsub.f32 %v86, %v456
    %458 = vmatmul.mubr.f32.gmra.mrb[0].mxu0 %v457
    %v459 = vpop.f32.mrb[0].mxu0
    %v460 = vadd.f32 %v341, %v459
    %v461 = vpop.f32.mrb[0].mxu0
    %462 = vmatprep.mubr.f32.mxu0 0.0
    %v463 = vand.u32 %v89, 4294901760
    %v464 = vsub.f32 %v89, %v463
    %465 = vmatmul.mubr.f32.gmra.mrb[0].mxu0 %v464
    %v466 = vpop.f32.mrb[0].mxu0
    %v467 = vadd.f32 %v347, %v466
    %v468 = vpop.f32.mrb[0].mxu0
    %469 = vmatprep.mubr.f32.mxu0 0.0
    %v470 = vand.u32 %v92, 4294901760
    %v471 = vsub.f32 %v92, %v470
    %472 = vmatmul.mubr.f32.gmra.mrb[0].mxu0 %v471
    %v473 = vpop.f32.mrb[0].mxu0
    %v474 = vadd.f32 %v353, %v473
    %v475 = vpop.f32.mrb[0].mxu0
    %476 = vmatprep.mubr.f32.mxu0 0.0
    %v477 = vand.u32 %v95, 4294901760
    %v478 = vsub.f32 %v95, %v477
    %479 = vmatmul.mubr.f32.gmra.mrb[0].mxu0 %v478
    %v480 = vpop.f32.mrb[0].mxu0
    %v481 = vadd.f32 %v359, %v480
    %v482 = vpop.f32.mrb[0].mxu0
    %483 = vmatprep.mubr.f32.mxu0 0.0
    %v484 = vand.u32 %v98, 4294901760
    %v485 = vsub.f32 %v98, %v484
    %486 = vmatmul.mubr.f32.gmra.mrb[0].mxu0 %v485
    %v487 = vpop.f32.mrb[0].mxu0
    %v488 = vadd.f32 %v365, %v487
    %v489 = vpop.f32.mrb[0].mxu0
    %490 = vdwg.mxu0
    %491 = vmatprep.subr.mxu0 0.0
    %v492 = vand.u32 %v102, 4294901760
    %493 = vmatpush1.msra.mxu0 %v492
    %494 = vmatprep.subr.mxu0 0.0
    %495 = vmatpush1.msra.mxu0 0.0
    %496 = vmatprep.subr.mxu0 0.0
    %497 = vmatpush1.msra.mxu0 0.0
    %498 = vmatprep.subr.mxu0 0.0
    %499 = vmatpush1.msra.mxu0 0.0
    %500 = vmatprep.subr.mxu0 0.0
    %501 = vmatpush1.msra.mxu0 0.0
    %502 = vmatprep.subr.mxu0 0.0
    %503 = vmatpush1.msra.mxu0 0.0
    %504 = vmatprep.subr.mxu0 0.0
    %505 = vmatpush1.msra.mxu0 0.0
    %506 = vmatprep.subr.mxu0 0.0
    %507 = vmatpush1.msra.mxu0 0.0
    %508 = vmatprep.subr.mxu0 0.0
    %509 = vmatpush1.msra.mxu0 0.0
    %510 = vmatprep.subr.mxu0 0.0
    %511 = vmatpush1.msra.mxu0 0.0
    %512 = vmatprep.subr.mxu0 0.0
    %513 = vmatpush1.msra.mxu0 0.0
    %514 = vmatprep.subr.mxu0 0.0
    %515 = vmatpush1.msra.mxu0 0.0
    %516 = vmatprep.subr.mxu0 0.0
    %517 = vmatpush1.msra.mxu0 0.0
    %518 = vmatprep.subr.mxu0 0.0
    %519 = vmatpush1.msra.mxu0 0.0
    %520 = vmatprep.subr.mxu0 0.0
    %521 = vmatpush1.msra.mxu0 0.0
    %522 = vmatprep.subr.mxu0 0.0
    %523 = vmatpush1.msra.mxu0 0.0
    %524 = vmatprep.subr.mxu0 0.0
    %525 = vmatpush1.msra.mxu0 0.0
    %526 = vmatprep.subr.mxu0 0.0
    %527 = vmatpush1.msra.mxu0 0.0
    %528 = vmatprep.subr.mxu0 0.0
    %529 = vmatpush1.msra.mxu0 0.0
    %530 = vmatprep.subr.mxu0 0.0
    %531 = vmatpush1.msra.mxu0 0.0
    %532 = vmatprep.subr.mxu0 0.0
    %533 = vmatpush1.msra.mxu0 0.0
    %534 = vmatprep.subr.mxu0 0.0
    %535 = vmatpush1.msra.mxu0 0.0
    %536 = vmatprep.subr.mxu0 0.0
    %537 = vmatpush1.msra.mxu0 0.0
    %538 = vmatprep.subr.mxu0 0.0
    %539 = vmatpush1.msra.mxu0 0.0
    %540 = vmatprep.subr.mxu0 0.0
    %541 = vmatpush1.msra.mxu0 0.0
    %542 = vmatprep.subr.mxu0 0.0
    %543 = vmatpush1.msra.mxu0 0.0
    %544 = vmatprep.subr.mxu0 0.0
    %545 = vmatpush1.msra.mxu0 0.0
    %546 = vmatprep.subr.mxu0 0.0
    %547 = vmatpush1.msra.mxu0 0.0
    %548 = vmatprep.subr.mxu0 0.0
    %549 = vmatpush1.msra.mxu0 0.0
    %550 = vmatprep.subr.mxu0 0.0
    %551 = vmatpush1.msra.mxu0 0.0
    %552 = vmatprep.subr.mxu0 0.0
    %553 = vmatpush1.msra.mxu0 0.0
    %554 = vmatprep.subr.mxu0 0.0
    %555 = vmatpush1.msra.mxu0 0.0
    %556 = vmatprep.mubr.f32.mxu0 0.0
    %v557 = vand.u32 %v77, 4294901760
    %v558 = vsub.f32 %v77, %v557
    %v559 = vand.u32 %v558, 4294901760
    %560 = vmatmul.mubr.f32.gmra.mrb[0].mxu0 %v559
    %v561 = vpop.f32.mrb[0].mxu0
    %v562 = vadd.f32 %v439, %v561
    %v563 = vpop.f32.mrb[0].mxu0
    %564 = vmatprep.mubr.f32.mxu0 0.0
    %v565 = vand.u32 %v80, 4294901760
    %v566 = vsub.f32 %v80, %v565
    %v567 = vand.u32 %v566, 4294901760
    %568 = vmatmul.mubr.f32.gmra.mrb[0].mxu0 %v567
    %v569 = vpop.f32.mrb[0].mxu0
    %v570 = vadd.f32 %v446, %v569
    %v571 = vpop.f32.mrb[0].mxu0
    %572 = vmatprep.mubr.f32.mxu0 0.0
    %v573 = vand.u32 %v83, 4294901760
    %v574 = vsub.f32 %v83, %v573
    %v575 = vand.u32 %v574, 4294901760
    %576 = vmatmul.mubr.f32.gmra.mrb[0].mxu0 %v575
    %v577 = vpop.f32.mrb[0].mxu0
    %v578 = vadd.f32 %v453, %v577
    %v579 = vpop.f32.mrb[0].mxu0
    %580 = vmatprep.mubr.f32.mxu0 0.0
    %v581 = vand.u32 %v86, 4294901760
    %v582 = vsub.f32 %v86, %v581
    %v583 = vand.u32 %v582, 4294901760
    %584 = vmatmul.mubr.f32.gmra.mrb[0].mxu0 %v583
    %v585 = vpop.f32.mrb[0].mxu0
    %v586 = vadd.f32 %v460, %v585
    %v587 = vpop.f32.mrb[0].mxu0
    %588 = vmatprep.mubr.f32.mxu0 0.0
    %v589 = vand.u32 %v89, 4294901760
    %v590 = vsub.f32 %v89, %v589
    %v591 = vand.u32 %v590, 4294901760
    %592 = vmatmul.mubr.f32.gmra.mrb[0].mxu0 %v591
    %v593 = vpop.f32.mrb[0].mxu0
    %v594 = vadd.f32 %v467, %v593
    %v595 = vpop.f32.mrb[0].mxu0
    %596 = vmatprep.mubr.f32.mxu0 0.0
    %v597 = vand.u32 %v92, 4294901760
    %v598 = vsub.f32 %v92, %v597
    %v599 = vand.u32 %v598, 4294901760
    %600 = vmatmul.mubr.f32.gmra.mrb[0].mxu0 %v599
    %v601 = vpop.f32.mrb[0].mxu0
    %v602 = vadd.f32 %v474, %v601
    %v603 = vpop.f32.mrb[0].mxu0
    %604 = vmatprep.mubr.f32.mxu0 0.0
    %v605 = vand.u32 %v95, 4294901760
    %v606 = vsub.f32 %v95, %v605
    %v607 = vand.u32 %v606, 4294901760
    %608 = vmatmul.mubr.f32.gmra.mrb[0].mxu0 %v607
    %v609 = vpop.f32.mrb[0].mxu0
    %v610 = vadd.f32 %v481, %v609
    %v611 = vpop.f32.mrb[0].mxu0
    %612 = vmatprep.mubr.f32.mxu0 0.0
    %v613 = vand.u32 %v98, 4294901760
    %v614 = vsub.f32 %v98, %v613
    %v615 = vand.u32 %v614, 4294901760
    %616 = vmatmul.mubr.f32.gmra.mrb[0].mxu0 %v615
    %v617 = vpop.f32.mrb[0].mxu0
    %v618 = vadd.f32 %v488, %v617
    %v619 = vpop.f32.mrb[0].mxu0
    %620 = vdwg.mxu0
    %621 = vmatprep.subr.mxu0 0.0
    %v622 = vand.u32 %v102, 4294901760
    %v623 = vsub.f32 %v102, %v622
    %v624 = vand.u32 %v623, 4294901760
    %625 = vmatpush1.msra.mxu0 %v624
    %626 = vmatprep.subr.mxu0 0.0
    %627 = vmatpush1.msra.mxu0 0.0
    %628 = vmatprep.subr.mxu0 0.0
    %629 = vmatpush1.msra.mxu0 0.0
    %630 = vmatprep.subr.mxu0 0.0
    %631 = vmatpush1.msra.mxu0 0.0
    %632 = vmatprep.subr.mxu0 0.0
    %633 = vmatpush1.msra.mxu0 0.0
    %634 = vmatprep.subr.mxu0 0.0
    %635 = vmatpush1.msra.mxu0 0.0
    %636 = vmatprep.subr.mxu0 0.0
    %637 = vmatpush1.msra.mxu0 0.0
    %638 = vmatprep.subr.mxu0 0.0
    %639 = vmatpush1.msra.mxu0 0.0
    %640 = vmatprep.subr.mxu0 0.0
    %641 = vmatpush1.msra.mxu0 0.0
    %642 = vmatprep.subr.mxu0 0.0
    %643 = vmatpush1.msra.mxu0 0.0
    %644 = vmatprep.subr.mxu0 0.0
    %645 = vmatpush1.msra.mxu0 0.0
    %646 = vmatprep.subr.mxu0 0.0
    %647 = vmatpush1.msra.mxu0 0.0
    %648 = vmatprep.subr.mxu0 0.0
    %649 = vmatpush1.msra.mxu0 0.0
    %650 = vmatprep.subr.mxu0 0.0
    %651 = vmatpush1.msra.mxu0 0.0
    %652 = vmatprep.subr.mxu0 0.0
    %653 = vmatpush1.msra.mxu0 0.0
    %654 = vmatprep.subr.mxu0 0.0
    %655 = vmatpush1.msra.mxu0 0.0
    %656 = vmatprep.subr.mxu0 0.0
    %657 = vmatpush1.msra.mxu0 0.0
    %658 = vmatprep.subr.mxu0 0.0
    %659 = vmatpush1.msra.mxu0 0.0
    %660 = vmatprep.subr.mxu0 0.0
    %661 = vmatpush1.msra.mxu0 0.0
    %662 = vmatprep.subr.mxu0 0.0
    %663 = vmatpush1.msra.mxu0 0.0
    %664 = vmatprep.subr.mxu0 0.0
    %665 = vmatpush1.msra.mxu0 0.0
    %666 = vmatprep.subr.mxu0 0.0
    %667 = vmatpush1.msra.mxu0 0.0
    %668 = vmatprep.subr.mxu0 0.0
    %669 = vmatpush1.msra.mxu0 0.0
    %670 = vmatprep.subr.mxu0 0.0
    %671 = vmatpush1.msra.mxu0 0.0
    %672 = vmatprep.subr.mxu0 0.0
    %673 = vmatpush1.msra.mxu0 0.0
    %674 = vmatprep.subr.mxu0 0.0
    %675 = vmatpush1.msra.mxu0 0.0
    %676 = vmatprep.subr.mxu0 0.0
    %677 = vmatpush1.msra.mxu0 0.0
    %678 = vmatprep.subr.mxu0 0.0
    %679 = vmatpush1.msra.mxu0 0.0
    %680 = vmatprep.subr.mxu0 0.0
    %681 = vmatpush1.msra.mxu0 0.0
    %682 = vmatprep.subr.mxu0 0.0
    %683 = vmatpush1.msra.mxu0 0.0
    %684 = vmatprep.subr.mxu0 0.0
    %685 = vmatpush1.msra.mxu0 0.0
    %686 = vmatprep.subr.mxu0 0.0
    %687 = vmatpush1.msra.mxu0 0.0
    %688 = vmatprep.mubr.f32.mxu0 0.0
    %v689 = vand.u32 %v77, 4294901760
    %690 = vmatmul.mubr.f32.gmra.mrb[0].mxu0 %v689
    %v691 = vpop.f32.mrb[0].mxu0
    %v692 = vadd.f32 %v562, %v691
    %v693 = vpop.f32.mrb[0].mxu0
    %694 = vmatprep.mubr.f32.mxu0 0.0
    %v695 = vand.u32 %v80, 4294901760
    %696 = vmatmul.mubr.f32.gmra.mrb[0].mxu0 %v695
    %v697 = vpop.f32.mrb[0].mxu0
    %v698 = vadd.f32 %v570, %v697
    %v699 = vpop.f32.mrb[0].mxu0
    %700 = vmatprep.mubr.f32.mxu0 0.0
    %v701 = vand.u32 %v83, 4294901760
    %702 = vmatmul.mubr.f32.gmra.mrb[0].mxu0 %v701
    %v703 = vpop.f32.mrb[0].mxu0
    %v704 = vadd.f32 %v578, %v703
    %v705 = vpop.f32.mrb[0].mxu0
    %706 = vmatprep.mubr.f32.mxu0 0.0
    %v707 = vand.u32 %v86, 4294901760
    %708 = vmatmul.mubr.f32.gmra.mrb[0].mxu0 %v707
    %v709 = vpop.f32.mrb[0].mxu0
    %v710 = vadd.f32 %v586, %v709
    %v711 = vpop.f32.mrb[0].mxu0
    %712 = vmatprep.mubr.f32.mxu0 0.0
    %v713 = vand.u32 %v89, 4294901760
    %714 = vmatmul.mubr.f32.gmra.mrb[0].mxu0 %v713
    %v715 = vpop.f32.mrb[0].mxu0
    %v716 = vadd.f32 %v594, %v715
    %v717 = vpop.f32.mrb[0].mxu0
    %718 = vmatprep.mubr.f32.mxu0 0.0
    %v719 = vand.u32 %v92, 4294901760
    %720 = vmatmul.mubr.f32.gmra.mrb[0].mxu0 %v719
    %v721 = vpop.f32.mrb[0].mxu0
    %v722 = vadd.f32 %v602, %v721
    %v723 = vpop.f32.mrb[0].mxu0
    %724 = vmatprep.mubr.f32.mxu0 0.0
    %v725 = vand.u32 %v95, 4294901760
    %726 = vmatmul.mubr.f32.gmra.mrb[0].mxu0 %v725
    %v727 = vpop.f32.mrb[0].mxu0
    %v728 = vadd.f32 %v610, %v727
    %v729 = vpop.f32.mrb[0].mxu0
    %730 = vmatprep.mubr.f32.mxu0 0.0
    %v731 = vand.u32 %v98, 4294901760
    %732 = vmatmul.mubr.f32.gmra.mrb[0].mxu0 %v731
    %v733 = vpop.f32.mrb[0].mxu0
    %v734 = vadd.f32 %v618, %v733
    %v735 = vpop.f32.mrb[0].mxu0
    %736 = vdwg.mxu0
    %737 = vmatprep.subr.mxu0 0.0
    %v738 = vand.u32 %v102, 4294901760
    %739 = vmatpush1.msra.mxu0 %v738
    %740 = vmatprep.subr.mxu0 0.0
    %741 = vmatpush1.msra.mxu0 0.0
    %742 = vmatprep.subr.mxu0 0.0
    %743 = vmatpush1.msra.mxu0 0.0
    %744 = vmatprep.subr.mxu0 0.0
    %745 = vmatpush1.msra.mxu0 0.0
    %746 = vmatprep.subr.mxu0 0.0
    %747 = vmatpush1.msra.mxu0 0.0
    %748 = vmatprep.subr.mxu0 0.0
    %749 = vmatpush1.msra.mxu0 0.0
    %750 = vmatprep.subr.mxu0 0.0
    %751 = vmatpush1.msra.mxu0 0.0
    %752 = vmatprep.subr.mxu0 0.0
    %753 = vmatpush1.msra.mxu0 0.0
    %754 = vmatprep.subr.mxu0 0.0
    %755 = vmatpush1.msra.mxu0 0.0
    %756 = vmatprep.subr.mxu0 0.0
    %757 = vmatpush1.msra.mxu0 0.0
    %758 = vmatprep.subr.mxu0 0.0
    %759 = vmatpush1.msra.mxu0 0.0
    %760 = vmatprep.subr.mxu0 0.0
    %761 = vmatpush1.msra.mxu0 0.0
    %762 = vmatprep.subr.mxu0 0.0
    %763 = vmatpush1.msra.mxu0 0.0
    %764 = vmatprep.subr.mxu0 0.0
    %765 = vmatpush1.msra.mxu0 0.0
    %766 = vmatprep.subr.mxu0 0.0
    %767 = vmatpush1.msra.mxu0 0.0
    %768 = vmatprep.subr.mxu0 0.0
    %769 = vmatpush1.msra.mxu0 0.0
    %770 = vmatprep.subr.mxu0 0.0
    %771 = vmatpush1.msra.mxu0 0.0
    %772 = vmatprep.subr.mxu0 0.0
    %773 = vmatpush1.msra.mxu0 0.0
    %774 = vmatprep.subr.mxu0 0.0
    %775 = vmatpush1.msra.mxu0 0.0
    %776 = vmatprep.subr.mxu0 0.0
    %777 = vmatpush1.msra.mxu0 0.0
    %778 = vmatprep.subr.mxu0 0.0
    %779 = vmatpush1.msra.mxu0 0.0
    %780 = vmatprep.subr.mxu0 0.0
    %781 = vmatpush1.msra.mxu0 0.0
    %782 = vmatprep.subr.mxu0 0.0
    %783 = vmatpush1.msra.mxu0 0.0
    %784 = vmatprep.subr.mxu0 0.0
    %785 = vmatpush1.msra.mxu0 0.0
    %786 = vmatprep.subr.mxu0 0.0
    %787 = vmatpush1.msra.mxu0 0.0
    %788 = vmatprep.subr.mxu0 0.0
    %789 = vmatpush1.msra.mxu0 0.0
    %790 = vmatprep.subr.mxu0 0.0
    %791 = vmatpush1.msra.mxu0 0.0
    %792 = vmatprep.subr.mxu0 0.0
    %793 = vmatpush1.msra.mxu0 0.0
    %794 = vmatprep.subr.mxu0 0.0
    %795 = vmatpush1.msra.mxu0 0.0
    %796 = vmatprep.subr.mxu0 0.0
    %797 = vmatpush1.msra.mxu0 0.0
    %798 = vmatprep.subr.mxu0 0.0
    %799 = vmatpush1.msra.mxu0 0.0
    %800 = vmatprep.subr.mxu0 0.0
    %801 = vmatpush1.msra.mxu0 0.0
    %802 = vmatprep.mubr.f32.mxu0 0.0
    %v803 = vand.u32 %v77, 4294901760
    %804 = vmatmul.mubr.f32.gmra.mrb[0].mxu0 %v803
    %v805 = vpop.f32.mrb[0].mxu0
    %v806 = vadd.f32 %v692, %v805
    %v807 = vpop.f32.mrb[0].mxu0
    %808 = vmatprep.mubr.f32.mxu0 0.0
    %v809 = vand.u32 %v80, 4294901760
    %810 = vmatmul.mubr.f32.gmra.mrb[0].mxu0 %v809
    %v811 = vpop.f32.mrb[0].mxu0
    %v812 = vadd.f32 %v698, %v811
    %v813 = vpop.f32.mrb[0].mxu0
    %814 = vmatprep.mubr.f32.mxu0 0.0
    %v815 = vand.u32 %v83, 4294901760
    %816 = vmatmul.mubr.f32.gmra.mrb[0].mxu0 %v815
    %v817 = vpop.f32.mrb[0].mxu0
    %v818 = vadd.f32 %v704, %v817
    %v819 = vpop.f32.mrb[0].mxu0
    %820 = vmatprep.mubr.f32.mxu0 0.0
    %v821 = vand.u32 %v86, 4294901760
    %822 = vmatmul.mubr.f32.gmra.mrb[0].mxu0 %v821
    %v823 = vpop.f32.mrb[0].mxu0
    %v824 = vadd.f32 %v710, %v823
    %v825 = vpop.f32.mrb[0].mxu0
    %826 = vmatprep.mubr.f32.mxu0 0.0
    %v827 = vand.u32 %v89, 4294901760
    %828 = vmatmul.mubr.f32.gmra.mrb[0].mxu0 %v827
    %v829 = vpop.f32.mrb[0].mxu0
    %v830 = vadd.f32 %v716, %v829
    %v831 = vpop.f32.mrb[0].mxu0
    %832 = vmatprep.mubr.f32.mxu0 0.0
    %v833 = vand.u32 %v92, 4294901760
    %834 = vmatmul.mubr.f32.gmra.mrb[0].mxu0 %v833
    %v835 = vpop.f32.mrb[0].mxu0
    %v836 = vadd.f32 %v722, %v835
    %v837 = vpop.f32.mrb[0].mxu0
    %838 = vmatprep.mubr.f32.mxu0 0.0
    %v839 = vand.u32 %v95, 4294901760
    %840 = vmatmul.mubr.f32.gmra.mrb[0].mxu0 %v839
    %v841 = vpop.f32.mrb[0].mxu0
    %v842 = vadd.f32 %v728, %v841
    %v843 = vpop.f32.mrb[0].mxu0
    %844 = vmatprep.mubr.f32.mxu0 0.0
    %v845 = vand.u32 %v98, 4294901760
    %846 = vmatmul.mubr.f32.gmra.mrb[0].mxu0 %v845
    %v847 = vpop.f32.mrb[0].mxu0
    %v848 = vadd.f32 %v734, %v847
    %v849 = vpop.f32.mrb[0].mxu0
    %850 = vdwg.mxu0
    %v851 = vmax.f32 %v806, %v830
    %v852 = vmax.f32 %v812, %v836
    %v853 = vmax.f32 %v818, %v842
    %v854 = vmax.f32 %v824, %v848
    %v855 = vld [vmem:[#allocation3] sm:$0x1]
    %v857 = vlaneseq
    %v858 = vshrl.u32 %v857, 7
    %v859 = vsub.s32 0, %v858
    %v860 = vrot.slane %v855, %v859
    %v862 = vadd.f32 %v851, %v860
    %v863 = vadd.f32 %v852, %v860
    %v864 = vadd.f32 %v853, %v860
    %v865 = vadd.f32 %v854, %v860
    %vm866 = vcmp.gt.f32.partialorder %v862, 0.0
    %vm867 = vcmp.gt.f32.partialorder %v863, 0.0
    %vm868 = vcmp.gt.f32.partialorder %v864, 0.0
    %vm869 = vcmp.gt.f32.partialorder %v865, 0.0
    %v870 = vmul.f32 %v862, 0.2
    %v871 = vmul.f32 %v863, 0.2
    %v872 = vmul.f32 %v864, 0.2
    %v873 = vmul.f32 %v865, 0.2
    %v874 = vsel %vm866, %v862, %v870
    %v875 = vsel %vm867, %v863, %v871
    %v876 = vsel %vm868, %v864, %v872
    %v877 = vsel %vm869, %v865, %v873
    %v879 = vrot.slane %v875, 3
    %vm881 = vcmask 1040384
    %v882 = vsel %vm881, 0.0, %v879
    %v884 = vrot.slane %v874, 1
    %vm886 = vcmask 1042432
    %v887 = vsel %vm886, %v884, 0.0
    %888 = vrot.lane.b32.xlu0 %v874, 64
    %v889 = vpop.permute.xlu0 %888
    %v891 = vrot.slane %v874, 4
    %893 = vrot.lane.b32.xlu0 %v875, 64
    %v894 = vpop.permute.xlu0 %893
    %vm896 = vcmask 523264
    %v897 = vsel %vm896, %v882, %v889
    %v898 = vsel %vm896, %v891, %v894
    %v899 = vrot.slane %v875, 4
    %900 = vrot.lane.b32.xlu0 %v899, 64
    %v901 = vpop.permute.xlu0 %900
    %v904 = vrot.slane %v887, 4
    %905 = vrot.lane.b32.xlu0 %v904, 64
    %v906 = vpop.permute.xlu0 %905
    %v908 = vsel %vm896, %v874, %v901
    %v909 = vsel %vm896, %v875, %v906
    %v911 = vrot.slane %v877, 3
    %v913 = vsel %vm881, 0.0, %v911
    %v915 = vrot.slane %v876, 1
    %v917 = vsel %vm886, %v915, 0.0
    %918 = vrot.lane.b32.xlu0 %v876, 64
    %v919 = vpop.permute.xlu0 %918
    %v921 = vrot.slane %v876, 4
    %923 = vrot.lane.b32.xlu0 %v877, 64
    %v924 = vpop.permute.xlu0 %923
    %v926 = vsel %vm896, %v913, %v919
    %v927 = vsel %vm896, %v921, %v924
    %v928 = vrot.slane %v877, 4
    %929 = vrot.lane.b32.xlu0 %v928, 64
    %v930 = vpop.permute.xlu0 %929
    %v933 = vrot.slane %v917, 4
    %934 = vrot.lane.b32.xlu0 %v933, 64
    %v935 = vpop.permute.xlu0 %934
    %v937 = vsel %vm896, %v876, %v930
    %v938 = vsel %vm896, %v877, %v935
    %v941 = vrot.slane %v926, 4
    %v942 = vrot.slane %v927, 4
    %v947 = vrot.slane %v908, 4
    %v948 = vrot.slane %v909, 4
    %v951 = vsel %vm100, %v897, %v941
    %v952 = vsel %vm100, %v898, %v942
    %v953 = vsel %vm100, %v947, %v937
    %v954 = vsel %vm100, %v948, %v938
    %v955 = vld [vmem:[%s3] sm:$0xff]
    %v956 = vld [vmem:[%s3 + $0x8] sm:$0xff]
    %v957 = vld [vmem:[%s3 + $0x10] sm:$0xff]
    %v958 = vld [vmem:[%s3 + $0x18] sm:$0xff]
    %v959 = vld [vmem:[%s3 + $0x20] sm:$0xff]
    %v960 = vld [vmem:[%s3 + $0x28] sm:$0xff]
    %v961 = vld [vmem:[%s3 + $0x30] sm:$0xff]
    %v962 = vld [vmem:[%s3 + $0x38] sm:$0xff]
    %v963 = vld [vmem:[%s3 + $0x40] sm:$0xff]
    %v964 = vld [vmem:[%s3 + $0x48] sm:$0xff]
    %v965 = vld [vmem:[%s3 + $0x50] sm:$0xff]
    %v966 = vld [vmem:[%s3 + $0x58] sm:$0xff]
    %v967 = vld [vmem:[%s3 + $0x60] sm:$0xff]
    %v968 = vld [vmem:[%s3 + $0x68] sm:$0xff]
    %v969 = vld [vmem:[%s3 + $0x70] sm:$0xff]
    %v970 = vld [vmem:[%s3 + $0x78] sm:$0xff]
    %v971 = vld [vmem:[%s3 + $0x80] sm:$0xff]
    %v972 = vld [vmem:[%s3 + $0x88] sm:$0xff]
    %v973 = vld [vmem:[%s3 + $0x90] sm:$0xff]
    %v974 = vld [vmem:[%s3 + $0x98] sm:$0xff]
    %v975 = vld [vmem:[%s3 + $0xa0] sm:$0xff]
    %v976 = vld [vmem:[%s3 + $0xa8] sm:$0xff]
    %v977 = vld [vmem:[%s3 + $0xb0] sm:$0xff]
    %v978 = vld [vmem:[%s3 + $0xb8] sm:$0xff]
    %v979 = vld [vmem:[%s3 + $0xc0] sm:$0xff]
    %v980 = vld [vmem:[%s3 + $0xc8] sm:$0xff]
    %v981 = vld [vmem:[%s3 + $0xd0] sm:$0xff]
    %v982 = vld [vmem:[%s3 + $0xd8] sm:$0xff]
    %v983 = vld [vmem:[%s3 + $0xe0] sm:$0xff]
    %v984 = vld [vmem:[%s3 + $0xe8] sm:$0xff]
    %v985 = vld [vmem:[%s3 + $0xf0] sm:$0xff]
    %v986 = vld [vmem:[%s3 + $0xf8] sm:$0xff]
    %987 = vmatprep.subr.mxu0 0.0
    %v988 = vand.u32 %v955, 4294901760
    %989 = vmatpush1.msra.mxu0 %v988
    %990 = vmatprep.subr.mxu0 0.0
    %v991 = vand.u32 %v956, 4294901760
    %992 = vmatpush1.msra.mxu0 %v991
    %993 = vmatprep.subr.mxu0 0.0
    %v994 = vand.u32 %v957, 4294901760
    %995 = vmatpush1.msra.mxu0 %v994
    %996 = vmatprep.subr.mxu0 0.0
    %v997 = vand.u32 %v958, 4294901760
    %998 = vmatpush1.msra.mxu0 %v997
    %999 = vmatprep.subr.mxu0 0.0
    %v1000 = vand.u32 %v959, 4294901760
    %1001 = vmatpush1.msra.mxu0 %v1000
    %1002 = vmatprep.subr.mxu0 0.0
    %v1003 = vand.u32 %v960, 4294901760
    %1004 = vmatpush1.msra.mxu0 %v1003
    %1005 = vmatprep.subr.mxu0 0.0
    %v1006 = vand.u32 %v961, 4294901760
    %1007 = vmatpush1.msra.mxu0 %v1006
    %1008 = vmatprep.subr.mxu0 0.0
    %v1009 = vand.u32 %v962, 4294901760
    %1010 = vmatpush1.msra.mxu0 %v1009
    %1011 = vmatprep.subr.mxu0 0.0
    %v1012 = vand.u32 %v963, 4294901760
    %1013 = vmatpush1.msra.mxu0 %v1012
    %1014 = vmatprep.subr.mxu0 0.0
    %v1015 = vand.u32 %v964, 4294901760
    %1016 = vmatpush1.msra.mxu0 %v1015
    %1017 = vmatprep.subr.mxu0 0.0
    %v1018 = vand.u32 %v965, 4294901760
    %1019 = vmatpush1.msra.mxu0 %v1018
    %1020 = vmatprep.subr.mxu0 0.0
    %v1021 = vand.u32 %v966, 4294901760
    %1022 = vmatpush1.msra.mxu0 %v1021
    %1023 = vmatprep.subr.mxu0 0.0
    %v1024 = vand.u32 %v967, 4294901760
    %1025 = vmatpush1.msra.mxu0 %v1024
    %1026 = vmatprep.subr.mxu0 0.0
    %v1027 = vand.u32 %v968, 4294901760
    %1028 = vmatpush1.msra.mxu0 %v1027
    %1029 = vmatprep.subr.mxu0 0.0
    %v1030 = vand.u32 %v969, 4294901760
    %1031 = vmatpush1.msra.mxu0 %v1030
    %1032 = vmatprep.subr.mxu0 0.0
    %v1033 = vand.u32 %v970, 4294901760
    %1034 = vmatpush1.msra.mxu0 %v1033
    %1035 = vmatprep.subr.mxu0 0.0
    %v1036 = vand.u32 %v971, 4294901760
    %1037 = vmatpush1.msra.mxu0 %v1036
    %1038 = vmatprep.subr.mxu0 0.0
    %v1039 = vand.u32 %v972, 4294901760
    %1040 = vmatpush1.msra.mxu0 %v1039
    %1041 = vmatprep.subr.mxu0 0.0
    %v1042 = vand.u32 %v973, 4294901760
    %1043 = vmatpush1.msra.mxu0 %v1042
    %1044 = vmatprep.subr.mxu0 0.0
    %v1045 = vand.u32 %v974, 4294901760
    %1046 = vmatpush1.msra.mxu0 %v1045
    %1047 = vmatprep.subr.mxu0 0.0
    %v1048 = vand.u32 %v975, 4294901760
    %1049 = vmatpush1.msra.mxu0 %v1048
    %1050 = vmatprep.subr.mxu0 0.0
    %v1051 = vand.u32 %v976, 4294901760
    %1052 = vmatpush1.msra.mxu0 %v1051
    %1053 = vmatprep.subr.mxu0 0.0
    %v1054 = vand.u32 %v977, 4294901760
    %1055 = vmatpush1.msra.mxu0 %v1054
    %1056 = vmatprep.subr.mxu0 0.0
    %v1057 = vand.u32 %v978, 4294901760
    %1058 = vmatpush1.msra.mxu0 %v1057
    %1059 = vmatprep.subr.mxu0 0.0
    %v1060 = vand.u32 %v979, 4294901760
    %1061 = vmatpush1.msra.mxu0 %v1060
    %1062 = vmatprep.subr.mxu0 0.0
    %v1063 = vand.u32 %v980, 4294901760
    %1064 = vmatpush1.msra.mxu0 %v1063
    %1065 = vmatprep.subr.mxu0 0.0
    %v1066 = vand.u32 %v981, 4294901760
    %1067 = vmatpush1.msra.mxu0 %v1066
    %1068 = vmatprep.subr.mxu0 0.0
    %v1069 = vand.u32 %v982, 4294901760
    %1070 = vmatpush1.msra.mxu0 %v1069
    %1071 = vmatprep.subr.mxu0 0.0
    %v1072 = vand.u32 %v983, 4294901760
    %1073 = vmatpush1.msra.mxu0 %v1072
    %1074 = vmatprep.subr.mxu0 0.0
    %v1075 = vand.u32 %v984, 4294901760
    %1076 = vmatpush1.msra.mxu0 %v1075
    %1077 = vmatprep.subr.mxu0 0.0
    %v1078 = vand.u32 %v985, 4294901760
    %1079 = vmatpush1.msra.mxu0 %v1078
    %1080 = vmatprep.subr.mxu0 0.0
    %v1081 = vand.u32 %v986, 4294901760
    %1082 = vmatpush1.msra.mxu0 %v1081
    %v1083 = vand.u32 %v952, 4294901760
    %v1084 = vsub.f32 %v952, %v1083
    %v1085 = vand.u32 %v1084, 4294901760
    %v1086 = vsub.f32 %v1084, %v1085
    %v1087 = vand.u32 %v1086, 4294901760
    %1088 = vmatprep.mubr.f32.mxu0 %v1087
    %v1089 = vand.u32 %v951, 4294901760
    %v1090 = vsub.f32 %v951, %v1089
    %v1091 = vand.u32 %v1090, 4294901760
    %v1092 = vsub.f32 %v1090, %v1091
    %v1093 = vand.u32 %v1092, 4294901760
    %1094 = vmatmul.mubr.f32.gmra.mrb[0].mxu0 %v1093
    %v1095 = vpop.f32.mrb[0].mxu0
    %v1096 = vadd.f32 0.0, %v1095
    %v1097 = vpop.f32.mrb[0].mxu0
    %v1098 = vand.u32 %v954, 4294901760
    %v1099 = vsub.f32 %v954, %v1098
    %v1100 = vand.u32 %v1099, 4294901760
    %v1101 = vsub.f32 %v1099, %v1100
    %v1102 = vand.u32 %v1101, 4294901760
    %1103 = vmatprep.mubr.f32.mxu0 %v1102
    %v1104 = vand.u32 %v953, 4294901760
    %v1105 = vsub.f32 %v953, %v1104
    %v1106 = vand.u32 %v1105, 4294901760
    %v1107 = vsub.f32 %v1105, %v1106
    %v1108 = vand.u32 %v1107, 4294901760
    %1109 = vmatmul.mubr.f32.gmra.mrb[0].mxu0 %v1108
    %v1110 = vpop.f32.mrb[0].mxu0
    %v1111 = vadd.f32 0.0, %v1110
    %v1112 = vpop.f32.mrb[0].mxu0
    %1113 = vdwg.mxu0
    %1114 = vmatprep.subr.mxu0 0.0
    %v1115 = vand.u32 %v955, 4294901760
    %v1116 = vsub.f32 %v955, %v1115
    %v1117 = vand.u32 %v1116, 4294901760
    %v1118 = vsub.f32 %v1116, %v1117
    %v1119 = vand.u32 %v1118, 4294901760
    %1120 = vmatpush1.msra.mxu0 %v1119
    %1121 = vmatprep.subr.mxu0 0.0
    %v1122 = vand.u32 %v956, 4294901760
    %v1123 = vsub.f32 %v956, %v1122
    %v1124 = vand.u32 %v1123, 4294901760
    %v1125 = vsub.f32 %v1123, %v1124
    %v1126 = vand.u32 %v1125, 4294901760
    %1127 = vmatpush1.msra.mxu0 %v1126
    %1128 = vmatprep.subr.mxu0 0.0
    %v1129 = vand.u32 %v957, 4294901760
    %v1130 = vsub.f32 %v957, %v1129
    %v1131 = vand.u32 %v1130, 4294901760
    %v1132 = vsub.f32 %v1130, %v1131
    %v1133 = vand.u32 %v1132, 4294901760
    %1134 = vmatpush1.msra.mxu0 %v1133
    %1135 = vmatprep.subr.mxu0 0.0
    %v1136 = vand.u32 %v958, 4294901760
    %v1137 = vsub.f32 %v958, %v1136
    %v1138 = vand.u32 %v1137, 4294901760
    %v1139 = vsub.f32 %v1137, %v1138
    %v1140 = vand.u32 %v1139, 4294901760
    %1141 = vmatpush1.msra.mxu0 %v1140
    %1142 = vmatprep.subr.mxu0 0.0
    %v1143 = vand.u32 %v959, 4294901760
    %v1144 = vsub.f32 %v959, %v1143
    %v1145 = vand.u32 %v1144, 4294901760
    %v1146 = vsub.f32 %v1144, %v1145
    %v1147 = vand.u32 %v1146, 4294901760
    %1148 = vmatpush1.msra.mxu0 %v1147
    %1149 = vmatprep.subr.mxu0 0.0
    %v1150 = vand.u32 %v960, 4294901760
    %v1151 = vsub.f32 %v960, %v1150
    %v1152 = vand.u32 %v1151, 4294901760
    %v1153 = vsub.f32 %v1151, %v1152
    %v1154 = vand.u32 %v1153, 4294901760
    %1155 = vmatpush1.msra.mxu0 %v1154
    %1156 = vmatprep.subr.mxu0 0.0
    %v1157 = vand.u32 %v961, 4294901760
    %v1158 = vsub.f32 %v961, %v1157
    %v1159 = vand.u32 %v1158, 4294901760
    %v1160 = vsub.f32 %v1158, %v1159
    %v1161 = vand.u32 %v1160, 4294901760
    %1162 = vmatpush1.msra.mxu0 %v1161
    %1163 = vmatprep.subr.mxu0 0.0
    %v1164 = vand.u32 %v962, 4294901760
    %v1165 = vsub.f32 %v962, %v1164
    %v1166 = vand.u32 %v1165, 4294901760
    %v1167 = vsub.f32 %v1165, %v1166
    %v1168 = vand.u32 %v1167, 4294901760
    %1169 = vmatpush1.msra.mxu0 %v1168
    %1170 = vmatprep.subr.mxu0 0.0
    %v1171 = vand.u32 %v963, 4294901760
    %v1172 = vsub.f32 %v963, %v1171
    %v1173 = vand.u32 %v1172, 4294901760
    %v1174 = vsub.f32 %v1172, %v1173
    %v1175 = vand.u32 %v1174, 4294901760
    %1176 = vmatpush1.msra.mxu0 %v1175
    %1177 = vmatprep.subr.mxu0 0.0
    %v1178 = vand.u32 %v964, 4294901760
    %v1179 = vsub.f32 %v964, %v1178
    %v1180 = vand.u32 %v1179, 4294901760
    %v1181 = vsub.f32 %v1179, %v1180
    %v1182 = vand.u32 %v1181, 4294901760
    %1183 = vmatpush1.msra.mxu0 %v1182
    %1184 = vmatprep.subr.mxu0 0.0
    %v1185 = vand.u32 %v965, 4294901760
    %v1186 = vsub.f32 %v965, %v1185
    %v1187 = vand.u32 %v1186, 4294901760
    %v1188 = vsub.f32 %v1186, %v1187
    %v1189 = vand.u32 %v1188, 4294901760
    %1190 = vmatpush1.msra.mxu0 %v1189
    %1191 = vmatprep.subr.mxu0 0.0
    %v1192 = vand.u32 %v966, 4294901760
    %v1193 = vsub.f32 %v966, %v1192
    %v1194 = vand.u32 %v1193, 4294901760
    %v1195 = vsub.f32 %v1193, %v1194
    %v1196 = vand.u32 %v1195, 4294901760
    %1197 = vmatpush1.msra.mxu0 %v1196
    %1198 = vmatprep.subr.mxu0 0.0
    %v1199 = vand.u32 %v967, 4294901760
    %v1200 = vsub.f32 %v967, %v1199
    %v1201 = vand.u32 %v1200, 4294901760
    %v1202 = vsub.f32 %v1200, %v1201
    %v1203 = vand.u32 %v1202, 4294901760
    %1204 = vmatpush1.msra.mxu0 %v1203
    %1205 = vmatprep.subr.mxu0 0.0
    %v1206 = vand.u32 %v968, 4294901760
    %v1207 = vsub.f32 %v968, %v1206
    %v1208 = vand.u32 %v1207, 4294901760
    %v1209 = vsub.f32 %v1207, %v1208
    %v1210 = vand.u32 %v1209, 4294901760
    %1211 = vmatpush1.msra.mxu0 %v1210
    %1212 = vmatprep.subr.mxu0 0.0
    %v1213 = vand.u32 %v969, 4294901760
    %v1214 = vsub.f32 %v969, %v1213
    %v1215 = vand.u32 %v1214, 4294901760
    %v1216 = vsub.f32 %v1214, %v1215
    %v1217 = vand.u32 %v1216, 4294901760
    %1218 = vmatpush1.msra.mxu0 %v1217
    %1219 = vmatprep.subr.mxu0 0.0
    %v1220 = vand.u32 %v970, 4294901760
    %v1221 = vsub.f32 %v970, %v1220
    %v1222 = vand.u32 %v1221, 4294901760
    %v1223 = vsub.f32 %v1221, %v1222
    %v1224 = vand.u32 %v1223, 4294901760
    %1225 = vmatpush1.msra.mxu0 %v1224
    %1226 = vmatprep.subr.mxu0 0.0
    %v1227 = vand.u32 %v971, 4294901760
    %v1228 = vsub.f32 %v971, %v1227
    %v1229 = vand.u32 %v1228, 4294901760
    %v1230 = vsub.f32 %v1228, %v1229
    %v1231 = vand.u32 %v1230, 4294901760
    %1232 = vmatpush1.msra.mxu0 %v1231
    %1233 = vmatprep.subr.mxu0 0.0
    %v1234 = vand.u32 %v972, 4294901760
    %v1235 = vsub.f32 %v972, %v1234
    %v1236 = vand.u32 %v1235, 4294901760
    %v1237 = vsub.f32 %v1235, %v1236
    %v1238 = vand.u32 %v1237, 4294901760
    %1239 = vmatpush1.msra.mxu0 %v1238
    %1240 = vmatprep.subr.mxu0 0.0
    %v1241 = vand.u32 %v973, 4294901760
    %v1242 = vsub.f32 %v973, %v1241
    %v1243 = vand.u32 %v1242, 4294901760
    %v1244 = vsub.f32 %v1242, %v1243
    %v1245 = vand.u32 %v1244, 4294901760
    %1246 = vmatpush1.msra.mxu0 %v1245
    %1247 = vmatprep.subr.mxu0 0.0
    %v1248 = vand.u32 %v974, 4294901760
    %v1249 = vsub.f32 %v974, %v1248
    %v1250 = vand.u32 %v1249, 4294901760
    %v1251 = vsub.f32 %v1249, %v1250
    %v1252 = vand.u32 %v1251, 4294901760
    %1253 = vmatpush1.msra.mxu0 %v1252
    %1254 = vmatprep.subr.mxu0 0.0
    %v1255 = vand.u32 %v975, 4294901760
    %v1256 = vsub.f32 %v975, %v1255
    %v1257 = vand.u32 %v1256, 4294901760
    %v1258 = vsub.f32 %v1256, %v1257
    %v1259 = vand.u32 %v1258, 4294901760
    %1260 = vmatpush1.msra.mxu0 %v1259
    %1261 = vmatprep.subr.mxu0 0.0
    %v1262 = vand.u32 %v976, 4294901760
    %v1263 = vsub.f32 %v976, %v1262
    %v1264 = vand.u32 %v1263, 4294901760
    %v1265 = vsub.f32 %v1263, %v1264
    %v1266 = vand.u32 %v1265, 4294901760
    %1267 = vmatpush1.msra.mxu0 %v1266
    %1268 = vmatprep.subr.mxu0 0.0
    %v1269 = vand.u32 %v977, 4294901760
    %v1270 = vsub.f32 %v977, %v1269
    %v1271 = vand.u32 %v1270, 4294901760
    %v1272 = vsub.f32 %v1270, %v1271
    %v1273 = vand.u32 %v1272, 4294901760
    %1274 = vmatpush1.msra.mxu0 %v1273
    %1275 = vmatprep.subr.mxu0 0.0
    %v1276 = vand.u32 %v978, 4294901760
    %v1277 = vsub.f32 %v978, %v1276
    %v1278 = vand.u32 %v1277, 4294901760
    %v1279 = vsub.f32 %v1277, %v1278
    %v1280 = vand.u32 %v1279, 4294901760
    %1281 = vmatpush1.msra.mxu0 %v1280
    %1282 = vmatprep.subr.mxu0 0.0
    %v1283 = vand.u32 %v979, 4294901760
    %v1284 = vsub.f32 %v979, %v1283
    %v1285 = vand.u32 %v1284, 4294901760
    %v1286 = vsub.f32 %v1284, %v1285
    %v1287 = vand.u32 %v1286, 4294901760
    %1288 = vmatpush1.msra.mxu0 %v1287
    %1289 = vmatprep.subr.mxu0 0.0
    %v1290 = vand.u32 %v980, 4294901760
    %v1291 = vsub.f32 %v980, %v1290
    %v1292 = vand.u32 %v1291, 4294901760
    %v1293 = vsub.f32 %v1291, %v1292
    %v1294 = vand.u32 %v1293, 4294901760
    %1295 = vmatpush1.msra.mxu0 %v1294
    %1296 = vmatprep.subr.mxu0 0.0
    %v1297 = vand.u32 %v981, 4294901760
    %v1298 = vsub.f32 %v981, %v1297
    %v1299 = vand.u32 %v1298, 4294901760
    %v1300 = vsub.f32 %v1298, %v1299
    %v1301 = vand.u32 %v1300, 4294901760
    %1302 = vmatpush1.msra.mxu0 %v1301
    %1303 = vmatprep.subr.mxu0 0.0
    %v1304 = vand.u32 %v982, 4294901760
    %v1305 = vsub.f32 %v982, %v1304
    %v1306 = vand.u32 %v1305, 4294901760
    %v1307 = vsub.f32 %v1305, %v1306
    %v1308 = vand.u32 %v1307, 4294901760
    %1309 = vmatpush1.msra.mxu0 %v1308
    %1310 = vmatprep.subr.mxu0 0.0
    %v1311 = vand.u32 %v983, 4294901760
    %v1312 = vsub.f32 %v983, %v1311
    %v1313 = vand.u32 %v1312, 4294901760
    %v1314 = vsub.f32 %v1312, %v1313
    %v1315 = vand.u32 %v1314, 4294901760
    %1316 = vmatpush1.msra.mxu0 %v1315
    %1317 = vmatprep.subr.mxu0 0.0
    %v1318 = vand.u32 %v984, 4294901760
    %v1319 = vsub.f32 %v984, %v1318
    %v1320 = vand.u32 %v1319, 4294901760
    %v1321 = vsub.f32 %v1319, %v1320
    %v1322 = vand.u32 %v1321, 4294901760
    %1323 = vmatpush1.msra.mxu0 %v1322
    %1324 = vmatprep.subr.mxu0 0.0
    %v1325 = vand.u32 %v985, 4294901760
    %v1326 = vsub.f32 %v985, %v1325
    %v1327 = vand.u32 %v1326, 4294901760
    %v1328 = vsub.f32 %v1326, %v1327
    %v1329 = vand.u32 %v1328, 4294901760
    %1330 = vmatpush1.msra.mxu0 %v1329
    %1331 = vmatprep.subr.mxu0 0.0
    %v1332 = vand.u32 %v986, 4294901760
    %v1333 = vsub.f32 %v986, %v1332
    %v1334 = vand.u32 %v1333, 4294901760
    %v1335 = vsub.f32 %v1333, %v1334
    %v1336 = vand.u32 %v1335, 4294901760
    %1337 = vmatpush1.msra.mxu0 %v1336
    %v1338 = vand.u32 %v952, 4294901760
    %1339 = vmatprep.mubr.f32.mxu0 %v1338
    %v1340 = vand.u32 %v951, 4294901760
    %1341 = vmatmul.mubr.f32.gmra.mrb[0].mxu0 %v1340
    %v1342 = vpop.f32.mrb[0].mxu0
    %v1343 = vadd.f32 %v1096, %v1342
    %v1344 = vpop.f32.mrb[0].mxu0
    %v1345 = vand.u32 %v954, 4294901760
    %1346 = vmatprep.mubr.f32.mxu0 %v1345
    %v1347 = vand.u32 %v953, 4294901760
    %1348 = vmatmul.mubr.f32.gmra.mrb[0].mxu0 %v1347
    %v1349 = vpop.f32.mrb[0].mxu0
    %v1350 = vadd.f32 %v1111, %v1349
    %v1351 = vpop.f32.mrb[0].mxu0
    %1352 = vdwg.mxu0
    %1353 = vmatprep.subr.mxu0 0.0
    %v1354 = vand.u32 %v955, 4294901760
    %v1355 = vsub.f32 %v955, %v1354
    %1356 = vmatpush1.msra.mxu0 %v1355
    %1357 = vmatprep.subr.mxu0 0.0
    %v1358 = vand.u32 %v956, 4294901760
    %v1359 = vsub.f32 %v956, %v1358
    %1360 = vmatpush1.msra.mxu0 %v1359
    %1361 = vmatprep.subr.mxu0 0.0
    %v1362 = vand.u32 %v957, 4294901760
    %v1363 = vsub.f32 %v957, %v1362
    %1364 = vmatpush1.msra.mxu0 %v1363
    %1365 = vmatprep.subr.mxu0 0.0
    %v1366 = vand.u32 %v958, 4294901760
    %v1367 = vsub.f32 %v958, %v1366
    %1368 = vmatpush1.msra.mxu0 %v1367
    %1369 = vmatprep.subr.mxu0 0.0
    %v1370 = vand.u32 %v959, 4294901760
    %v1371 = vsub.f32 %v959, %v1370
    %1372 = vmatpush1.msra.mxu0 %v1371
    %1373 = vmatprep.subr.mxu0 0.0
    %v1374 = vand.u32 %v960, 4294901760
    %v1375 = vsub.f32 %v960, %v1374
    %1376 = vmatpush1.msra.mxu0 %v1375
    %1377 = vmatprep.subr.mxu0 0.0
    %v1378 = vand.u32 %v961, 4294901760
    %v1379 = vsub.f32 %v961, %v1378
    %1380 = vmatpush1.msra.mxu0 %v1379
    %1381 = vmatprep.subr.mxu0 0.0
    %v1382 = vand.u32 %v962, 4294901760
    %v1383 = vsub.f32 %v962, %v1382
    %1384 = vmatpush1.msra.mxu0 %v1383
    %1385 = vmatprep.subr.mxu0 0.0
    %v1386 = vand.u32 %v963, 4294901760
    %v1387 = vsub.f32 %v963, %v1386
    %1388 = vmatpush1.msra.mxu0 %v1387
    %1389 = vmatprep.subr.mxu0 0.0
    %v1390 = vand.u32 %v964, 4294901760
    %v1391 = vsub.f32 %v964, %v1390
    %1392 = vmatpush1.msra.mxu0 %v1391
    %1393 = vmatprep.subr.mxu0 0.0
    %v1394 = vand.u32 %v965, 4294901760
    %v1395 = vsub.f32 %v965, %v1394
    %1396 = vmatpush1.msra.mxu0 %v1395
    %1397 = vmatprep.subr.mxu0 0.0
    %v1398 = vand.u32 %v966, 4294901760
    %v1399 = vsub.f32 %v966, %v1398
    %1400 = vmatpush1.msra.mxu0 %v1399
    %1401 = vmatprep.subr.mxu0 0.0
    %v1402 = vand.u32 %v967, 4294901760
    %v1403 = vsub.f32 %v967, %v1402
    %1404 = vmatpush1.msra.mxu0 %v1403
    %1405 = vmatprep.subr.mxu0 0.0
    %v1406 = vand.u32 %v968, 4294901760
    %v1407 = vsub.f32 %v968, %v1406
    %1408 = vmatpush1.msra.mxu0 %v1407
    %1409 = vmatprep.subr.mxu0 0.0
    %v1410 = vand.u32 %v969, 4294901760
    %v1411 = vsub.f32 %v969, %v1410
    %1412 = vmatpush1.msra.mxu0 %v1411
    %1413 = vmatprep.subr.mxu0 0.0
    %v1414 = vand.u32 %v970, 4294901760
    %v1415 = vsub.f32 %v970, %v1414
    %1416 = vmatpush1.msra.mxu0 %v1415
    %1417 = vmatprep.subr.mxu0 0.0
    %v1418 = vand.u32 %v971, 4294901760
    %v1419 = vsub.f32 %v971, %v1418
    %1420 = vmatpush1.msra.mxu0 %v1419
    %1421 = vmatprep.subr.mxu0 0.0
    %v1422 = vand.u32 %v972, 4294901760
    %v1423 = vsub.f32 %v972, %v1422
    %1424 = vmatpush1.msra.mxu0 %v1423
    %1425 = vmatprep.subr.mxu0 0.0
    %v1426 = vand.u32 %v973, 4294901760
    %v1427 = vsub.f32 %v973, %v1426
    %1428 = vmatpush1.msra.mxu0 %v1427
    %1429 = vmatprep.subr.mxu0 0.0
    %v1430 = vand.u32 %v974, 4294901760
    %v1431 = vsub.f32 %v974, %v1430
    %1432 = vmatpush1.msra.mxu0 %v1431
    %1433 = vmatprep.subr.mxu0 0.0
    %v1434 = vand.u32 %v975, 4294901760
    %v1435 = vsub.f32 %v975, %v1434
    %1436 = vmatpush1.msra.mxu0 %v1435
    %1437 = vmatprep.subr.mxu0 0.0
    %v1438 = vand.u32 %v976, 4294901760
    %v1439 = vsub.f32 %v976, %v1438
    %1440 = vmatpush1.msra.mxu0 %v1439
    %1441 = vmatprep.subr.mxu0 0.0
    %v1442 = vand.u32 %v977, 4294901760
    %v1443 = vsub.f32 %v977, %v1442
    %1444 = vmatpush1.msra.mxu0 %v1443
    %1445 = vmatprep.subr.mxu0 0.0
    %v1446 = vand.u32 %v978, 4294901760
    %v1447 = vsub.f32 %v978, %v1446
    %1448 = vmatpush1.msra.mxu0 %v1447
    %1449 = vmatprep.subr.mxu0 0.0
    %v1450 = vand.u32 %v979, 4294901760
    %v1451 = vsub.f32 %v979, %v1450
    %1452 = vmatpush1.msra.mxu0 %v1451
    %1453 = vmatprep.subr.mxu0 0.0
    %v1454 = vand.u32 %v980, 4294901760
    %v1455 = vsub.f32 %v980, %v1454
    %1456 = vmatpush1.msra.mxu0 %v1455
    %1457 = vmatprep.subr.mxu0 0.0
    %v1458 = vand.u32 %v981, 4294901760
    %v1459 = vsub.f32 %v981, %v1458
    %1460 = vmatpush1.msra.mxu0 %v1459
    %1461 = vmatprep.subr.mxu0 0.0
    %v1462 = vand.u32 %v982, 4294901760
    %v1463 = vsub.f32 %v982, %v1462
    %1464 = vmatpush1.msra.mxu0 %v1463
    %1465 = vmatprep.subr.mxu0 0.0
    %v1466 = vand.u32 %v983, 4294901760
    %v1467 = vsub.f32 %v983, %v1466
    %1468 = vmatpush1.msra.mxu0 %v1467
    %1469 = vmatprep.subr.mxu0 0.0
    %v1470 = vand.u32 %v984, 4294901760
    %v1471 = vsub.f32 %v984, %v1470
    %1472 = vmatpush1.msra.mxu0 %v1471
    %1473 = vmatprep.subr.mxu0 0.0
    %v1474 = vand.u32 %v985, 4294901760
    %v1475 = vsub.f32 %v985, %v1474
    %1476 = vmatpush1.msra.mxu0 %v1475
    %1477 = vmatprep.subr.mxu0 0.0
    %v1478 = vand.u32 %v986, 4294901760
    %v1479 = vsub.f32 %v986, %v1478
    %1480 = vmatpush1.msra.mxu0 %v1479
    %v1481 = vand.u32 %v952, 4294901760
    %v1482 = vsub.f32 %v952, %v1481
    %1483 = vmatprep.mubr.f32.mxu0 %v1482
    %v1484 = vand.u32 %v951, 4294901760
    %v1485 = vsub.f32 %v951, %v1484
    %1486 = vmatmul.mubr.f32.gmra.mrb[0].mxu0 %v1485
    %v1487 = vpop.f32.mrb[0].mxu0
    %v1488 = vadd.f32 %v1343, %v1487
    %v1489 = vpop.f32.mrb[0].mxu0
    %v1490 = vand.u32 %v954, 4294901760
    %v1491 = vsub.f32 %v954, %v1490
    %1492 = vmatprep.mubr.f32.mxu0 %v1491
    %v1493 = vand.u32 %v953, 4294901760
    %v1494 = vsub.f32 %v953, %v1493
    %1495 = vmatmul.mubr.f32.gmra.mrb[0].mxu0 %v1494
    %v1496 = vpop.f32.mrb[0].mxu0
    %v1497 = vadd.f32 %v1350, %v1496
    %v1498 = vpop.f32.mrb[0].mxu0
    %1499 = vdwg.mxu0
    %1500 = vmatprep.subr.mxu0 0.0
    %v1501 = vand.u32 %v955, 4294901760
    %1502 = vmatpush1.msra.mxu0 %v1501
    %1503 = vmatprep.subr.mxu0 0.0
    %v1504 = vand.u32 %v956, 4294901760
    %1505 = vmatpush1.msra.mxu0 %v1504
    %1506 = vmatprep.subr.mxu0 0.0
    %v1507 = vand.u32 %v957, 4294901760
    %1508 = vmatpush1.msra.mxu0 %v1507
    %1509 = vmatprep.subr.mxu0 0.0
    %v1510 = vand.u32 %v958, 4294901760
    %1511 = vmatpush1.msra.mxu0 %v1510
    %1512 = vmatprep.subr.mxu0 0.0
    %v1513 = vand.u32 %v959, 4294901760
    %1514 = vmatpush1.msra.mxu0 %v1513
    %1515 = vmatprep.subr.mxu0 0.0
    %v1516 = vand.u32 %v960, 4294901760
    %1517 = vmatpush1.msra.mxu0 %v1516
    %1518 = vmatprep.subr.mxu0 0.0
    %v1519 = vand.u32 %v961, 4294901760
    %1520 = vmatpush1.msra.mxu0 %v1519
    %1521 = vmatprep.subr.mxu0 0.0
    %v1522 = vand.u32 %v962, 4294901760
    %1523 = vmatpush1.msra.mxu0 %v1522
    %1524 = vmatprep.subr.mxu0 0.0
    %v1525 = vand.u32 %v963, 4294901760
    %1526 = vmatpush1.msra.mxu0 %v1525
    %1527 = vmatprep.subr.mxu0 0.0
    %v1528 = vand.u32 %v964, 4294901760
    %1529 = vmatpush1.msra.mxu0 %v1528
    %1530 = vmatprep.subr.mxu0 0.0
    %v1531 = vand.u32 %v965, 4294901760
    %1532 = vmatpush1.msra.mxu0 %v1531
    %1533 = vmatprep.subr.mxu0 0.0
    %v1534 = vand.u32 %v966, 4294901760
    %1535 = vmatpush1.msra.mxu0 %v1534
    %1536 = vmatprep.subr.mxu0 0.0
    %v1537 = vand.u32 %v967, 4294901760
    %1538 = vmatpush1.msra.mxu0 %v1537
    %1539 = vmatprep.subr.mxu0 0.0
    %v1540 = vand.u32 %v968, 4294901760
    %1541 = vmatpush1.msra.mxu0 %v1540
    %1542 = vmatprep.subr.mxu0 0.0
    %v1543 = vand.u32 %v969, 4294901760
    %1544 = vmatpush1.msra.mxu0 %v1543
    %1545 = vmatprep.subr.mxu0 0.0
    %v1546 = vand.u32 %v970, 4294901760
    %1547 = vmatpush1.msra.mxu0 %v1546
    %1548 = vmatprep.subr.mxu0 0.0
    %v1549 = vand.u32 %v971, 4294901760
    %1550 = vmatpush1.msra.mxu0 %v1549
    %1551 = vmatprep.subr.mxu0 0.0
    %v1552 = vand.u32 %v972, 4294901760
    %1553 = vmatpush1.msra.mxu0 %v1552
    %1554 = vmatprep.subr.mxu0 0.0
    %v1555 = vand.u32 %v973, 4294901760
    %1556 = vmatpush1.msra.mxu0 %v1555
    %1557 = vmatprep.subr.mxu0 0.0
    %v1558 = vand.u32 %v974, 4294901760
    %1559 = vmatpush1.msra.mxu0 %v1558
    %1560 = vmatprep.subr.mxu0 0.0
    %v1561 = vand.u32 %v975, 4294901760
    %1562 = vmatpush1.msra.mxu0 %v1561
    %1563 = vmatprep.subr.mxu0 0.0
    %v1564 = vand.u32 %v976, 4294901760
    %1565 = vmatpush1.msra.mxu0 %v1564
    %1566 = vmatprep.subr.mxu0 0.0
    %v1567 = vand.u32 %v977, 4294901760
    %1568 = vmatpush1.msra.mxu0 %v1567
    %1569 = vmatprep.subr.mxu0 0.0
    %v1570 = vand.u32 %v978, 4294901760
    %1571 = vmatpush1.msra.mxu0 %v1570
    %1572 = vmatprep.subr.mxu0 0.0
    %v1573 = vand.u32 %v979, 4294901760
    %1574 = vmatpush1.msra.mxu0 %v1573
    %1575 = vmatprep.subr.mxu0 0.0
    %v1576 = vand.u32 %v980, 4294901760
    %1577 = vmatpush1.msra.mxu0 %v1576
    %1578 = vmatprep.subr.mxu0 0.0
    %v1579 = vand.u32 %v981, 4294901760
    %1580 = vmatpush1.msra.mxu0 %v1579
    %1581 = vmatprep.subr.mxu0 0.0
    %v1582 = vand.u32 %v982, 4294901760
    %1583 = vmatpush1.msra.mxu0 %v1582
    %1584 = vmatprep.subr.mxu0 0.0
    %v1585 = vand.u32 %v983, 4294901760
    %1586 = vmatpush1.msra.mxu0 %v1585
    %1587 = vmatprep.subr.mxu0 0.0
    %v1588 = vand.u32 %v984, 4294901760
    %1589 = vmatpush1.msra.mxu0 %v1588
    %1590 = vmatprep.subr.mxu0 0.0
    %v1591 = vand.u32 %v985, 4294901760
    %1592 = vmatpush1.msra.mxu0 %v1591
    %1593 = vmatprep.subr.mxu0 0.0
    %v1594 = vand.u32 %v986, 4294901760
    %1595 = vmatpush1.msra.mxu0 %v1594
    %v1596 = vand.u32 %v952, 4294901760
    %v1597 = vsub.f32 %v952, %v1596
    %v1598 = vand.u32 %v1597, 4294901760
    %1599 = vmatprep.mubr.f32.mxu0 %v1598
    %v1600 = vand.u32 %v951, 4294901760
    %v1601 = vsub.f32 %v951, %v1600
    %v1602 = vand.u32 %v1601, 4294901760
    %1603 = vmatmul.mubr.f32.gmra.mrb[0].mxu0 %v1602
    %v1604 = vpop.f32.mrb[0].mxu0
    %v1605 = vadd.f32 %v1488, %v1604
    %v1606 = vpop.f32.mrb[0].mxu0
    %v1607 = vand.u32 %v954, 4294901760
    %v1608 = vsub.f32 %v954, %v1607
    %v1609 = vand.u32 %v1608, 4294901760
    %1610 = vmatprep.mubr.f32.mxu0 %v1609
    %v1611 = vand.u32 %v953, 4294901760
    %v1612 = vsub.f32 %v953, %v1611
    %v1613 = vand.u32 %v1612, 4294901760
    %1614 = vmatmul.mubr.f32.gmra.mrb[0].mxu0 %v1613
    %v1615 = vpop.f32.mrb[0].mxu0
    %v1616 = vadd.f32 %v1497, %v1615
    %v1617 = vpop.f32.mrb[0].mxu0
    %1618 = vdwg.mxu0
    %1619 = vmatprep.subr.mxu0 0.0
    %v1620 = vand.u32 %v955, 4294901760
    %v1621 = vsub.f32 %v955, %v1620
    %v1622 = vand.u32 %v1621, 4294901760
    %1623 = vmatpush1.msra.mxu0 %v1622
    %1624 = vmatprep.subr.mxu0 0.0
    %v1625 = vand.u32 %v956, 4294901760
    %v1626 = vsub.f32 %v956, %v1625
    %v1627 = vand.u32 %v1626, 4294901760
    %1628 = vmatpush1.msra.mxu0 %v1627
    %1629 = vmatprep.subr.mxu0 0.0
    %v1630 = vand.u32 %v957, 4294901760
    %v1631 = vsub.f32 %v957, %v1630
    %v1632 = vand.u32 %v1631, 4294901760
    %1633 = vmatpush1.msra.mxu0 %v1632
    %1634 = vmatprep.subr.mxu0 0.0
    %v1635 = vand.u32 %v958, 4294901760
    %v1636 = vsub.f32 %v958, %v1635
    %v1637 = vand.u32 %v1636, 4294901760
    %1638 = vmatpush1.msra.mxu0 %v1637
    %1639 = vmatprep.subr.mxu0 0.0
    %v1640 = vand.u32 %v959, 4294901760
    %v1641 = vsub.f32 %v959, %v1640
    %v1642 = vand.u32 %v1641, 4294901760
    %1643 = vmatpush1.msra.mxu0 %v1642
    %1644 = vmatprep.subr.mxu0 0.0
    %v1645 = vand.u32 %v960, 4294901760
    %v1646 = vsub.f32 %v960, %v1645
    %v1647 = vand.u32 %v1646, 4294901760
    %1648 = vmatpush1.msra.mxu0 %v1647
    %1649 = vmatprep.subr.mxu0 0.0
    %v1650 = vand.u32 %v961, 4294901760
    %v1651 = vsub.f32 %v961, %v1650
    %v1652 = vand.u32 %v1651, 4294901760
    %1653 = vmatpush1.msra.mxu0 %v1652
    %1654 = vmatprep.subr.mxu0 0.0
    %v1655 = vand.u32 %v962, 4294901760
    %v1656 = vsub.f32 %v962, %v1655
    %v1657 = vand.u32 %v1656, 4294901760
    %1658 = vmatpush1.msra.mxu0 %v1657
    %1659 = vmatprep.subr.mxu0 0.0
    %v1660 = vand.u32 %v963, 4294901760
    %v1661 = vsub.f32 %v963, %v1660
    %v1662 = vand.u32 %v1661, 4294901760
    %1663 = vmatpush1.msra.mxu0 %v1662
    %1664 = vmatprep.subr.mxu0 0.0
    %v1665 = vand.u32 %v964, 4294901760
    %v1666 = vsub.f32 %v964, %v1665
    %v1667 = vand.u32 %v1666, 4294901760
    %1668 = vmatpush1.msra.mxu0 %v1667
    %1669 = vmatprep.subr.mxu0 0.0
    %v1670 = vand.u32 %v965, 4294901760
    %v1671 = vsub.f32 %v965, %v1670
    %v1672 = vand.u32 %v1671, 4294901760
    %1673 = vmatpush1.msra.mxu0 %v1672
    %1674 = vmatprep.subr.mxu0 0.0
    %v1675 = vand.u32 %v966, 4294901760
    %v1676 = vsub.f32 %v966, %v1675
    %v1677 = vand.u32 %v1676, 4294901760
    %1678 = vmatpush1.msra.mxu0 %v1677
    %1679 = vmatprep.subr.mxu0 0.0
    %v1680 = vand.u32 %v967, 4294901760
    %v1681 = vsub.f32 %v967, %v1680
    %v1682 = vand.u32 %v1681, 4294901760
    %1683 = vmatpush1.msra.mxu0 %v1682
    %1684 = vmatprep.subr.mxu0 0.0
    %v1685 = vand.u32 %v968, 4294901760
    %v1686 = vsub.f32 %v968, %v1685
    %v1687 = vand.u32 %v1686, 4294901760
    %1688 = vmatpush1.msra.mxu0 %v1687
    %1689 = vmatprep.subr.mxu0 0.0
    %v1690 = vand.u32 %v969, 4294901760
    %v1691 = vsub.f32 %v969, %v1690
    %v1692 = vand.u32 %v1691, 4294901760
    %1693 = vmatpush1.msra.mxu0 %v1692
    %1694 = vmatprep.subr.mxu0 0.0
    %v1695 = vand.u32 %v970, 4294901760
    %v1696 = vsub.f32 %v970, %v1695
    %v1697 = vand.u32 %v1696, 4294901760
    %1698 = vmatpush1.msra.mxu0 %v1697
    %1699 = vmatprep.subr.mxu0 0.0
    %v1700 = vand.u32 %v971, 4294901760
    %v1701 = vsub.f32 %v971, %v1700
    %v1702 = vand.u32 %v1701, 4294901760
    %1703 = vmatpush1.msra.mxu0 %v1702
    %1704 = vmatprep.subr.mxu0 0.0
    %v1705 = vand.u32 %v972, 4294901760
    %v1706 = vsub.f32 %v972, %v1705
    %v1707 = vand.u32 %v1706, 4294901760
    %1708 = vmatpush1.msra.mxu0 %v1707
    %1709 = vmatprep.subr.mxu0 0.0
    %v1710 = vand.u32 %v973, 4294901760
    %v1711 = vsub.f32 %v973, %v1710
    %v1712 = vand.u32 %v1711, 4294901760
    %1713 = vmatpush1.msra.mxu0 %v1712
    %1714 = vmatprep.subr.mxu0 0.0
    %v1715 = vand.u32 %v974, 4294901760
    %v1716 = vsub.f32 %v974, %v1715
    %v1717 = vand.u32 %v1716, 4294901760
    %1718 = vmatpush1.msra.mxu0 %v1717
    %1719 = vmatprep.subr.mxu0 0.0
    %v1720 = vand.u32 %v975, 4294901760
    %v1721 = vsub.f32 %v975, %v1720
    %v1722 = vand.u32 %v1721, 4294901760
    %1723 = vmatpush1.msra.mxu0 %v1722
    %1724 = vmatprep.subr.mxu0 0.0
    %v1725 = vand.u32 %v976, 4294901760
    %v1726 = vsub.f32 %v976, %v1725
    %v1727 = vand.u32 %v1726, 4294901760
    %1728 = vmatpush1.msra.mxu0 %v1727
    %1729 = vmatprep.subr.mxu0 0.0
    %v1730 = vand.u32 %v977, 4294901760
    %v1731 = vsub.f32 %v977, %v1730
    %v1732 = vand.u32 %v1731, 4294901760
    %1733 = vmatpush1.msra.mxu0 %v1732
    %1734 = vmatprep.subr.mxu0 0.0
    %v1735 = vand.u32 %v978, 4294901760
    %v1736 = vsub.f32 %v978, %v1735
    %v1737 = vand.u32 %v1736, 4294901760
    %1738 = vmatpush1.msra.mxu0 %v1737
    %1739 = vmatprep.subr.mxu0 0.0
    %v1740 = vand.u32 %v979, 4294901760
    %v1741 = vsub.f32 %v979, %v1740
    %v1742 = vand.u32 %v1741, 4294901760
    %1743 = vmatpush1.msra.mxu0 %v1742
    %1744 = vmatprep.subr.mxu0 0.0
    %v1745 = vand.u32 %v980, 4294901760
    %v1746 = vsub.f32 %v980, %v1745
    %v1747 = vand.u32 %v1746, 4294901760
    %1748 = vmatpush1.msra.mxu0 %v1747
    %1749 = vmatprep.subr.mxu0 0.0
    %v1750 = vand.u32 %v981, 4294901760
    %v1751 = vsub.f32 %v981, %v1750
    %v1752 = vand.u32 %v1751, 4294901760
    %1753 = vmatpush1.msra.mxu0 %v1752
    %1754 = vmatprep.subr.mxu0 0.0
    %v1755 = vand.u32 %v982, 4294901760
    %v1756 = vsub.f32 %v982, %v1755
    %v1757 = vand.u32 %v1756, 4294901760
    %1758 = vmatpush1.msra.mxu0 %v1757
    %1759 = vmatprep.subr.mxu0 0.0
    %v1760 = vand.u32 %v983, 4294901760
    %v1761 = vsub.f32 %v983, %v1760
    %v1762 = vand.u32 %v1761, 4294901760
    %1763 = vmatpush1.msra.mxu0 %v1762
    %1764 = vmatprep.subr.mxu0 0.0
    %v1765 = vand.u32 %v984, 4294901760
    %v1766 = vsub.f32 %v984, %v1765
    %v1767 = vand.u32 %v1766, 4294901760
    %1768 = vmatpush1.msra.mxu0 %v1767
    %1769 = vmatprep.subr.mxu0 0.0
    %v1770 = vand.u32 %v985, 4294901760
    %v1771 = vsub.f32 %v985, %v1770
    %v1772 = vand.u32 %v1771, 4294901760
    %1773 = vmatpush1.msra.mxu0 %v1772
    %1774 = vmatprep.subr.mxu0 0.0
    %v1775 = vand.u32 %v986, 4294901760
    %v1776 = vsub.f32 %v986, %v1775
    %v1777 = vand.u32 %v1776, 4294901760
    %1778 = vmatpush1.msra.mxu0 %v1777
    %v1779 = vand.u32 %v952, 4294901760
    %1780 = vmatprep.mubr.f32.mxu0 %v1779
    %v1781 = vand.u32 %v951, 4294901760
    %1782 = vmatmul.mubr.f32.gmra.mrb[0].mxu0 %v1781
    %v1783 = vpop.f32.mrb[0].mxu0
    %v1784 = vadd.f32 %v1605, %v1783
    %v1785 = vpop.f32.mrb[0].mxu0
    %v1786 = vand.u32 %v954, 4294901760
    %1787 = vmatprep.mubr.f32.mxu0 %v1786
    %v1788 = vand.u32 %v953, 4294901760
    %1789 = vmatmul.mubr.f32.gmra.mrb[0].mxu0 %v1788
    %v1790 = vpop.f32.mrb[0].mxu0
    %v1791 = vadd.f32 %v1616, %v1790
    %v1792 = vpop.f32.mrb[0].mxu0
    %1793 = vdwg.mxu0
    %1794 = vmatprep.subr.mxu0 0.0
    %v1795 = vand.u32 %v955, 4294901760
    %1796 = vmatpush1.msra.mxu0 %v1795
    %1797 = vmatprep.subr.mxu0 0.0
    %v1798 = vand.u32 %v956, 4294901760
    %1799 = vmatpush1.msra.mxu0 %v1798
    %1800 = vmatprep.subr.mxu0 0.0
    %v1801 = vand.u32 %v957, 4294901760
    %1802 = vmatpush1.msra.mxu0 %v1801
    %1803 = vmatprep.subr.mxu0 0.0
    %v1804 = vand.u32 %v958, 4294901760
    %1805 = vmatpush1.msra.mxu0 %v1804
    %1806 = vmatprep.subr.mxu0 0.0
    %v1807 = vand.u32 %v959, 4294901760
    %1808 = vmatpush1.msra.mxu0 %v1807
    %1809 = vmatprep.subr.mxu0 0.0
    %v1810 = vand.u32 %v960, 4294901760
    %1811 = vmatpush1.msra.mxu0 %v1810
    %1812 = vmatprep.subr.mxu0 0.0
    %v1813 = vand.u32 %v961, 4294901760
    %1814 = vmatpush1.msra.mxu0 %v1813
    %1815 = vmatprep.subr.mxu0 0.0
    %v1816 = vand.u32 %v962, 4294901760
    %1817 = vmatpush1.msra.mxu0 %v1816
    %1818 = vmatprep.subr.mxu0 0.0
    %v1819 = vand.u32 %v963, 4294901760
    %1820 = vmatpush1.msra.mxu0 %v1819
    %1821 = vmatprep.subr.mxu0 0.0
    %v1822 = vand.u32 %v964, 4294901760
    %1823 = vmatpush1.msra.mxu0 %v1822
    %1824 = vmatprep.subr.mxu0 0.0
    %v1825 = vand.u32 %v965, 4294901760
    %1826 = vmatpush1.msra.mxu0 %v1825
    %1827 = vmatprep.subr.mxu0 0.0
    %v1828 = vand.u32 %v966, 4294901760
    %1829 = vmatpush1.msra.mxu0 %v1828
    %1830 = vmatprep.subr.mxu0 0.0
    %v1831 = vand.u32 %v967, 4294901760
    %1832 = vmatpush1.msra.mxu0 %v1831
    %1833 = vmatprep.subr.mxu0 0.0
    %v1834 = vand.u32 %v968, 4294901760
    %1835 = vmatpush1.msra.mxu0 %v1834
    %1836 = vmatprep.subr.mxu0 0.0
    %v1837 = vand.u32 %v969, 4294901760
    %1838 = vmatpush1.msra.mxu0 %v1837
    %1839 = vmatprep.subr.mxu0 0.0
    %v1840 = vand.u32 %v970, 4294901760
    %1841 = vmatpush1.msra.mxu0 %v1840
    %1842 = vmatprep.subr.mxu0 0.0
    %v1843 = vand.u32 %v971, 4294901760
    %1844 = vmatpush1.msra.mxu0 %v1843
    %1845 = vmatprep.subr.mxu0 0.0
    %v1846 = vand.u32 %v972, 4294901760
    %1847 = vmatpush1.msra.mxu0 %v1846
    %1848 = vmatprep.subr.mxu0 0.0
    %v1849 = vand.u32 %v973, 4294901760
    %1850 = vmatpush1.msra.mxu0 %v1849
    %1851 = vmatprep.subr.mxu0 0.0
    %v1852 = vand.u32 %v974, 4294901760
    %1853 = vmatpush1.msra.mxu0 %v1852
    %1854 = vmatprep.subr.mxu0 0.0
    %v1855 = vand.u32 %v975, 4294901760
    %1856 = vmatpush1.msra.mxu0 %v1855
    %1857 = vmatprep.subr.mxu0 0.0
    %v1858 = vand.u32 %v976, 4294901760
    %1859 = vmatpush1.msra.mxu0 %v1858
    %1860 = vmatprep.subr.mxu0 0.0
    %v1861 = vand.u32 %v977, 4294901760
    %1862 = vmatpush1.msra.mxu0 %v1861
    %1863 = vmatprep.subr.mxu0 0.0
    %v1864 = vand.u32 %v978, 4294901760
    %1865 = vmatpush1.msra.mxu0 %v1864
    %1866 = vmatprep.subr.mxu0 0.0
    %v1867 = vand.u32 %v979, 4294901760
    %1868 = vmatpush1.msra.mxu0 %v1867
    %1869 = vmatprep.subr.mxu0 0.0
    %v1870 = vand.u32 %v980, 4294901760
    %1871 = vmatpush1.msra.mxu0 %v1870
    %1872 = vmatprep.subr.mxu0 0.0
    %v1873 = vand.u32 %v981, 4294901760
    %1874 = vmatpush1.msra.mxu0 %v1873
    %1875 = vmatprep.subr.mxu0 0.0
    %v1876 = vand.u32 %v982, 4294901760
    %1877 = vmatpush1.msra.mxu0 %v1876
    %1878 = vmatprep.subr.mxu0 0.0
    %v1879 = vand.u32 %v983, 4294901760
    %1880 = vmatpush1.msra.mxu0 %v1879
    %1881 = vmatprep.subr.mxu0 0.0
    %v1882 = vand.u32 %v984, 4294901760
    %1883 = vmatpush1.msra.mxu0 %v1882
    %1884 = vmatprep.subr.mxu0 0.0
    %v1885 = vand.u32 %v985, 4294901760
    %1886 = vmatpush1.msra.mxu0 %v1885
    %1887 = vmatprep.subr.mxu0 0.0
    %v1888 = vand.u32 %v986, 4294901760
    %1889 = vmatpush1.msra.mxu0 %v1888
    %v1890 = vand.u32 %v952, 4294901760
    %1891 = vmatprep.mubr.f32.mxu0 %v1890
    %v1892 = vand.u32 %v951, 4294901760
    %1893 = vmatmul.mubr.f32.gmra.mrb[0].mxu0 %v1892
    %v1894 = vpop.f32.mrb[0].mxu0
    %v1895 = vadd.f32 %v1784, %v1894
    %v1896 = vpop.f32.mrb[0].mxu0
    %v1897 = vand.u32 %v954, 4294901760
    %1898 = vmatprep.mubr.f32.mxu0 %v1897
    %v1899 = vand.u32 %v953, 4294901760
    %1900 = vmatmul.mubr.f32.gmra.mrb[0].mxu0 %v1899
    %v1901 = vpop.f32.mrb[0].mxu0
    %v1902 = vadd.f32 %v1791, %v1901
    %v1903 = vpop.f32.mrb[0].mxu0
    %1904 = vdwg.mxu0
    %v1905 = vmax.f32 %v1895, %v1902
    %v1906 = vld [vmem:[%s4] sm:$0x1]
    %v1908 = vlaneseq
    %v1909 = vshrl.u32 %v1908, 7
    %v1910 = vsub.s32 0, %v1909
    %v1911 = vrot.slane %v1906, %v1910
    %v1913 = vadd.f32 %v1905, %v1911
    %vm1914 = vcmp.gt.f32.partialorder %v1913, 0.0
    %v1915 = vmul.f32 %v1913, 0.2
    %v1916 = vsel %vm1914, %v1913, %v1915
    %v1918 = vrot.slane %v1916, 1
    %v1920 = vrot.slane %v1916, 2
    %v1922 = vrot.slane %v1916, 3
    %v1924 = vrot.slane %v1918, 3
    %v1925 = vrot.slane %v1920, 3
    %v1926 = vrot.slane %v1922, 3
    %v1930 = vsel %vm881, %v1916, %v1922
    %v1931 = vsel %vm881, %v1918, %v1924
    %v1932 = vsel %vm881, %v1920, %v1925
    %v1933 = vsel %vm881, %v1922, %v1926
    %v1934 = vld [vmem:[#allocation5] sm:$0xff]
    %v1935 = vld [vmem:[#allocation5 + $0x8] sm:$0xff]
    %v1936 = vld [vmem:[#allocation5 + $0x10] sm:$0xff]
    %v1937 = vld [vmem:[#allocation5 + $0x18] sm:$0xff]
    %v1938 = vld [vmem:[#allocation5 + $0x20] sm:$0xff]
    %v1939 = vld [vmem:[#allocation5 + $0x28] sm:$0xff]
    %v1940 = vld [vmem:[#allocation5 + $0x30] sm:$0xff]
    %v1941 = vld [vmem:[#allocation5 + $0x38] sm:$0xff]
    %v1942 = vld [vmem:[#allocation5 + $0x40] sm:$0xff]
    %v1943 = vld [vmem:[#allocation5 + $0x48] sm:$0xff]
    %v1944 = vld [vmem:[#allocation5 + $0x50] sm:$0xff]
    %v1945 = vld [vmem:[#allocation5 + $0x58] sm:$0xff]
    %v1946 = vld [vmem:[#allocation5 + $0x60] sm:$0xff]
    %v1947 = vld [vmem:[#allocation5 + $0x68] sm:$0xff]
    %v1948 = vld [vmem:[#allocation5 + $0x70] sm:$0xff]
    %v1949 = vld [vmem:[#allocation5 + $0x78] sm:$0xff]
    %v1950 = vld [vmem:[#allocation5 + $0x80] sm:$0xff]
    %v1951 = vld [vmem:[#allocation5 + $0x88] sm:$0xff]
    %v1952 = vld [vmem:[#allocation5 + $0x90] sm:$0xff]
    %v1953 = vld [vmem:[#allocation5 + $0x98] sm:$0xff]
    %v1954 = vld [vmem:[#allocation5 + $0xa0] sm:$0xff]
    %v1955 = vld [vmem:[#allocation5 + $0xa8] sm:$0xff]
    %v1956 = vld [vmem:[#allocation5 + $0xb0] sm:$0xff]
    %v1957 = vld [vmem:[#allocation5 + $0xb8] sm:$0xff]
    %v1958 = vld [vmem:[#allocation5 + $0xc0] sm:$0xff]
    %v1959 = vld [vmem:[#allocation5 + $0xc8] sm:$0xff]
    %v1960 = vld [vmem:[#allocation5 + $0xd0] sm:$0xff]
    %v1961 = vld [vmem:[#allocation5 + $0xd8] sm:$0xff]
    %v1962 = vld [vmem:[#allocation5 + $0xe0] sm:$0xff]
    %v1963 = vld [vmem:[#allocation5 + $0xe8] sm:$0xff]
    %v1964 = vld [vmem:[#allocation5 + $0xf0] sm:$0xff]
    %v1965 = vld [vmem:[#allocation5 + $0xf8] sm:$0xff]
    %v1966 = vld [vmem:[#allocation5 + $0x100] sm:$0xff]
    %v1967 = vld [vmem:[#allocation5 + $0x108] sm:$0xff]
    %v1968 = vld [vmem:[#allocation5 + $0x110] sm:$0xff]
    %v1969 = vld [vmem:[#allocation5 + $0x118] sm:$0xff]
    %v1970 = vld [vmem:[#allocation5 + $0x120] sm:$0xff]
    %v1971 = vld [vmem:[#allocation5 + $0x128] sm:$0xff]
    %v1972 = vld [vmem:[#allocation5 + $0x130] sm:$0xff]
    %v1973 = vld [vmem:[#allocation5 + $0x138] sm:$0xff]
    %v1974 = vld [vmem:[#allocation5 + $0x140] sm:$0xff]
    %v1975 = vld [vmem:[#allocation5 + $0x148] sm:$0xff]
    %v1976 = vld [vmem:[#allocation5 + $0x150] sm:$0xff]
    %v1977 = vld [vmem:[#allocation5 + $0x158] sm:$0xff]
    %v1978 = vld [vmem:[#allocation5 + $0x160] sm:$0xff]
    %v1979 = vld [vmem:[#allocation5 + $0x168] sm:$0xff]
    %v1980 = vld [vmem:[#allocation5 + $0x170] sm:$0xff]
    %v1981 = vld [vmem:[#allocation5 + $0x178] sm:$0xff]
    %v1982 = vld [vmem:[#allocation5 + $0x180] sm:$0xff]
    %v1983 = vld [vmem:[#allocation5 + $0x188] sm:$0xff]
    %v1984 = vld [vmem:[#allocation5 + $0x190] sm:$0xff]
    %v1985 = vld [vmem:[#allocation5 + $0x198] sm:$0xff]
    %v1986 = vld [vmem:[#allocation5 + $0x1a0] sm:$0xff]
    %v1987 = vld [vmem:[#allocation5 + $0x1a8] sm:$0xff]
    %v1988 = vld [vmem:[#allocation5 + $0x1b0] sm:$0xff]
    %v1989 = vld [vmem:[#allocation5 + $0x1b8] sm:$0xff]
    %v1990 = vld [vmem:[#allocation5 + $0x1c0] sm:$0xff]
    %v1991 = vld [vmem:[#allocation5 + $0x1c8] sm:$0xff]
    %v1992 = vld [vmem:[#allocation5 + $0x1d0] sm:$0xff]
    %v1993 = vld [vmem:[#allocation5 + $0x1d8] sm:$0xff]
    %v1994 = vld [vmem:[#allocation5 + $0x1e0] sm:$0xff]
    %v1995 = vld [vmem:[#allocation5 + $0x1e8] sm:$0xff]
    %v1996 = vld [vmem:[#allocation5 + $0x1f0] sm:$0xff]
    %v1997 = vld [vmem:[#allocation5 + $0x1f8] sm:$0xff]
    %v1998 = vld [vmem:[%s6] sm:$0x1]
    %v2000 = vlaneseq
    %v2001 = vshrl.u32 %v2000, 7
    %v2002 = vsub.s32 0, %v2001
    %v2003 = vrot.slane %v1998, %v2002
    %2005 = vmatprep.subr.mxu0 0.0
    %v2006 = vand.u32 %v1934, 4294901760
    %2007 = vmatpush1.msra.mxu0 %v2006
    %2008 = vmatprep.subr.mxu0 0.0
    %v2009 = vand.u32 %v1935, 4294901760
    %2010 = vmatpush1.msra.mxu0 %v2009
    %2011 = vmatprep.subr.mxu0 0.0
    %v2012 = vand.u32 %v1936, 4294901760
    %2013 = vmatpush1.msra.mxu0 %v2012
    %2014 = vmatprep.subr.mxu0 0.0
    %v2015 = vand.u32 %v1937, 4294901760
    %2016 = vmatpush1.msra.mxu0 %v2015
    %2017 = vmatprep.subr.mxu0 0.0
    %v2018 = vand.u32 %v1938, 4294901760
    %2019 = vmatpush1.msra.mxu0 %v2018
    %2020 = vmatprep.subr.mxu0 0.0
    %v2021 = vand.u32 %v1939, 4294901760
    %2022 = vmatpush1.msra.mxu0 %v2021
    %2023 = vmatprep.subr.mxu0 0.0
    %v2024 = vand.u32 %v1940, 4294901760
    %2025 = vmatpush1.msra.mxu0 %v2024
    %2026 = vmatprep.subr.mxu0 0.0
    %v2027 = vand.u32 %v1941, 4294901760
    %2028 = vmatpush1.msra.mxu0 %v2027
    %2029 = vmatprep.subr.mxu0 0.0
    %v2030 = vand.u32 %v1942, 4294901760
    %2031 = vmatpush1.msra.mxu0 %v2030
    %2032 = vmatprep.subr.mxu0 0.0
    %v2033 = vand.u32 %v1943, 4294901760
    %2034 = vmatpush1.msra.mxu0 %v2033
    %2035 = vmatprep.subr.mxu0 0.0
    %v2036 = vand.u32 %v1944, 4294901760
    %2037 = vmatpush1.msra.mxu0 %v2036
    %2038 = vmatprep.subr.mxu0 0.0
    %v2039 = vand.u32 %v1945, 4294901760
    %2040 = vmatpush1.msra.mxu0 %v2039
    %2041 = vmatprep.subr.mxu0 0.0
    %v2042 = vand.u32 %v1946, 4294901760
    %2043 = vmatpush1.msra.mxu0 %v2042
    %2044 = vmatprep.subr.mxu0 0.0
    %v2045 = vand.u32 %v1947, 4294901760
    %2046 = vmatpush1.msra.mxu0 %v2045
    %2047 = vmatprep.subr.mxu0 0.0
    %v2048 = vand.u32 %v1948, 4294901760
    %2049 = vmatpush1.msra.mxu0 %v2048
    %2050 = vmatprep.subr.mxu0 0.0
    %v2051 = vand.u32 %v1949, 4294901760
    %2052 = vmatpush1.msra.mxu0 %v2051
    %2053 = vmatprep.subr.mxu0 0.0
    %v2054 = vand.u32 %v1950, 4294901760
    %2055 = vmatpush1.msra.mxu0 %v2054
    %2056 = vmatprep.subr.mxu0 0.0
    %v2057 = vand.u32 %v1951, 4294901760
    %2058 = vmatpush1.msra.mxu0 %v2057
    %2059 = vmatprep.subr.mxu0 0.0
    %v2060 = vand.u32 %v1952, 4294901760
    %2061 = vmatpush1.msra.mxu0 %v2060
    %2062 = vmatprep.subr.mxu0 0.0
    %v2063 = vand.u32 %v1953, 4294901760
    %2064 = vmatpush1.msra.mxu0 %v2063
    %2065 = vmatprep.subr.mxu0 0.0
    %v2066 = vand.u32 %v1954, 4294901760
    %2067 = vmatpush1.msra.mxu0 %v2066
    %2068 = vmatprep.subr.mxu0 0.0
    %v2069 = vand.u32 %v1955, 4294901760
    %2070 = vmatpush1.msra.mxu0 %v2069
    %2071 = vmatprep.subr.mxu0 0.0
    %v2072 = vand.u32 %v1956, 4294901760
    %2073 = vmatpush1.msra.mxu0 %v2072
    %2074 = vmatprep.subr.mxu0 0.0
    %v2075 = vand.u32 %v1957, 4294901760
    %2076 = vmatpush1.msra.mxu0 %v2075
    %2077 = vmatprep.subr.mxu0 0.0
    %v2078 = vand.u32 %v1958, 4294901760
    %2079 = vmatpush1.msra.mxu0 %v2078
    %2080 = vmatprep.subr.mxu0 0.0
    %v2081 = vand.u32 %v1959, 4294901760
    %2082 = vmatpush1.msra.mxu0 %v2081
    %2083 = vmatprep.subr.mxu0 0.0
    %v2084 = vand.u32 %v1960, 4294901760
    %2085 = vmatpush1.msra.mxu0 %v2084
    %2086 = vmatprep.subr.mxu0 0.0
    %v2087 = vand.u32 %v1961, 4294901760
    %2088 = vmatpush1.msra.mxu0 %v2087
    %2089 = vmatprep.subr.mxu0 0.0
    %v2090 = vand.u32 %v1962, 4294901760
    %2091 = vmatpush1.msra.mxu0 %v2090
    %2092 = vmatprep.subr.mxu0 0.0
    %v2093 = vand.u32 %v1963, 4294901760
    %2094 = vmatpush1.msra.mxu0 %v2093
    %2095 = vmatprep.subr.mxu0 0.0
    %v2096 = vand.u32 %v1964, 4294901760
    %2097 = vmatpush1.msra.mxu0 %v2096
    %2098 = vmatprep.subr.mxu0 0.0
    %v2099 = vand.u32 %v1965, 4294901760
    %2100 = vmatpush1.msra.mxu0 %v2099
    %v2101 = vand.u32 %v1931, 4294901760
    %v2102 = vsub.f32 %v1931, %v2101
    %v2103 = vand.u32 %v2102, 4294901760
    %v2104 = vsub.f32 %v2102, %v2103
    %v2105 = vand.u32 %v2104, 4294901760
    %2106 = vmatprep.mubr.f32.mxu0 %v2105
    %v2107 = vand.u32 %v1930, 4294901760
    %v2108 = vsub.f32 %v1930, %v2107
    %v2109 = vand.u32 %v2108, 4294901760
    %v2110 = vsub.f32 %v2108, %v2109
    %v2111 = vand.u32 %v2110, 4294901760
    %2112 = vmatmul.mubr.f32.gmra.mrb[0].mxu0 %v2111
    %v2113 = vpop.f32.mrb[0].mxu0
    %v2114 = vadd.f32 %v2003, %v2113
    %v2115 = vpop.f32.mrb[0].mxu0
    %2116 = vdwg.mxu0
    %2117 = vmatprep.subr.mxu0 0.0
    %v2118 = vand.u32 %v1934, 4294901760
    %v2119 = vsub.f32 %v1934, %v2118
    %v2120 = vand.u32 %v2119, 4294901760
    %v2121 = vsub.f32 %v2119, %v2120
    %v2122 = vand.u32 %v2121, 4294901760
    %2123 = vmatpush1.msra.mxu0 %v2122
    %2124 = vmatprep.subr.mxu0 0.0
    %v2125 = vand.u32 %v1935, 4294901760
    %v2126 = vsub.f32 %v1935, %v2125
    %v2127 = vand.u32 %v2126, 4294901760
    %v2128 = vsub.f32 %v2126, %v2127
    %v2129 = vand.u32 %v2128, 4294901760
    %2130 = vmatpush1.msra.mxu0 %v2129
    %2131 = vmatprep.subr.mxu0 0.0
    %v2132 = vand.u32 %v1936, 4294901760
    %v2133 = vsub.f32 %v1936, %v2132
    %v2134 = vand.u32 %v2133, 4294901760
    %v2135 = vsub.f32 %v2133, %v2134
    %v2136 = vand.u32 %v2135, 4294901760
    %2137 = vmatpush1.msra.mxu0 %v2136
    %2138 = vmatprep.subr.mxu0 0.0
    %v2139 = vand.u32 %v1937, 4294901760
    %v2140 = vsub.f32 %v1937, %v2139
    %v2141 = vand.u32 %v2140, 4294901760
    %v2142 = vsub.f32 %v2140, %v2141
    %v2143 = vand.u32 %v2142, 4294901760
    %2144 = vmatpush1.msra.mxu0 %v2143
    %2145 = vmatprep.subr.mxu0 0.0
    %v2146 = vand.u32 %v1938, 4294901760
    %v2147 = vsub.f32 %v1938, %v2146
    %v2148 = vand.u32 %v2147, 4294901760
    %v2149 = vsub.f32 %v2147, %v2148
    %v2150 = vand.u32 %v2149, 4294901760
    %2151 = vmatpush1.msra.mxu0 %v2150
    %2152 = vmatprep.subr.mxu0 0.0
    %v2153 = vand.u32 %v1939, 4294901760
    %v2154 = vsub.f32 %v1939, %v2153
    %v2155 = vand.u32 %v2154, 4294901760
    %v2156 = vsub.f32 %v2154, %v2155
    %v2157 = vand.u32 %v2156, 4294901760
    %2158 = vmatpush1.msra.mxu0 %v2157
    %2159 = vmatprep.subr.mxu0 0.0
    %v2160 = vand.u32 %v1940, 4294901760
    %v2161 = vsub.f32 %v1940, %v2160
    %v2162 = vand.u32 %v2161, 4294901760
    %v2163 = vsub.f32 %v2161, %v2162
    %v2164 = vand.u32 %v2163, 4294901760
    %2165 = vmatpush1.msra.mxu0 %v2164
    %2166 = vmatprep.subr.mxu0 0.0
    %v2167 = vand.u32 %v1941, 4294901760
    %v2168 = vsub.f32 %v1941, %v2167
    %v2169 = vand.u32 %v2168, 4294901760
    %v2170 = vsub.f32 %v2168, %v2169
    %v2171 = vand.u32 %v2170, 4294901760
    %2172 = vmatpush1.msra.mxu0 %v2171
    %2173 = vmatprep.subr.mxu0 0.0
    %v2174 = vand.u32 %v1942, 4294901760
    %v2175 = vsub.f32 %v1942, %v2174
    %v2176 = vand.u32 %v2175, 4294901760
    %v2177 = vsub.f32 %v2175, %v2176
    %v2178 = vand.u32 %v2177, 4294901760
    %2179 = vmatpush1.msra.mxu0 %v2178
    %2180 = vmatprep.subr.mxu0 0.0
    %v2181 = vand.u32 %v1943, 4294901760
    %v2182 = vsub.f32 %v1943, %v2181
    %v2183 = vand.u32 %v2182, 4294901760
    %v2184 = vsub.f32 %v2182, %v2183
    %v2185 = vand.u32 %v2184, 4294901760
    %2186 = vmatpush1.msra.mxu0 %v2185
    %2187 = vmatprep.subr.mxu0 0.0
    %v2188 = vand.u32 %v1944, 4294901760
    %v2189 = vsub.f32 %v1944, %v2188
    %v2190 = vand.u32 %v2189, 4294901760
    %v2191 = vsub.f32 %v2189, %v2190
    %v2192 = vand.u32 %v2191, 4294901760
    %2193 = vmatpush1.msra.mxu0 %v2192
    %2194 = vmatprep.subr.mxu0 0.0
    %v2195 = vand.u32 %v1945, 4294901760
    %v2196 = vsub.f32 %v1945, %v2195
    %v2197 = vand.u32 %v2196, 4294901760
    %v2198 = vsub.f32 %v2196, %v2197
    %v2199 = vand.u32 %v2198, 4294901760
    %2200 = vmatpush1.msra.mxu0 %v2199
    %2201 = vmatprep.subr.mxu0 0.0
    %v2202 = vand.u32 %v1946, 4294901760
    %v2203 = vsub.f32 %v1946, %v2202
    %v2204 = vand.u32 %v2203, 4294901760
    %v2205 = vsub.f32 %v2203, %v2204
    %v2206 = vand.u32 %v2205, 4294901760
    %2207 = vmatpush1.msra.mxu0 %v2206
    %2208 = vmatprep.subr.mxu0 0.0
    %v2209 = vand.u32 %v1947, 4294901760
    %v2210 = vsub.f32 %v1947, %v2209
    %v2211 = vand.u32 %v2210, 4294901760
    %v2212 = vsub.f32 %v2210, %v2211
    %v2213 = vand.u32 %v2212, 4294901760
    %2214 = vmatpush1.msra.mxu0 %v2213
    %2215 = vmatprep.subr.mxu0 0.0
    %v2216 = vand.u32 %v1948, 4294901760
    %v2217 = vsub.f32 %v1948, %v2216
    %v2218 = vand.u32 %v2217, 4294901760
    %v2219 = vsub.f32 %v2217, %v2218
    %v2220 = vand.u32 %v2219, 4294901760
    %2221 = vmatpush1.msra.mxu0 %v2220
    %2222 = vmatprep.subr.mxu0 0.0
    %v2223 = vand.u32 %v1949, 4294901760
    %v2224 = vsub.f32 %v1949, %v2223
    %v2225 = vand.u32 %v2224, 4294901760
    %v2226 = vsub.f32 %v2224, %v2225
    %v2227 = vand.u32 %v2226, 4294901760
    %2228 = vmatpush1.msra.mxu0 %v2227
    %2229 = vmatprep.subr.mxu0 0.0
    %v2230 = vand.u32 %v1950, 4294901760
    %v2231 = vsub.f32 %v1950, %v2230
    %v2232 = vand.u32 %v2231, 4294901760
    %v2233 = vsub.f32 %v2231, %v2232
    %v2234 = vand.u32 %v2233, 4294901760
    %2235 = vmatpush1.msra.mxu0 %v2234
    %2236 = vmatprep.subr.mxu0 0.0
    %v2237 = vand.u32 %v1951, 4294901760
    %v2238 = vsub.f32 %v1951, %v2237
    %v2239 = vand.u32 %v2238, 4294901760
    %v2240 = vsub.f32 %v2238, %v2239
    %v2241 = vand.u32 %v2240, 4294901760
    %2242 = vmatpush1.msra.mxu0 %v2241
    %2243 = vmatprep.subr.mxu0 0.0
    %v2244 = vand.u32 %v1952, 4294901760
    %v2245 = vsub.f32 %v1952, %v2244
    %v2246 = vand.u32 %v2245, 4294901760
    %v2247 = vsub.f32 %v2245, %v2246
    %v2248 = vand.u32 %v2247, 4294901760
    %2249 = vmatpush1.msra.mxu0 %v2248
    %2250 = vmatprep.subr.mxu0 0.0
    %v2251 = vand.u32 %v1953, 4294901760
    %v2252 = vsub.f32 %v1953, %v2251
    %v2253 = vand.u32 %v2252, 4294901760
    %v2254 = vsub.f32 %v2252, %v2253
    %v2255 = vand.u32 %v2254, 4294901760
    %2256 = vmatpush1.msra.mxu0 %v2255
    %2257 = vmatprep.subr.mxu0 0.0
    %v2258 = vand.u32 %v1954, 4294901760
    %v2259 = vsub.f32 %v1954, %v2258
    %v2260 = vand.u32 %v2259, 4294901760
    %v2261 = vsub.f32 %v2259, %v2260
    %v2262 = vand.u32 %v2261, 4294901760
    %2263 = vmatpush1.msra.mxu0 %v2262
    %2264 = vmatprep.subr.mxu0 0.0
    %v2265 = vand.u32 %v1955, 4294901760
    %v2266 = vsub.f32 %v1955, %v2265
    %v2267 = vand.u32 %v2266, 4294901760
    %v2268 = vsub.f32 %v2266, %v2267
    %v2269 = vand.u32 %v2268, 4294901760
    %2270 = vmatpush1.msra.mxu0 %v2269
    %2271 = vmatprep.subr.mxu0 0.0
    %v2272 = vand.u32 %v1956, 4294901760
    %v2273 = vsub.f32 %v1956, %v2272
    %v2274 = vand.u32 %v2273, 4294901760
    %v2275 = vsub.f32 %v2273, %v2274
    %v2276 = vand.u32 %v2275, 4294901760
    %2277 = vmatpush1.msra.mxu0 %v2276
    %2278 = vmatprep.subr.mxu0 0.0
    %v2279 = vand.u32 %v1957, 4294901760
    %v2280 = vsub.f32 %v1957, %v2279
    %v2281 = vand.u32 %v2280, 4294901760
    %v2282 = vsub.f32 %v2280, %v2281
    %v2283 = vand.u32 %v2282, 4294901760
    %2284 = vmatpush1.msra.mxu0 %v2283
    %2285 = vmatprep.subr.mxu0 0.0
    %v2286 = vand.u32 %v1958, 4294901760
    %v2287 = vsub.f32 %v1958, %v2286
    %v2288 = vand.u32 %v2287, 4294901760
    %v2289 = vsub.f32 %v2287, %v2288
    %v2290 = vand.u32 %v2289, 4294901760
    %2291 = vmatpush1.msra.mxu0 %v2290
    %2292 = vmatprep.subr.mxu0 0.0
    %v2293 = vand.u32 %v1959, 4294901760
    %v2294 = vsub.f32 %v1959, %v2293
    %v2295 = vand.u32 %v2294, 4294901760
    %v2296 = vsub.f32 %v2294, %v2295
    %v2297 = vand.u32 %v2296, 4294901760
    %2298 = vmatpush1.msra.mxu0 %v2297
    %2299 = vmatprep.subr.mxu0 0.0
    %v2300 = vand.u32 %v1960, 4294901760
    %v2301 = vsub.f32 %v1960, %v2300
    %v2302 = vand.u32 %v2301, 4294901760
    %v2303 = vsub.f32 %v2301, %v2302
    %v2304 = vand.u32 %v2303, 4294901760
    %2305 = vmatpush1.msra.mxu0 %v2304
    %2306 = vmatprep.subr.mxu0 0.0
    %v2307 = vand.u32 %v1961, 4294901760
    %v2308 = vsub.f32 %v1961, %v2307
    %v2309 = vand.u32 %v2308, 4294901760
    %v2310 = vsub.f32 %v2308, %v2309
    %v2311 = vand.u32 %v2310, 4294901760
    %2312 = vmatpush1.msra.mxu0 %v2311
    %2313 = vmatprep.subr.mxu0 0.0
    %v2314 = vand.u32 %v1962, 4294901760
    %v2315 = vsub.f32 %v1962, %v2314
    %v2316 = vand.u32 %v2315, 4294901760
    %v2317 = vsub.f32 %v2315, %v2316
    %v2318 = vand.u32 %v2317, 4294901760
    %2319 = vmatpush1.msra.mxu0 %v2318
    %2320 = vmatprep.subr.mxu0 0.0
    %v2321 = vand.u32 %v1963, 4294901760
    %v2322 = vsub.f32 %v1963, %v2321
    %v2323 = vand.u32 %v2322, 4294901760
    %v2324 = vsub.f32 %v2322, %v2323
    %v2325 = vand.u32 %v2324, 4294901760
    %2326 = vmatpush1.msra.mxu0 %v2325
    %2327 = vmatprep.subr.mxu0 0.0
    %v2328 = vand.u32 %v1964, 4294901760
    %v2329 = vsub.f32 %v1964, %v2328
    %v2330 = vand.u32 %v2329, 4294901760
    %v2331 = vsub.f32 %v2329, %v2330
    %v2332 = vand.u32 %v2331, 4294901760
    %2333 = vmatpush1.msra.mxu0 %v2332
    %2334 = vmatprep.subr.mxu0 0.0
    %v2335 = vand.u32 %v1965, 4294901760
    %v2336 = vsub.f32 %v1965, %v2335
    %v2337 = vand.u32 %v2336, 4294901760
    %v2338 = vsub.f32 %v2336, %v2337
    %v2339 = vand.u32 %v2338, 4294901760
    %2340 = vmatpush1.msra.mxu0 %v2339
    %v2341 = vand.u32 %v1931, 4294901760
    %2342 = vmatprep.mubr.f32.mxu0 %v2341
    %v2343 = vand.u32 %v1930, 4294901760
    %2344 = vmatmul.mubr.f32.gmra.mrb[0].mxu0 %v2343
    %v2345 = vpop.f32.mrb[0].mxu0
    %v2346 = vadd.f32 %v2114, %v2345
    %v2347 = vpop.f32.mrb[0].mxu0
    %2348 = vdwg.mxu0
    %2349 = vmatprep.subr.mxu0 0.0
    %v2350 = vand.u32 %v1934, 4294901760
    %v2351 = vsub.f32 %v1934, %v2350
    %2352 = vmatpush1.msra.mxu0 %v2351
    %2353 = vmatprep.subr.mxu0 0.0
    %v2354 = vand.u32 %v1935, 4294901760
    %v2355 = vsub.f32 %v1935, %v2354
    %2356 = vmatpush1.msra.mxu0 %v2355
    %2357 = vmatprep.subr.mxu0 0.0
    %v2358 = vand.u32 %v1936, 4294901760
    %v2359 = vsub.f32 %v1936, %v2358
    %2360 = vmatpush1.msra.mxu0 %v2359
    %2361 = vmatprep.subr.mxu0 0.0
    %v2362 = vand.u32 %v1937, 4294901760
    %v2363 = vsub.f32 %v1937, %v2362
    %2364 = vmatpush1.msra.mxu0 %v2363
    %2365 = vmatprep.subr.mxu0 0.0
    %v2366 = vand.u32 %v1938, 4294901760
    %v2367 = vsub.f32 %v1938, %v2366
    %2368 = vmatpush1.msra.mxu0 %v2367
    %2369 = vmatprep.subr.mxu0 0.0
    %v2370 = vand.u32 %v1939, 4294901760
    %v2371 = vsub.f32 %v1939, %v2370
    %2372 = vmatpush1.msra.mxu0 %v2371
    %2373 = vmatprep.subr.mxu0 0.0
    %v2374 = vand.u32 %v1940, 4294901760
    %v2375 = vsub.f32 %v1940, %v2374
    %2376 = vmatpush1.msra.mxu0 %v2375
    %2377 = vmatprep.subr.mxu0 0.0
    %v2378 = vand.u32 %v1941, 4294901760
    %v2379 = vsub.f32 %v1941, %v2378
    %2380 = vmatpush1.msra.mxu0 %v2379
    %2381 = vmatprep.subr.mxu0 0.0
    %v2382 = vand.u32 %v1942, 4294901760
    %v2383 = vsub.f32 %v1942, %v2382
    %2384 = vmatpush1.msra.mxu0 %v2383
    %2385 = vmatprep.subr.mxu0 0.0
    %v2386 = vand.u32 %v1943, 4294901760
    %v2387 = vsub.f32 %v1943, %v2386
    %2388 = vmatpush1.msra.mxu0 %v2387
    %2389 = vmatprep.subr.mxu0 0.0
    %v2390 = vand.u32 %v1944, 4294901760
    %v2391 = vsub.f32 %v1944, %v2390
    %2392 = vmatpush1.msra.mxu0 %v2391
    %2393 = vmatprep.subr.mxu0 0.0
    %v2394 = vand.u32 %v1945, 4294901760
    %v2395 = vsub.f32 %v1945, %v2394
    %2396 = vmatpush1.msra.mxu0 %v2395
    %2397 = vmatprep.subr.mxu0 0.0
    %v2398 = vand.u32 %v1946, 4294901760
    %v2399 = vsub.f32 %v1946, %v2398
    %2400 = vmatpush1.msra.mxu0 %v2399
    %2401 = vmatprep.subr.mxu0 0.0
    %v2402 = vand.u32 %v1947, 4294901760
    %v2403 = vsub.f32 %v1947, %v2402
    %2404 = vmatpush1.msra.mxu0 %v2403
    %2405 = vmatprep.subr.mxu0 0.0
    %v2406 = vand.u32 %v1948, 4294901760
    %v2407 = vsub.f32 %v1948, %v2406
    %2408 = vmatpush1.msra.mxu0 %v2407
    %2409 = vmatprep.subr.mxu0 0.0
    %v2410 = vand.u32 %v1949, 4294901760
    %v2411 = vsub.f32 %v1949, %v2410
    %2412 = vmatpush1.msra.mxu0 %v2411
    %2413 = vmatprep.subr.mxu0 0.0
    %v2414 = vand.u32 %v1950, 4294901760
    %v2415 = vsub.f32 %v1950, %v2414
    %2416 = vmatpush1.msra.mxu0 %v2415
    %2417 = vmatprep.subr.mxu0 0.0
    %v2418 = vand.u32 %v1951, 4294901760
    %v2419 = vsub.f32 %v1951, %v2418
    %2420 = vmatpush1.msra.mxu0 %v2419
    %2421 = vmatprep.subr.mxu0 0.0
    %v2422 = vand.u32 %v1952, 4294901760
    %v2423 = vsub.f32 %v1952, %v2422
    %2424 = vmatpush1.msra.mxu0 %v2423
    %2425 = vmatprep.subr.mxu0 0.0
    %v2426 = vand.u32 %v1953, 4294901760
    %v2427 = vsub.f32 %v1953, %v2426
    %2428 = vmatpush1.msra.mxu0 %v2427
    %2429 = vmatprep.subr.mxu0 0.0
    %v2430 = vand.u32 %v1954, 4294901760
    %v2431 = vsub.f32 %v1954, %v2430
    %2432 = vmatpush1.msra.mxu0 %v2431
    %2433 = vmatprep.subr.mxu0 0.0
    %v2434 = vand.u32 %v1955, 4294901760
    %v2435 = vsub.f32 %v1955, %v2434
    %2436 = vmatpush1.msra.mxu0 %v2435
    %2437 = vmatprep.subr.mxu0 0.0
    %v2438 = vand.u32 %v1956, 4294901760
    %v2439 = vsub.f32 %v1956, %v2438
    %2440 = vmatpush1.msra.mxu0 %v2439
    %2441 = vmatprep.subr.mxu0 0.0
    %v2442 = vand.u32 %v1957, 4294901760
    %v2443 = vsub.f32 %v1957, %v2442
    %2444 = vmatpush1.msra.mxu0 %v2443
    %2445 = vmatprep.subr.mxu0 0.0
    %v2446 = vand.u32 %v1958, 4294901760
    %v2447 = vsub.f32 %v1958, %v2446
    %2448 = vmatpush1.msra.mxu0 %v2447
    %2449 = vmatprep.subr.mxu0 0.0
    %v2450 = vand.u32 %v1959, 4294901760
    %v2451 = vsub.f32 %v1959, %v2450
    %2452 = vmatpush1.msra.mxu0 %v2451
    %2453 = vmatprep.subr.mxu0 0.0
    %v2454 = vand.u32 %v1960, 4294901760
    %v2455 = vsub.f32 %v1960, %v2454
    %2456 = vmatpush1.msra.mxu0 %v2455
    %2457 = vmatprep.subr.mxu0 0.0
    %v2458 = vand.u32 %v1961, 4294901760
    %v2459 = vsub.f32 %v1961, %v2458
    %2460 = vmatpush1.msra.mxu0 %v2459
    %2461 = vmatprep.subr.mxu0 0.0
    %v2462 = vand.u32 %v1962, 4294901760
    %v2463 = vsub.f32 %v1962, %v2462
    %2464 = vmatpush1.msra.mxu0 %v2463
    %2465 = vmatprep.subr.mxu0 0.0
    %v2466 = vand.u32 %v1963, 4294901760
    %v2467 = vsub.f32 %v1963, %v2466
    %2468 = vmatpush1.msra.mxu0 %v2467
    %2469 = vmatprep.subr.mxu0 0.0
    %v2470 = vand.u32 %v1964, 4294901760
    %v2471 = vsub.f32 %v1964, %v2470
    %2472 = vmatpush1.msra.mxu0 %v2471
    %2473 = vmatprep.subr.mxu0 0.0
    %v2474 = vand.u32 %v1965, 4294901760
    %v2475 = vsub.f32 %v1965, %v2474
    %2476 = vmatpush1.msra.mxu0 %v2475
    %v2477 = vand.u32 %v1931, 4294901760
    %v2478 = vsub.f32 %v1931, %v2477
    %2479 = vmatprep.mubr.f32.mxu0 %v2478
    %v2480 = vand.u32 %v1930, 4294901760
    %v2481 = vsub.f32 %v1930, %v2480
    %2482 = vmatmul.mubr.f32.gmra.mrb[0].mxu0 %v2481
    %v2483 = vpop.f32.mrb[0].mxu0
    %v2484 = vadd.f32 %v2346, %v2483
    %v2485 = vpop.f32.mrb[0].mxu0
    %2486 = vdwg.mxu0
    %2487 = vmatprep.subr.mxu0 0.0
    %v2488 = vand.u32 %v1934, 4294901760
    %2489 = vmatpush1.msra.mxu0 %v2488
    %2490 = vmatprep.subr.mxu0 0.0
    %v2491 = vand.u32 %v1935, 4294901760
    %2492 = vmatpush1.msra.mxu0 %v2491
    %2493 = vmatprep.subr.mxu0 0.0
    %v2494 = vand.u32 %v1936, 4294901760
    %2495 = vmatpush1.msra.mxu0 %v2494
    %2496 = vmatprep.subr.mxu0 0.0
    %v2497 = vand.u32 %v1937, 4294901760
    %2498 = vmatpush1.msra.mxu0 %v2497
    %2499 = vmatprep.subr.mxu0 0.0
    %v2500 = vand.u32 %v1938, 4294901760
    %2501 = vmatpush1.msra.mxu0 %v2500
    %2502 = vmatprep.subr.mxu0 0.0
    %v2503 = vand.u32 %v1939, 4294901760
    %2504 = vmatpush1.msra.mxu0 %v2503
    %2505 = vmatprep.subr.mxu0 0.0
    %v2506 = vand.u32 %v1940, 4294901760
    %2507 = vmatpush1.msra.mxu0 %v2506
    %2508 = vmatprep.subr.mxu0 0.0
    %v2509 = vand.u32 %v1941, 4294901760
    %2510 = vmatpush1.msra.mxu0 %v2509
    %2511 = vmatprep.subr.mxu0 0.0
    %v2512 = vand.u32 %v1942, 4294901760
    %2513 = vmatpush1.msra.mxu0 %v2512
    %2514 = vmatprep.subr.mxu0 0.0
    %v2515 = vand.u32 %v1943, 4294901760
    %2516 = vmatpush1.msra.mxu0 %v2515
    %2517 = vmatprep.subr.mxu0 0.0
    %v2518 = vand.u32 %v1944, 4294901760
    %2519 = vmatpush1.msra.mxu0 %v2518
    %2520 = vmatprep.subr.mxu0 0.0
    %v2521 = vand.u32 %v1945, 4294901760
    %2522 = vmatpush1.msra.mxu0 %v2521
    %2523 = vmatprep.subr.mxu0 0.0
    %v2524 = vand.u32 %v1946, 4294901760
    %2525 = vmatpush1.msra.mxu0 %v2524
    %2526 = vmatprep.subr.mxu0 0.0
    %v2527 = vand.u32 %v1947, 4294901760
    %2528 = vmatpush1.msra.mxu0 %v2527
    %2529 = vmatprep.subr.mxu0 0.0
    %v2530 = vand.u32 %v1948, 4294901760
    %2531 = vmatpush1.msra.mxu0 %v2530
    %2532 = vmatprep.subr.mxu0 0.0
    %v2533 = vand.u32 %v1949, 4294901760
    %2534 = vmatpush1.msra.mxu0 %v2533
    %2535 = vmatprep.subr.mxu0 0.0
    %v2536 = vand.u32 %v1950, 4294901760
    %2537 = vmatpush1.msra.mxu0 %v2536
    %2538 = vmatprep.subr.mxu0 0.0
    %v2539 = vand.u32 %v1951, 4294901760
    %2540 = vmatpush1.msra.mxu0 %v2539
    %2541 = vmatprep.subr.mxu0 0.0
    %v2542 = vand.u32 %v1952, 4294901760
    %2543 = vmatpush1.msra.mxu0 %v2542
    %2544 = vmatprep.subr.mxu0 0.0
    %v2545 = vand.u32 %v1953, 4294901760
    %2546 = vmatpush1.msra.mxu0 %v2545
    %2547 = vmatprep.subr.mxu0 0.0
    %v2548 = vand.u32 %v1954, 4294901760
    %2549 = vmatpush1.msra.mxu0 %v2548
    %2550 = vmatprep.subr.mxu0 0.0
    %v2551 = vand.u32 %v1955, 4294901760
    %2552 = vmatpush1.msra.mxu0 %v2551
    %2553 = vmatprep.subr.mxu0 0.0
    %v2554 = vand.u32 %v1956, 4294901760
    %2555 = vmatpush1.msra.mxu0 %v2554
    %2556 = vmatprep.subr.mxu0 0.0
    %v2557 = vand.u32 %v1957, 4294901760
    %2558 = vmatpush1.msra.mxu0 %v2557
    %2559 = vmatprep.subr.mxu0 0.0
    %v2560 = vand.u32 %v1958, 4294901760
    %2561 = vmatpush1.msra.mxu0 %v2560
    %2562 = vmatprep.subr.mxu0 0.0
    %v2563 = vand.u32 %v1959, 4294901760
    %2564 = vmatpush1.msra.mxu0 %v2563
    %2565 = vmatprep.subr.mxu0 0.0
    %v2566 = vand.u32 %v1960, 4294901760
    %2567 = vmatpush1.msra.mxu0 %v2566
    %2568 = vmatprep.subr.mxu0 0.0
    %v2569 = vand.u32 %v1961, 4294901760
    %2570 = vmatpush1.msra.mxu0 %v2569
    %2571 = vmatprep.subr.mxu0 0.0
    %v2572 = vand.u32 %v1962, 4294901760
    %2573 = vmatpush1.msra.mxu0 %v2572
    %2574 = vmatprep.subr.mxu0 0.0
    %v2575 = vand.u32 %v1963, 4294901760
    %2576 = vmatpush1.msra.mxu0 %v2575
    %2577 = vmatprep.subr.mxu0 0.0
    %v2578 = vand.u32 %v1964, 4294901760
    %2579 = vmatpush1.msra.mxu0 %v2578
    %2580 = vmatprep.subr.mxu0 0.0
    %v2581 = vand.u32 %v1965, 4294901760
    %2582 = vmatpush1.msra.mxu0 %v2581
    %v2583 = vand.u32 %v1931, 4294901760
    %v2584 = vsub.f32 %v1931, %v2583
    %v2585 = vand.u32 %v2584, 4294901760
    %2586 = vmatprep.mubr.f32.mxu0 %v2585
    %v2587 = vand.u32 %v1930, 4294901760
    %v2588 = vsub.f32 %v1930, %v2587
    %v2589 = vand.u32 %v2588, 4294901760
    %2590 = vmatmul.mubr.f32.gmra.mrb[0].mxu0 %v2589
    %v2591 = vpop.f32.mrb[0].mxu0
    %v2592 = vadd.f32 %v2484, %v2591
    %v2593 = vpop.f32.mrb[0].mxu0
    %2594 = vdwg.mxu0
    %2595 = vmatprep.subr.mxu0 0.0
    %v2596 = vand.u32 %v1934, 4294901760
    %v2597 = vsub.f32 %v1934, %v2596
    %v2598 = vand.u32 %v2597, 4294901760
    %2599 = vmatpush1.msra.mxu0 %v2598
    %2600 = vmatprep.subr.mxu0 0.0
    %v2601 = vand.u32 %v1935, 4294901760
    %v2602 = vsub.f32 %v1935, %v2601
    %v2603 = vand.u32 %v2602, 4294901760
    %2604 = vmatpush1.msra.mxu0 %v2603
    %2605 = vmatprep.subr.mxu0 0.0
    %v2606 = vand.u32 %v1936, 4294901760
    %v2607 = vsub.f32 %v1936, %v2606
    %v2608 = vand.u32 %v2607, 4294901760
    %2609 = vmatpush1.msra.mxu0 %v2608
    %2610 = vmatprep.subr.mxu0 0.0
    %v2611 = vand.u32 %v1937, 4294901760
    %v2612 = vsub.f32 %v1937, %v2611
    %v2613 = vand.u32 %v2612, 4294901760
    %2614 = vmatpush1.msra.mxu0 %v2613
    %2615 = vmatprep.subr.mxu0 0.0
    %v2616 = vand.u32 %v1938, 4294901760
    %v2617 = vsub.f32 %v1938, %v2616
    %v2618 = vand.u32 %v2617, 4294901760
    %2619 = vmatpush1.msra.mxu0 %v2618
    %2620 = vmatprep.subr.mxu0 0.0
    %v2621 = vand.u32 %v1939, 4294901760
    %v2622 = vsub.f32 %v1939, %v2621
    %v2623 = vand.u32 %v2622, 4294901760
    %2624 = vmatpush1.msra.mxu0 %v2623
    %2625 = vmatprep.subr.mxu0 0.0
    %v2626 = vand.u32 %v1940, 4294901760
    %v2627 = vsub.f32 %v1940, %v2626
    %v2628 = vand.u32 %v2627, 4294901760
    %2629 = vmatpush1.msra.mxu0 %v2628
    %2630 = vmatprep.subr.mxu0 0.0
    %v2631 = vand.u32 %v1941, 4294901760
    %v2632 = vsub.f32 %v1941, %v2631
    %v2633 = vand.u32 %v2632, 4294901760
    %2634 = vmatpush1.msra.mxu0 %v2633
    %2635 = vmatprep.subr.mxu0 0.0
    %v2636 = vand.u32 %v1942, 4294901760
    %v2637 = vsub.f32 %v1942, %v2636
    %v2638 = vand.u32 %v2637, 4294901760
    %2639 = vmatpush1.msra.mxu0 %v2638
    %2640 = vmatprep.subr.mxu0 0.0
    %v2641 = vand.u32 %v1943, 4294901760
    %v2642 = vsub.f32 %v1943, %v2641
    %v2643 = vand.u32 %v2642, 4294901760
    %2644 = vmatpush1.msra.mxu0 %v2643
    %2645 = vmatprep.subr.mxu0 0.0
    %v2646 = vand.u32 %v1944, 4294901760
    %v2647 = vsub.f32 %v1944, %v2646
    %v2648 = vand.u32 %v2647, 4294901760
    %2649 = vmatpush1.msra.mxu0 %v2648
    %2650 = vmatprep.subr.mxu0 0.0
    %v2651 = vand.u32 %v1945, 4294901760
    %v2652 = vsub.f32 %v1945, %v2651
    %v2653 = vand.u32 %v2652, 4294901760
    %2654 = vmatpush1.msra.mxu0 %v2653
    %2655 = vmatprep.subr.mxu0 0.0
    %v2656 = vand.u32 %v1946, 4294901760
    %v2657 = vsub.f32 %v1946, %v2656
    %v2658 = vand.u32 %v2657, 4294901760
    %2659 = vmatpush1.msra.mxu0 %v2658
    %2660 = vmatprep.subr.mxu0 0.0
    %v2661 = vand.u32 %v1947, 4294901760
    %v2662 = vsub.f32 %v1947, %v2661
    %v2663 = vand.u32 %v2662, 4294901760
    %2664 = vmatpush1.msra.mxu0 %v2663
    %2665 = vmatprep.subr.mxu0 0.0
    %v2666 = vand.u32 %v1948, 4294901760
    %v2667 = vsub.f32 %v1948, %v2666
    %v2668 = vand.u32 %v2667, 4294901760
    %2669 = vmatpush1.msra.mxu0 %v2668
    %2670 = vmatprep.subr.mxu0 0.0
    %v2671 = vand.u32 %v1949, 4294901760
    %v2672 = vsub.f32 %v1949, %v2671
    %v2673 = vand.u32 %v2672, 4294901760
    %2674 = vmatpush1.msra.mxu0 %v2673
    %2675 = vmatprep.subr.mxu0 0.0
    %v2676 = vand.u32 %v1950, 4294901760
    %v2677 = vsub.f32 %v1950, %v2676
    %v2678 = vand.u32 %v2677, 4294901760
    %2679 = vmatpush1.msra.mxu0 %v2678
    %2680 = vmatprep.subr.mxu0 0.0
    %v2681 = vand.u32 %v1951, 4294901760
    %v2682 = vsub.f32 %v1951, %v2681
    %v2683 = vand.u32 %v2682, 4294901760
    %2684 = vmatpush1.msra.mxu0 %v2683
    %2685 = vmatprep.subr.mxu0 0.0
    %v2686 = vand.u32 %v1952, 4294901760
    %v2687 = vsub.f32 %v1952, %v2686
    %v2688 = vand.u32 %v2687, 4294901760
    %2689 = vmatpush1.msra.mxu0 %v2688
    %2690 = vmatprep.subr.mxu0 0.0
    %v2691 = vand.u32 %v1953, 4294901760
    %v2692 = vsub.f32 %v1953, %v2691
    %v2693 = vand.u32 %v2692, 4294901760
    %2694 = vmatpush1.msra.mxu0 %v2693
    %2695 = vmatprep.subr.mxu0 0.0
    %v2696 = vand.u32 %v1954, 4294901760
    %v2697 = vsub.f32 %v1954, %v2696
    %v2698 = vand.u32 %v2697, 4294901760
    %2699 = vmatpush1.msra.mxu0 %v2698
    %2700 = vmatprep.subr.mxu0 0.0
    %v2701 = vand.u32 %v1955, 4294901760
    %v2702 = vsub.f32 %v1955, %v2701
    %v2703 = vand.u32 %v2702, 4294901760
    %2704 = vmatpush1.msra.mxu0 %v2703
    %2705 = vmatprep.subr.mxu0 0.0
    %v2706 = vand.u32 %v1956, 4294901760
    %v2707 = vsub.f32 %v1956, %v2706
    %v2708 = vand.u32 %v2707, 4294901760
    %2709 = vmatpush1.msra.mxu0 %v2708
    %2710 = vmatprep.subr.mxu0 0.0
    %v2711 = vand.u32 %v1957, 4294901760
    %v2712 = vsub.f32 %v1957, %v2711
    %v2713 = vand.u32 %v2712, 4294901760
    %2714 = vmatpush1.msra.mxu0 %v2713
    %2715 = vmatprep.subr.mxu0 0.0
    %v2716 = vand.u32 %v1958, 4294901760
    %v2717 = vsub.f32 %v1958, %v2716
    %v2718 = vand.u32 %v2717, 4294901760
    %2719 = vmatpush1.msra.mxu0 %v2718
    %2720 = vmatprep.subr.mxu0 0.0
    %v2721 = vand.u32 %v1959, 4294901760
    %v2722 = vsub.f32 %v1959, %v2721
    %v2723 = vand.u32 %v2722, 4294901760
    %2724 = vmatpush1.msra.mxu0 %v2723
    %2725 = vmatprep.subr.mxu0 0.0
    %v2726 = vand.u32 %v1960, 4294901760
    %v2727 = vsub.f32 %v1960, %v2726
    %v2728 = vand.u32 %v2727, 4294901760
    %2729 = vmatpush1.msra.mxu0 %v2728
    %2730 = vmatprep.subr.mxu0 0.0
    %v2731 = vand.u32 %v1961, 4294901760
    %v2732 = vsub.f32 %v1961, %v2731
    %v2733 = vand.u32 %v2732, 4294901760
    %2734 = vmatpush1.msra.mxu0 %v2733
    %2735 = vmatprep.subr.mxu0 0.0
    %v2736 = vand.u32 %v1962, 4294901760
    %v2737 = vsub.f32 %v1962, %v2736
    %v2738 = vand.u32 %v2737, 4294901760
    %2739 = vmatpush1.msra.mxu0 %v2738
    %2740 = vmatprep.subr.mxu0 0.0
    %v2741 = vand.u32 %v1963, 4294901760
    %v2742 = vsub.f32 %v1963, %v2741
    %v2743 = vand.u32 %v2742, 4294901760
    %2744 = vmatpush1.msra.mxu0 %v2743
    %2745 = vmatprep.subr.mxu0 0.0
    %v2746 = vand.u32 %v1964, 4294901760
    %v2747 = vsub.f32 %v1964, %v2746
    %v2748 = vand.u32 %v2747, 4294901760
    %2749 = vmatpush1.msra.mxu0 %v2748
    %2750 = vmatprep.subr.mxu0 0.0
    %v2751 = vand.u32 %v1965, 4294901760
    %v2752 = vsub.f32 %v1965, %v2751
    %v2753 = vand.u32 %v2752, 4294901760
    %2754 = vmatpush1.msra.mxu0 %v2753
    %v2755 = vand.u32 %v1931, 4294901760
    %2756 = vmatprep.mubr.f32.mxu0 %v2755
    %v2757 = vand.u32 %v1930, 4294901760
    %2758 = vmatmul.mubr.f32.gmra.mrb[0].mxu0 %v2757
    %v2759 = vpop.f32.mrb[0].mxu0
    %v2760 = vadd.f32 %v2592, %v2759
    %v2761 = vpop.f32.mrb[0].mxu0
    %2762 = vdwg.mxu0
    %2763 = vmatprep.subr.mxu0 0.0
    %v2764 = vand.u32 %v1934, 4294901760
    %2765 = vmatpush1.msra.mxu0 %v2764
    %2766 = vmatprep.subr.mxu0 0.0
    %v2767 = vand.u32 %v1935, 4294901760
    %2768 = vmatpush1.msra.mxu0 %v2767
    %2769 = vmatprep.subr.mxu0 0.0
    %v2770 = vand.u32 %v1936, 4294901760
    %2771 = vmatpush1.msra.mxu0 %v2770
    %2772 = vmatprep.subr.mxu0 0.0
    %v2773 = vand.u32 %v1937, 4294901760
    %2774 = vmatpush1.msra.mxu0 %v2773
    %2775 = vmatprep.subr.mxu0 0.0
    %v2776 = vand.u32 %v1938, 4294901760
    %2777 = vmatpush1.msra.mxu0 %v2776
    %2778 = vmatprep.subr.mxu0 0.0
    %v2779 = vand.u32 %v1939, 4294901760
    %2780 = vmatpush1.msra.mxu0 %v2779
    %2781 = vmatprep.subr.mxu0 0.0
    %v2782 = vand.u32 %v1940, 4294901760
    %2783 = vmatpush1.msra.mxu0 %v2782
    %2784 = vmatprep.subr.mxu0 0.0
    %v2785 = vand.u32 %v1941, 4294901760
    %2786 = vmatpush1.msra.mxu0 %v2785
    %2787 = vmatprep.subr.mxu0 0.0
    %v2788 = vand.u32 %v1942, 4294901760
    %2789 = vmatpush1.msra.mxu0 %v2788
    %2790 = vmatprep.subr.mxu0 0.0
    %v2791 = vand.u32 %v1943, 4294901760
    %2792 = vmatpush1.msra.mxu0 %v2791
    %2793 = vmatprep.subr.mxu0 0.0
    %v2794 = vand.u32 %v1944, 4294901760
    %2795 = vmatpush1.msra.mxu0 %v2794
    %2796 = vmatprep.subr.mxu0 0.0
    %v2797 = vand.u32 %v1945, 4294901760
    %2798 = vmatpush1.msra.mxu0 %v2797
    %2799 = vmatprep.subr.mxu0 0.0
    %v2800 = vand.u32 %v1946, 4294901760
    %2801 = vmatpush1.msra.mxu0 %v2800
    %2802 = vmatprep.subr.mxu0 0.0
    %v2803 = vand.u32 %v1947, 4294901760
    %2804 = vmatpush1.msra.mxu0 %v2803
    %2805 = vmatprep.subr.mxu0 0.0
    %v2806 = vand.u32 %v1948, 4294901760
    %2807 = vmatpush1.msra.mxu0 %v2806
    %2808 = vmatprep.subr.mxu0 0.0
    %v2809 = vand.u32 %v1949, 4294901760
    %2810 = vmatpush1.msra.mxu0 %v2809
    %2811 = vmatprep.subr.mxu0 0.0
    %v2812 = vand.u32 %v1950, 4294901760
    %2813 = vmatpush1.msra.mxu0 %v2812
    %2814 = vmatprep.subr.mxu0 0.0
    %v2815 = vand.u32 %v1951, 4294901760
    %2816 = vmatpush1.msra.mxu0 %v2815
    %2817 = vmatprep.subr.mxu0 0.0
    %v2818 = vand.u32 %v1952, 4294901760
    %2819 = vmatpush1.msra.mxu0 %v2818
    %2820 = vmatprep.subr.mxu0 0.0
    %v2821 = vand.u32 %v1953, 4294901760
    %2822 = vmatpush1.msra.mxu0 %v2821
    %2823 = vmatprep.subr.mxu0 0.0
    %v2824 = vand.u32 %v1954, 4294901760
    %2825 = vmatpush1.msra.mxu0 %v2824
    %2826 = vmatprep.subr.mxu0 0.0
    %v2827 = vand.u32 %v1955, 4294901760
    %2828 = vmatpush1.msra.mxu0 %v2827
    %2829 = vmatprep.subr.mxu0 0.0
    %v2830 = vand.u32 %v1956, 4294901760
    %2831 = vmatpush1.msra.mxu0 %v2830
    %2832 = vmatprep.subr.mxu0 0.0
    %v2833 = vand.u32 %v1957, 4294901760
    %2834 = vmatpush1.msra.mxu0 %v2833
    %2835 = vmatprep.subr.mxu0 0.0
    %v2836 = vand.u32 %v1958, 4294901760
    %2837 = vmatpush1.msra.mxu0 %v2836
    %2838 = vmatprep.subr.mxu0 0.0
    %v2839 = vand.u32 %v1959, 4294901760
    %2840 = vmatpush1.msra.mxu0 %v2839
    %2841 = vmatprep.subr.mxu0 0.0
    %v2842 = vand.u32 %v1960, 4294901760
    %2843 = vmatpush1.msra.mxu0 %v2842
    %2844 = vmatprep.subr.mxu0 0.0
    %v2845 = vand.u32 %v1961, 4294901760
    %2846 = vmatpush1.msra.mxu0 %v2845
    %2847 = vmatprep.subr.mxu0 0.0
    %v2848 = vand.u32 %v1962, 4294901760
    %2849 = vmatpush1.msra.mxu0 %v2848
    %2850 = vmatprep.subr.mxu0 0.0
    %v2851 = vand.u32 %v1963, 4294901760
    %2852 = vmatpush1.msra.mxu0 %v2851
    %2853 = vmatprep.subr.mxu0 0.0
    %v2854 = vand.u32 %v1964, 4294901760
    %2855 = vmatpush1.msra.mxu0 %v2854
    %2856 = vmatprep.subr.mxu0 0.0
    %v2857 = vand.u32 %v1965, 4294901760
    %2858 = vmatpush1.msra.mxu0 %v2857
    %v2859 = vand.u32 %v1931, 4294901760
    %2860 = vmatprep.mubr.f32.mxu0 %v2859
    %v2861 = vand.u32 %v1930, 4294901760
    %2862 = vmatmul.mubr.f32.gmra.mrb[0].mxu0 %v2861
    %v2863 = vpop.f32.mrb[0].mxu0
    %v2864 = vadd.f32 %v2760, %v2863
    %v2865 = vpop.f32.mrb[0].mxu0
    %2866 = vdwg.mxu0
    %2867 = vmatprep.subr.mxu0 0.0
    %v2868 = vand.u32 %v1966, 4294901760
    %2869 = vmatpush1.msra.mxu0 %v2868
    %2870 = vmatprep.subr.mxu0 0.0
    %v2871 = vand.u32 %v1967, 4294901760
    %2872 = vmatpush1.msra.mxu0 %v2871
    %2873 = vmatprep.subr.mxu0 0.0
    %v2874 = vand.u32 %v1968, 4294901760
    %2875 = vmatpush1.msra.mxu0 %v2874
    %2876 = vmatprep.subr.mxu0 0.0
    %v2877 = vand.u32 %v1969, 4294901760
    %2878 = vmatpush1.msra.mxu0 %v2877
    %2879 = vmatprep.subr.mxu0 0.0
    %v2880 = vand.u32 %v1970, 4294901760
    %2881 = vmatpush1.msra.mxu0 %v2880
    %2882 = vmatprep.subr.mxu0 0.0
    %v2883 = vand.u32 %v1971, 4294901760
    %2884 = vmatpush1.msra.mxu0 %v2883
    %2885 = vmatprep.subr.mxu0 0.0
    %v2886 = vand.u32 %v1972, 4294901760
    %2887 = vmatpush1.msra.mxu0 %v2886
    %2888 = vmatprep.subr.mxu0 0.0
    %v2889 = vand.u32 %v1973, 4294901760
    %2890 = vmatpush1.msra.mxu0 %v2889
    %2891 = vmatprep.subr.mxu0 0.0
    %v2892 = vand.u32 %v1974, 4294901760
    %2893 = vmatpush1.msra.mxu0 %v2892
    %2894 = vmatprep.subr.mxu0 0.0
    %v2895 = vand.u32 %v1975, 4294901760
    %2896 = vmatpush1.msra.mxu0 %v2895
    %2897 = vmatprep.subr.mxu0 0.0
    %v2898 = vand.u32 %v1976, 4294901760
    %2899 = vmatpush1.msra.mxu0 %v2898
    %2900 = vmatprep.subr.mxu0 0.0
    %v2901 = vand.u32 %v1977, 4294901760
    %2902 = vmatpush1.msra.mxu0 %v2901
    %2903 = vmatprep.subr.mxu0 0.0
    %v2904 = vand.u32 %v1978, 4294901760
    %2905 = vmatpush1.msra.mxu0 %v2904
    %2906 = vmatprep.subr.mxu0 0.0
    %v2907 = vand.u32 %v1979, 4294901760
    %2908 = vmatpush1.msra.mxu0 %v2907
    %2909 = vmatprep.subr.mxu0 0.0
    %v2910 = vand.u32 %v1980, 4294901760
    %2911 = vmatpush1.msra.mxu0 %v2910
    %2912 = vmatprep.subr.mxu0 0.0
    %v2913 = vand.u32 %v1981, 4294901760
    %2914 = vmatpush1.msra.mxu0 %v2913
    %2915 = vmatprep.subr.mxu0 0.0
    %v2916 = vand.u32 %v1982, 4294901760
    %2917 = vmatpush1.msra.mxu0 %v2916
    %2918 = vmatprep.subr.mxu0 0.0
    %v2919 = vand.u32 %v1983, 4294901760
    %2920 = vmatpush1.msra.mxu0 %v2919
    %2921 = vmatprep.subr.mxu0 0.0
    %v2922 = vand.u32 %v1984, 4294901760
    %2923 = vmatpush1.msra.mxu0 %v2922
    %2924 = vmatprep.subr.mxu0 0.0
    %v2925 = vand.u32 %v1985, 4294901760
    %2926 = vmatpush1.msra.mxu0 %v2925
    %2927 = vmatprep.subr.mxu0 0.0
    %v2928 = vand.u32 %v1986, 4294901760
    %2929 = vmatpush1.msra.mxu0 %v2928
    %2930 = vmatprep.subr.mxu0 0.0
    %v2931 = vand.u32 %v1987, 4294901760
    %2932 = vmatpush1.msra.mxu0 %v2931
    %2933 = vmatprep.subr.mxu0 0.0
    %v2934 = vand.u32 %v1988, 4294901760
    %2935 = vmatpush1.msra.mxu0 %v2934
    %2936 = vmatprep.subr.mxu0 0.0
    %v2937 = vand.u32 %v1989, 4294901760
    %2938 = vmatpush1.msra.mxu0 %v2937
    %2939 = vmatprep.subr.mxu0 0.0
    %v2940 = vand.u32 %v1990, 4294901760
    %2941 = vmatpush1.msra.mxu0 %v2940
    %2942 = vmatprep.subr.mxu0 0.0
    %v2943 = vand.u32 %v1991, 4294901760
    %2944 = vmatpush1.msra.mxu0 %v2943
    %2945 = vmatprep.subr.mxu0 0.0
    %v2946 = vand.u32 %v1992, 4294901760
    %2947 = vmatpush1.msra.mxu0 %v2946
    %2948 = vmatprep.subr.mxu0 0.0
    %v2949 = vand.u32 %v1993, 4294901760
    %2950 = vmatpush1.msra.mxu0 %v2949
    %2951 = vmatprep.subr.mxu0 0.0
    %v2952 = vand.u32 %v1994, 4294901760
    %2953 = vmatpush1.msra.mxu0 %v2952
    %2954 = vmatprep.subr.mxu0 0.0
    %v2955 = vand.u32 %v1995, 4294901760
    %2956 = vmatpush1.msra.mxu0 %v2955
    %2957 = vmatprep.subr.mxu0 0.0
    %v2958 = vand.u32 %v1996, 4294901760
    %2959 = vmatpush1.msra.mxu0 %v2958
    %2960 = vmatprep.subr.mxu0 0.0
    %v2961 = vand.u32 %v1997, 4294901760
    %2962 = vmatpush1.msra.mxu0 %v2961
    %v2963 = vand.u32 %v1933, 4294901760
    %v2964 = vsub.f32 %v1933, %v2963
    %v2965 = vand.u32 %v2964, 4294901760
    %v2966 = vsub.f32 %v2964, %v2965
    %v2967 = vand.u32 %v2966, 4294901760
    %2968 = vmatprep.mubr.f32.mxu0 %v2967
    %v2969 = vand.u32 %v1932, 4294901760
    %v2970 = vsub.f32 %v1932, %v2969
    %v2971 = vand.u32 %v2970, 4294901760
    %v2972 = vsub.f32 %v2970, %v2971
    %v2973 = vand.u32 %v2972, 4294901760
    %2974 = vmatmul.mubr.f32.gmra.mrb[0].mxu0 %v2973
    %v2975 = vpop.f32.mrb[0].mxu0
    %v2976 = vadd.f32 %v2864, %v2975
    %v2977 = vpop.f32.mrb[0].mxu0
    %2978 = vdwg.mxu0
    %2979 = vmatprep.subr.mxu0 0.0
    %v2980 = vand.u32 %v1966, 4294901760
    %v2981 = vsub.f32 %v1966, %v2980
    %v2982 = vand.u32 %v2981, 4294901760
    %v2983 = vsub.f32 %v2981, %v2982
    %v2984 = vand.u32 %v2983, 4294901760
    %2985 = vmatpush1.msra.mxu0 %v2984
    %2986 = vmatprep.subr.mxu0 0.0
    %v2987 = vand.u32 %v1967, 4294901760
    %v2988 = vsub.f32 %v1967, %v2987
    %v2989 = vand.u32 %v2988, 4294901760
    %v2990 = vsub.f32 %v2988, %v2989
    %v2991 = vand.u32 %v2990, 4294901760
    %2992 = vmatpush1.msra.mxu0 %v2991
    %2993 = vmatprep.subr.mxu0 0.0
    %v2994 = vand.u32 %v1968, 4294901760
    %v2995 = vsub.f32 %v1968, %v2994
    %v2996 = vand.u32 %v2995, 4294901760
    %v2997 = vsub.f32 %v2995, %v2996
    %v2998 = vand.u32 %v2997, 4294901760
    %2999 = vmatpush1.msra.mxu0 %v2998
    %3000 = vmatprep.subr.mxu0 0.0
    %v3001 = vand.u32 %v1969, 4294901760
    %v3002 = vsub.f32 %v1969, %v3001
    %v3003 = vand.u32 %v3002, 4294901760
    %v3004 = vsub.f32 %v3002, %v3003
    %v3005 = vand.u32 %v3004, 4294901760
    %3006 = vmatpush1.msra.mxu0 %v3005
    %3007 = vmatprep.subr.mxu0 0.0
    %v3008 = vand.u32 %v1970, 4294901760
    %v3009 = vsub.f32 %v1970, %v3008
    %v3010 = vand.u32 %v3009, 4294901760
    %v3011 = vsub.f32 %v3009, %v3010
    %v3012 = vand.u32 %v3011, 4294901760
    %3013 = vmatpush1.msra.mxu0 %v3012
    %3014 = vmatprep.subr.mxu0 0.0
    %v3015 = vand.u32 %v1971, 4294901760
    %v3016 = vsub.f32 %v1971, %v3015
    %v3017 = vand.u32 %v3016, 4294901760
    %v3018 = vsub.f32 %v3016, %v3017
    %v3019 = vand.u32 %v3018, 4294901760
    %3020 = vmatpush1.msra.mxu0 %v3019
    %3021 = vmatprep.subr.mxu0 0.0
    %v3022 = vand.u32 %v1972, 4294901760
    %v3023 = vsub.f32 %v1972, %v3022
    %v3024 = vand.u32 %v3023, 4294901760
    %v3025 = vsub.f32 %v3023, %v3024
    %v3026 = vand.u32 %v3025, 4294901760
    %3027 = vmatpush1.msra.mxu0 %v3026
    %3028 = vmatprep.subr.mxu0 0.0
    %v3029 = vand.u32 %v1973, 4294901760
    %v3030 = vsub.f32 %v1973, %v3029
    %v3031 = vand.u32 %v3030, 4294901760
    %v3032 = vsub.f32 %v3030, %v3031
    %v3033 = vand.u32 %v3032, 4294901760
    %3034 = vmatpush1.msra.mxu0 %v3033
    %3035 = vmatprep.subr.mxu0 0.0
    %v3036 = vand.u32 %v1974, 4294901760
    %v3037 = vsub.f32 %v1974, %v3036
    %v3038 = vand.u32 %v3037, 4294901760
    %v3039 = vsub.f32 %v3037, %v3038
    %v3040 = vand.u32 %v3039, 4294901760
    %3041 = vmatpush1.msra.mxu0 %v3040
    %3042 = vmatprep.subr.mxu0 0.0
    %v3043 = vand.u32 %v1975, 4294901760
    %v3044 = vsub.f32 %v1975, %v3043
    %v3045 = vand.u32 %v3044, 4294901760
    %v3046 = vsub.f32 %v3044, %v3045
    %v3047 = vand.u32 %v3046, 4294901760
    %3048 = vmatpush1.msra.mxu0 %v3047
    %3049 = vmatprep.subr.mxu0 0.0
    %v3050 = vand.u32 %v1976, 4294901760
    %v3051 = vsub.f32 %v1976, %v3050
    %v3052 = vand.u32 %v3051, 4294901760
    %v3053 = vsub.f32 %v3051, %v3052
    %v3054 = vand.u32 %v3053, 4294901760
    %3055 = vmatpush1.msra.mxu0 %v3054
    %3056 = vmatprep.subr.mxu0 0.0
    %v3057 = vand.u32 %v1977, 4294901760
    %v3058 = vsub.f32 %v1977, %v3057
    %v3059 = vand.u32 %v3058, 4294901760
    %v3060 = vsub.f32 %v3058, %v3059
    %v3061 = vand.u32 %v3060, 4294901760
    %3062 = vmatpush1.msra.mxu0 %v3061
    %3063 = vmatprep.subr.mxu0 0.0
    %v3064 = vand.u32 %v1978, 4294901760
    %v3065 = vsub.f32 %v1978, %v3064
    %v3066 = vand.u32 %v3065, 4294901760
    %v3067 = vsub.f32 %v3065, %v3066
    %v3068 = vand.u32 %v3067, 4294901760
    %3069 = vmatpush1.msra.mxu0 %v3068
    %3070 = vmatprep.subr.mxu0 0.0
    %v3071 = vand.u32 %v1979, 4294901760
    %v3072 = vsub.f32 %v1979, %v3071
    %v3073 = vand.u32 %v3072, 4294901760
    %v3074 = vsub.f32 %v3072, %v3073
    %v3075 = vand.u32 %v3074, 4294901760
    %3076 = vmatpush1.msra.mxu0 %v3075
    %3077 = vmatprep.subr.mxu0 0.0
    %v3078 = vand.u32 %v1980, 4294901760
    %v3079 = vsub.f32 %v1980, %v3078
    %v3080 = vand.u32 %v3079, 4294901760
    %v3081 = vsub.f32 %v3079, %v3080
    %v3082 = vand.u32 %v3081, 4294901760
    %3083 = vmatpush1.msra.mxu0 %v3082
    %3084 = vmatprep.subr.mxu0 0.0
    %v3085 = vand.u32 %v1981, 4294901760
    %v3086 = vsub.f32 %v1981, %v3085
    %v3087 = vand.u32 %v3086, 4294901760
    %v3088 = vsub.f32 %v3086, %v3087
    %v3089 = vand.u32 %v3088, 4294901760
    %3090 = vmatpush1.msra.mxu0 %v3089
    %3091 = vmatprep.subr.mxu0 0.0
    %v3092 = vand.u32 %v1982, 4294901760
    %v3093 = vsub.f32 %v1982, %v3092
    %v3094 = vand.u32 %v3093, 4294901760
    %v3095 = vsub.f32 %v3093, %v3094
    %v3096 = vand.u32 %v3095, 4294901760
    %3097 = vmatpush1.msra.mxu0 %v3096
    %3098 = vmatprep.subr.mxu0 0.0
    %v3099 = vand.u32 %v1983, 4294901760
    %v3100 = vsub.f32 %v1983, %v3099
    %v3101 = vand.u32 %v3100, 4294901760
    %v3102 = vsub.f32 %v3100, %v3101
    %v3103 = vand.u32 %v3102, 4294901760
    %3104 = vmatpush1.msra.mxu0 %v3103
    %3105 = vmatprep.subr.mxu0 0.0
    %v3106 = vand.u32 %v1984, 4294901760
    %v3107 = vsub.f32 %v1984, %v3106
    %v3108 = vand.u32 %v3107, 4294901760
    %v3109 = vsub.f32 %v3107, %v3108
    %v3110 = vand.u32 %v3109, 4294901760
    %3111 = vmatpush1.msra.mxu0 %v3110
    %3112 = vmatprep.subr.mxu0 0.0
    %v3113 = vand.u32 %v1985, 4294901760
    %v3114 = vsub.f32 %v1985, %v3113
    %v3115 = vand.u32 %v3114, 4294901760
    %v3116 = vsub.f32 %v3114, %v3115
    %v3117 = vand.u32 %v3116, 4294901760
    %3118 = vmatpush1.msra.mxu0 %v3117
    %3119 = vmatprep.subr.mxu0 0.0
    %v3120 = vand.u32 %v1986, 4294901760
    %v3121 = vsub.f32 %v1986, %v3120
    %v3122 = vand.u32 %v3121, 4294901760
    %v3123 = vsub.f32 %v3121, %v3122
    %v3124 = vand.u32 %v3123, 4294901760
    %3125 = vmatpush1.msra.mxu0 %v3124
    %3126 = vmatprep.subr.mxu0 0.0
    %v3127 = vand.u32 %v1987, 4294901760
    %v3128 = vsub.f32 %v1987, %v3127
    %v3129 = vand.u32 %v3128, 4294901760
    %v3130 = vsub.f32 %v3128, %v3129
    %v3131 = vand.u32 %v3130, 4294901760
    %3132 = vmatpush1.msra.mxu0 %v3131
    %3133 = vmatprep.subr.mxu0 0.0
    %v3134 = vand.u32 %v1988, 4294901760
    %v3135 = vsub.f32 %v1988, %v3134
    %v3136 = vand.u32 %v3135, 4294901760
    %v3137 = vsub.f32 %v3135, %v3136
    %v3138 = vand.u32 %v3137, 4294901760
    %3139 = vmatpush1.msra.mxu0 %v3138
    %3140 = vmatprep.subr.mxu0 0.0
    %v3141 = vand.u32 %v1989, 4294901760
    %v3142 = vsub.f32 %v1989, %v3141
    %v3143 = vand.u32 %v3142, 4294901760
    %v3144 = vsub.f32 %v3142, %v3143
    %v3145 = vand.u32 %v3144, 4294901760
    %3146 = vmatpush1.msra.mxu0 %v3145
    %3147 = vmatprep.subr.mxu0 0.0
    %v3148 = vand.u32 %v1990, 4294901760
    %v3149 = vsub.f32 %v1990, %v3148
    %v3150 = vand.u32 %v3149, 4294901760
    %v3151 = vsub.f32 %v3149, %v3150
    %v3152 = vand.u32 %v3151, 4294901760
    %3153 = vmatpush1.msra.mxu0 %v3152
    %3154 = vmatprep.subr.mxu0 0.0
    %v3155 = vand.u32 %v1991, 4294901760
    %v3156 = vsub.f32 %v1991, %v3155
    %v3157 = vand.u32 %v3156, 4294901760
    %v3158 = vsub.f32 %v3156, %v3157
    %v3159 = vand.u32 %v3158, 4294901760
    %3160 = vmatpush1.msra.mxu0 %v3159
    %3161 = vmatprep.subr.mxu0 0.0
    %v3162 = vand.u32 %v1992, 4294901760
    %v3163 = vsub.f32 %v1992, %v3162
    %v3164 = vand.u32 %v3163, 4294901760
    %v3165 = vsub.f32 %v3163, %v3164
    %v3166 = vand.u32 %v3165, 4294901760
    %3167 = vmatpush1.msra.mxu0 %v3166
    %3168 = vmatprep.subr.mxu0 0.0
    %v3169 = vand.u32 %v1993, 4294901760
    %v3170 = vsub.f32 %v1993, %v3169
    %v3171 = vand.u32 %v3170, 4294901760
    %v3172 = vsub.f32 %v3170, %v3171
    %v3173 = vand.u32 %v3172, 4294901760
    %3174 = vmatpush1.msra.mxu0 %v3173
    %3175 = vmatprep.subr.mxu0 0.0
    %v3176 = vand.u32 %v1994, 4294901760
    %v3177 = vsub.f32 %v1994, %v3176
    %v3178 = vand.u32 %v3177, 4294901760
    %v3179 = vsub.f32 %v3177, %v3178
    %v3180 = vand.u32 %v3179, 4294901760
    %3181 = vmatpush1.msra.mxu0 %v3180
    %3182 = vmatprep.subr.mxu0 0.0
    %v3183 = vand.u32 %v1995, 4294901760
    %v3184 = vsub.f32 %v1995, %v3183
    %v3185 = vand.u32 %v3184, 4294901760
    %v3186 = vsub.f32 %v3184, %v3185
    %v3187 = vand.u32 %v3186, 4294901760
    %3188 = vmatpush1.msra.mxu0 %v3187
    %3189 = vmatprep.subr.mxu0 0.0
    %v3190 = vand.u32 %v1996, 4294901760
    %v3191 = vsub.f32 %v1996, %v3190
    %v3192 = vand.u32 %v3191, 4294901760
    %v3193 = vsub.f32 %v3191, %v3192
    %v3194 = vand.u32 %v3193, 4294901760
    %3195 = vmatpush1.msra.mxu0 %v3194
    %3196 = vmatprep.subr.mxu0 0.0
    %v3197 = vand.u32 %v1997, 4294901760
    %v3198 = vsub.f32 %v1997, %v3197
    %v3199 = vand.u32 %v3198, 4294901760
    %v3200 = vsub.f32 %v3198, %v3199
    %v3201 = vand.u32 %v3200, 4294901760
    %3202 = vmatpush1.msra.mxu0 %v3201
    %v3203 = vand.u32 %v1933, 4294901760
    %3204 = vmatprep.mubr.f32.mxu0 %v3203
    %v3205 = vand.u32 %v1932, 4294901760
    %3206 = vmatmul.mubr.f32.gmra.mrb[0].mxu0 %v3205
    %v3207 = vpop.f32.mrb[0].mxu0
    %v3208 = vadd.f32 %v2976, %v3207
    %v3209 = vpop.f32.mrb[0].mxu0
    %3210 = vdwg.mxu0
    %3211 = vmatprep.subr.mxu0 0.0
    %v3212 = vand.u32 %v1966, 4294901760
    %v3213 = vsub.f32 %v1966, %v3212
    %3214 = vmatpush1.msra.mxu0 %v3213
    %3215 = vmatprep.subr.mxu0 0.0
    %v3216 = vand.u32 %v1967, 4294901760
    %v3217 = vsub.f32 %v1967, %v3216
    %3218 = vmatpush1.msra.mxu0 %v3217
    %3219 = vmatprep.subr.mxu0 0.0
    %v3220 = vand.u32 %v1968, 4294901760
    %v3221 = vsub.f32 %v1968, %v3220
    %3222 = vmatpush1.msra.mxu0 %v3221
    %3223 = vmatprep.subr.mxu0 0.0
    %v3224 = vand.u32 %v1969, 4294901760
    %v3225 = vsub.f32 %v1969, %v3224
    %3226 = vmatpush1.msra.mxu0 %v3225
    %3227 = vmatprep.subr.mxu0 0.0
    %v3228 = vand.u32 %v1970, 4294901760
    %v3229 = vsub.f32 %v1970, %v3228
    %3230 = vmatpush1.msra.mxu0 %v3229
    %3231 = vmatprep.subr.mxu0 0.0
    %v3232 = vand.u32 %v1971, 4294901760
    %v3233 = vsub.f32 %v1971, %v3232
    %3234 = vmatpush1.msra.mxu0 %v3233
    %3235 = vmatprep.subr.mxu0 0.0
    %v3236 = vand.u32 %v1972, 4294901760
    %v3237 = vsub.f32 %v1972, %v3236
    %3238 = vmatpush1.msra.mxu0 %v3237
    %3239 = vmatprep.subr.mxu0 0.0
    %v3240 = vand.u32 %v1973, 4294901760
    %v3241 = vsub.f32 %v1973, %v3240
    %3242 = vmatpush1.msra.mxu0 %v3241
    %3243 = vmatprep.subr.mxu0 0.0
    %v3244 = vand.u32 %v1974, 4294901760
    %v3245 = vsub.f32 %v1974, %v3244
    %3246 = vmatpush1.msra.mxu0 %v3245
    %3247 = vmatprep.subr.mxu0 0.0
    %v3248 = vand.u32 %v1975, 4294901760
    %v3249 = vsub.f32 %v1975, %v3248
    %3250 = vmatpush1.msra.mxu0 %v3249
    %3251 = vmatprep.subr.mxu0 0.0
    %v3252 = vand.u32 %v1976, 4294901760
    %v3253 = vsub.f32 %v1976, %v3252
    %3254 = vmatpush1.msra.mxu0 %v3253
    %3255 = vmatprep.subr.mxu0 0.0
    %v3256 = vand.u32 %v1977, 4294901760
    %v3257 = vsub.f32 %v1977, %v3256
    %3258 = vmatpush1.msra.mxu0 %v3257
    %3259 = vmatprep.subr.mxu0 0.0
    %v3260 = vand.u32 %v1978, 4294901760
    %v3261 = vsub.f32 %v1978, %v3260
    %3262 = vmatpush1.msra.mxu0 %v3261
    %3263 = vmatprep.subr.mxu0 0.0
    %v3264 = vand.u32 %v1979, 4294901760
    %v3265 = vsub.f32 %v1979, %v3264
    %3266 = vmatpush1.msra.mxu0 %v3265
    %3267 = vmatprep.subr.mxu0 0.0
    %v3268 = vand.u32 %v1980, 4294901760
    %v3269 = vsub.f32 %v1980, %v3268
    %3270 = vmatpush1.msra.mxu0 %v3269
    %3271 = vmatprep.subr.mxu0 0.0
    %v3272 = vand.u32 %v1981, 4294901760
    %v3273 = vsub.f32 %v1981, %v3272
    %3274 = vmatpush1.msra.mxu0 %v3273
    %3275 = vmatprep.subr.mxu0 0.0
    %v3276 = vand.u32 %v1982, 4294901760
    %v3277 = vsub.f32 %v1982, %v3276
    %3278 = vmatpush1.msra.mxu0 %v3277
    %3279 = vmatprep.subr.mxu0 0.0
    %v3280 = vand.u32 %v1983, 4294901760
    %v3281 = vsub.f32 %v1983, %v3280
    %3282 = vmatpush1.msra.mxu0 %v3281
    %3283 = vmatprep.subr.mxu0 0.0
    %v3284 = vand.u32 %v1984, 4294901760
    %v3285 = vsub.f32 %v1984, %v3284
    %3286 = vmatpush1.msra.mxu0 %v3285
    %3287 = vmatprep.subr.mxu0 0.0
    %v3288 = vand.u32 %v1985, 4294901760
    %v3289 = vsub.f32 %v1985, %v3288
    %3290 = vmatpush1.msra.mxu0 %v3289
    %3291 = vmatprep.subr.mxu0 0.0
    %v3292 = vand.u32 %v1986, 4294901760
    %v3293 = vsub.f32 %v1986, %v3292
    %3294 = vmatpush1.msra.mxu0 %v3293
    %3295 = vmatprep.subr.mxu0 0.0
    %v3296 = vand.u32 %v1987, 4294901760
    %v3297 = vsub.f32 %v1987, %v3296
    %3298 = vmatpush1.msra.mxu0 %v3297
    %3299 = vmatprep.subr.mxu0 0.0
    %v3300 = vand.u32 %v1988, 4294901760
    %v3301 = vsub.f32 %v1988, %v3300
    %3302 = vmatpush1.msra.mxu0 %v3301
    %3303 = vmatprep.subr.mxu0 0.0
    %v3304 = vand.u32 %v1989, 4294901760
    %v3305 = vsub.f32 %v1989, %v3304
    %3306 = vmatpush1.msra.mxu0 %v3305
    %3307 = vmatprep.subr.mxu0 0.0
    %v3308 = vand.u32 %v1990, 4294901760
    %v3309 = vsub.f32 %v1990, %v3308
    %3310 = vmatpush1.msra.mxu0 %v3309
    %3311 = vmatprep.subr.mxu0 0.0
    %v3312 = vand.u32 %v1991, 4294901760
    %v3313 = vsub.f32 %v1991, %v3312
    %3314 = vmatpush1.msra.mxu0 %v3313
    %3315 = vmatprep.subr.mxu0 0.0
    %v3316 = vand.u32 %v1992, 4294901760
    %v3317 = vsub.f32 %v1992, %v3316
    %3318 = vmatpush1.msra.mxu0 %v3317
    %3319 = vmatprep.subr.mxu0 0.0
    %v3320 = vand.u32 %v1993, 4294901760
    %v3321 = vsub.f32 %v1993, %v3320
    %3322 = vmatpush1.msra.mxu0 %v3321
    %3323 = vmatprep.subr.mxu0 0.0
    %v3324 = vand.u32 %v1994, 4294901760
    %v3325 = vsub.f32 %v1994, %v3324
    %3326 = vmatpush1.msra.mxu0 %v3325
    %3327 = vmatprep.subr.mxu0 0.0
    %v3328 = vand.u32 %v1995, 4294901760
    %v3329 = vsub.f32 %v1995, %v3328
    %3330 = vmatpush1.msra.mxu0 %v3329
    %3331 = vmatprep.subr.mxu0 0.0
    %v3332 = vand.u32 %v1996, 4294901760
    %v3333 = vsub.f32 %v1996, %v3332
    %3334 = vmatpush1.msra.mxu0 %v3333
    %3335 = vmatprep.subr.mxu0 0.0
    %v3336 = vand.u32 %v1997, 4294901760
    %v3337 = vsub.f32 %v1997, %v3336
    %3338 = vmatpush1.msra.mxu0 %v3337
    %v3339 = vand.u32 %v1933, 4294901760
    %v3340 = vsub.f32 %v1933, %v3339
    %3341 = vmatprep.mubr.f32.mxu0 %v3340
    %v3342 = vand.u32 %v1932, 4294901760
    %v3343 = vsub.f32 %v1932, %v3342
    %3344 = vmatmul.mubr.f32.gmra.mrb[0].mxu0 %v3343
    %v3345 = vpop.f32.mrb[0].mxu0
    %v3346 = vadd.f32 %v3208, %v3345
    %v3347 = vpop.f32.mrb[0].mxu0
    %3348 = vdwg.mxu0
    %3349 = vmatprep.subr.mxu0 0.0
    %v3350 = vand.u32 %v1966, 4294901760
    %3351 = vmatpush1.msra.mxu0 %v3350
    %3352 = vmatprep.subr.mxu0 0.0
    %v3353 = vand.u32 %v1967, 4294901760
    %3354 = vmatpush1.msra.mxu0 %v3353
    %3355 = vmatprep.subr.mxu0 0.0
    %v3356 = vand.u32 %v1968, 4294901760
    %3357 = vmatpush1.msra.mxu0 %v3356
    %3358 = vmatprep.subr.mxu0 0.0
    %v3359 = vand.u32 %v1969, 4294901760
    %3360 = vmatpush1.msra.mxu0 %v3359
    %3361 = vmatprep.subr.mxu0 0.0
    %v3362 = vand.u32 %v1970, 4294901760
    %3363 = vmatpush1.msra.mxu0 %v3362
    %3364 = vmatprep.subr.mxu0 0.0
    %v3365 = vand.u32 %v1971, 4294901760
    %3366 = vmatpush1.msra.mxu0 %v3365
    %3367 = vmatprep.subr.mxu0 0.0
    %v3368 = vand.u32 %v1972, 4294901760
    %3369 = vmatpush1.msra.mxu0 %v3368
    %3370 = vmatprep.subr.mxu0 0.0
    %v3371 = vand.u32 %v1973, 4294901760
    %3372 = vmatpush1.msra.mxu0 %v3371
    %3373 = vmatprep.subr.mxu0 0.0
    %v3374 = vand.u32 %v1974, 4294901760
    %3375 = vmatpush1.msra.mxu0 %v3374
    %3376 = vmatprep.subr.mxu0 0.0
    %v3377 = vand.u32 %v1975, 4294901760
    %3378 = vmatpush1.msra.mxu0 %v3377
    %3379 = vmatprep.subr.mxu0 0.0
    %v3380 = vand.u32 %v1976, 4294901760
    %3381 = vmatpush1.msra.mxu0 %v3380
    %3382 = vmatprep.subr.mxu0 0.0
    %v3383 = vand.u32 %v1977, 4294901760
    %3384 = vmatpush1.msra.mxu0 %v3383
    %3385 = vmatprep.subr.mxu0 0.0
    %v3386 = vand.u32 %v1978, 4294901760
    %3387 = vmatpush1.msra.mxu0 %v3386
    %3388 = vmatprep.subr.mxu0 0.0
    %v3389 = vand.u32 %v1979, 4294901760
    %3390 = vmatpush1.msra.mxu0 %v3389
    %3391 = vmatprep.subr.mxu0 0.0
    %v3392 = vand.u32 %v1980, 4294901760
    %3393 = vmatpush1.msra.mxu0 %v3392
    %3394 = vmatprep.subr.mxu0 0.0
    %v3395 = vand.u32 %v1981, 4294901760
    %3396 = vmatpush1.msra.mxu0 %v3395
    %3397 = vmatprep.subr.mxu0 0.0
    %v3398 = vand.u32 %v1982, 4294901760
    %3399 = vmatpush1.msra.mxu0 %v3398
    %3400 = vmatprep.subr.mxu0 0.0
    %v3401 = vand.u32 %v1983, 4294901760
    %3402 = vmatpush1.msra.mxu0 %v3401
    %3403 = vmatprep.subr.mxu0 0.0
    %v3404 = vand.u32 %v1984, 4294901760
    %3405 = vmatpush1.msra.mxu0 %v3404
    %3406 = vmatprep.subr.mxu0 0.0
    %v3407 = vand.u32 %v1985, 4294901760
    %3408 = vmatpush1.msra.mxu0 %v3407
    %3409 = vmatprep.subr.mxu0 0.0
    %v3410 = vand.u32 %v1986, 4294901760
    %3411 = vmatpush1.msra.mxu0 %v3410
    %3412 = vmatprep.subr.mxu0 0.0
    %v3413 = vand.u32 %v1987, 4294901760
    %3414 = vmatpush1.msra.mxu0 %v3413
    %3415 = vmatprep.subr.mxu0 0.0
    %v3416 = vand.u32 %v1988, 4294901760
    %3417 = vmatpush1.msra.mxu0 %v3416
    %3418 = vmatprep.subr.mxu0 0.0
    %v3419 = vand.u32 %v1989, 4294901760
    %3420 = vmatpush1.msra.mxu0 %v3419
    %3421 = vmatprep.subr.mxu0 0.0
    %v3422 = vand.u32 %v1990, 4294901760
    %3423 = vmatpush1.msra.mxu0 %v3422
    %3424 = vmatprep.subr.mxu0 0.0
    %v3425 = vand.u32 %v1991, 4294901760
    %3426 = vmatpush1.msra.mxu0 %v3425
    %3427 = vmatprep.subr.mxu0 0.0
    %v3428 = vand.u32 %v1992, 4294901760
    %3429 = vmatpush1.msra.mxu0 %v3428
    %3430 = vmatprep.subr.mxu0 0.0
    %v3431 = vand.u32 %v1993, 4294901760
    %3432 = vmatpush1.msra.mxu0 %v3431
    %3433 = vmatprep.subr.mxu0 0.0
    %v3434 = vand.u32 %v1994, 4294901760
    %3435 = vmatpush1.msra.mxu0 %v3434
    %3436 = vmatprep.subr.mxu0 0.0
    %v3437 = vand.u32 %v1995, 4294901760
    %3438 = vmatpush1.msra.mxu0 %v3437
    %3439 = vmatprep.subr.mxu0 0.0
    %v3440 = vand.u32 %v1996, 4294901760
    %3441 = vmatpush1.msra.mxu0 %v3440
    %3442 = vmatprep.subr.mxu0 0.0
    %v3443 = vand.u32 %v1997, 4294901760
    %3444 = vmatpush1.msra.mxu0 %v3443
    %v3445 = vand.u32 %v1933, 4294901760
    %v3446 = vsub.f32 %v1933, %v3445
    %v3447 = vand.u32 %v3446, 4294901760
    %3448 = vmatprep.mubr.f32.mxu0 %v3447
    %v3449 = vand.u32 %v1932, 4294901760
    %v3450 = vsub.f32 %v1932, %v3449
    %v3451 = vand.u32 %v3450, 4294901760
    %3452 = vmatmul.mubr.f32.gmra.mrb[0].mxu0 %v3451
    %v3453 = vpop.f32.mrb[0].mxu0
    %v3454 = vadd.f32 %v3346, %v3453
    %v3455 = vpop.f32.mrb[0].mxu0
    %3456 = vdwg.mxu0
    %3457 = vmatprep.subr.mxu0 0.0
    %v3458 = vand.u32 %v1966, 4294901760
    %v3459 = vsub.f32 %v1966, %v3458
    %v3460 = vand.u32 %v3459, 4294901760
    %3461 = vmatpush1.msra.mxu0 %v3460
    %3462 = vmatprep.subr.mxu0 0.0
    %v3463 = vand.u32 %v1967, 4294901760
    %v3464 = vsub.f32 %v1967, %v3463
    %v3465 = vand.u32 %v3464, 4294901760
    %3466 = vmatpush1.msra.mxu0 %v3465
    %3467 = vmatprep.subr.mxu0 0.0
    %v3468 = vand.u32 %v1968, 4294901760
    %v3469 = vsub.f32 %v1968, %v3468
    %v3470 = vand.u32 %v3469, 4294901760
    %3471 = vmatpush1.msra.mxu0 %v3470
    %3472 = vmatprep.subr.mxu0 0.0
    %v3473 = vand.u32 %v1969, 4294901760
    %v3474 = vsub.f32 %v1969, %v3473
    %v3475 = vand.u32 %v3474, 4294901760
    %3476 = vmatpush1.msra.mxu0 %v3475
    %3477 = vmatprep.subr.mxu0 0.0
    %v3478 = vand.u32 %v1970, 4294901760
    %v3479 = vsub.f32 %v1970, %v3478
    %v3480 = vand.u32 %v3479, 4294901760
    %3481 = vmatpush1.msra.mxu0 %v3480
    %3482 = vmatprep.subr.mxu0 0.0
    %v3483 = vand.u32 %v1971, 4294901760
    %v3484 = vsub.f32 %v1971, %v3483
    %v3485 = vand.u32 %v3484, 4294901760
    %3486 = vmatpush1.msra.mxu0 %v3485
    %3487 = vmatprep.subr.mxu0 0.0
    %v3488 = vand.u32 %v1972, 4294901760
    %v3489 = vsub.f32 %v1972, %v3488
    %v3490 = vand.u32 %v3489, 4294901760
    %3491 = vmatpush1.msra.mxu0 %v3490
    %3492 = vmatprep.subr.mxu0 0.0
    %v3493 = vand.u32 %v1973, 4294901760
    %v3494 = vsub.f32 %v1973, %v3493
    %v3495 = vand.u32 %v3494, 4294901760
    %3496 = vmatpush1.msra.mxu0 %v3495
    %3497 = vmatprep.subr.mxu0 0.0
    %v3498 = vand.u32 %v1974, 4294901760
    %v3499 = vsub.f32 %v1974, %v3498
    %v3500 = vand.u32 %v3499, 4294901760
    %3501 = vmatpush1.msra.mxu0 %v3500
    %3502 = vmatprep.subr.mxu0 0.0
    %v3503 = vand.u32 %v1975, 4294901760
    %v3504 = vsub.f32 %v1975, %v3503
    %v3505 = vand.u32 %v3504, 4294901760
    %3506 = vmatpush1.msra.mxu0 %v3505
    %3507 = vmatprep.subr.mxu0 0.0
    %v3508 = vand.u32 %v1976, 4294901760
    %v3509 = vsub.f32 %v1976, %v3508
    %v3510 = vand.u32 %v3509, 4294901760
    %3511 = vmatpush1.msra.mxu0 %v3510
    %3512 = vmatprep.subr.mxu0 0.0
    %v3513 = vand.u32 %v1977, 4294901760
    %v3514 = vsub.f32 %v1977, %v3513
    %v3515 = vand.u32 %v3514, 4294901760
    %3516 = vmatpush1.msra.mxu0 %v3515
    %3517 = vmatprep.subr.mxu0 0.0
    %v3518 = vand.u32 %v1978, 4294901760
    %v3519 = vsub.f32 %v1978, %v3518
    %v3520 = vand.u32 %v3519, 4294901760
    %3521 = vmatpush1.msra.mxu0 %v3520
    %3522 = vmatprep.subr.mxu0 0.0
    %v3523 = vand.u32 %v1979, 4294901760
    %v3524 = vsub.f32 %v1979, %v3523
    %v3525 = vand.u32 %v3524, 4294901760
    %3526 = vmatpush1.msra.mxu0 %v3525
    %3527 = vmatprep.subr.mxu0 0.0
    %v3528 = vand.u32 %v1980, 4294901760
    %v3529 = vsub.f32 %v1980, %v3528
    %v3530 = vand.u32 %v3529, 4294901760
    %3531 = vmatpush1.msra.mxu0 %v3530
    %3532 = vmatprep.subr.mxu0 0.0
    %v3533 = vand.u32 %v1981, 4294901760
    %v3534 = vsub.f32 %v1981, %v3533
    %v3535 = vand.u32 %v3534, 4294901760
    %3536 = vmatpush1.msra.mxu0 %v3535
    %3537 = vmatprep.subr.mxu0 0.0
    %v3538 = vand.u32 %v1982, 4294901760
    %v3539 = vsub.f32 %v1982, %v3538
    %v3540 = vand.u32 %v3539, 4294901760
    %3541 = vmatpush1.msra.mxu0 %v3540
    %3542 = vmatprep.subr.mxu0 0.0
    %v3543 = vand.u32 %v1983, 4294901760
    %v3544 = vsub.f32 %v1983, %v3543
    %v3545 = vand.u32 %v3544, 4294901760
    %3546 = vmatpush1.msra.mxu0 %v3545
    %3547 = vmatprep.subr.mxu0 0.0
    %v3548 = vand.u32 %v1984, 4294901760
    %v3549 = vsub.f32 %v1984, %v3548
    %v3550 = vand.u32 %v3549, 4294901760
    %3551 = vmatpush1.msra.mxu0 %v3550
    %3552 = vmatprep.subr.mxu0 0.0
    %v3553 = vand.u32 %v1985, 4294901760
    %v3554 = vsub.f32 %v1985, %v3553
    %v3555 = vand.u32 %v3554, 4294901760
    %3556 = vmatpush1.msra.mxu0 %v3555
    %3557 = vmatprep.subr.mxu0 0.0
    %v3558 = vand.u32 %v1986, 4294901760
    %v3559 = vsub.f32 %v1986, %v3558
    %v3560 = vand.u32 %v3559, 4294901760
    %3561 = vmatpush1.msra.mxu0 %v3560
    %3562 = vmatprep.subr.mxu0 0.0
    %v3563 = vand.u32 %v1987, 4294901760
    %v3564 = vsub.f32 %v1987, %v3563
    %v3565 = vand.u32 %v3564, 4294901760
    %3566 = vmatpush1.msra.mxu0 %v3565
    %3567 = vmatprep.subr.mxu0 0.0
    %v3568 = vand.u32 %v1988, 4294901760
    %v3569 = vsub.f32 %v1988, %v3568
    %v3570 = vand.u32 %v3569, 4294901760
    %3571 = vmatpush1.msra.mxu0 %v3570
    %3572 = vmatprep.subr.mxu0 0.0
    %v3573 = vand.u32 %v1989, 4294901760
    %v3574 = vsub.f32 %v1989, %v3573
    %v3575 = vand.u32 %v3574, 4294901760
    %3576 = vmatpush1.msra.mxu0 %v3575
    %3577 = vmatprep.subr.mxu0 0.0
    %v3578 = vand.u32 %v1990, 4294901760
    %v3579 = vsub.f32 %v1990, %v3578
    %v3580 = vand.u32 %v3579, 4294901760
    %3581 = vmatpush1.msra.mxu0 %v3580
    %3582 = vmatprep.subr.mxu0 0.0
    %v3583 = vand.u32 %v1991, 4294901760
    %v3584 = vsub.f32 %v1991, %v3583
    %v3585 = vand.u32 %v3584, 4294901760
    %3586 = vmatpush1.msra.mxu0 %v3585
    %3587 = vmatprep.subr.mxu0 0.0
    %v3588 = vand.u32 %v1992, 4294901760
    %v3589 = vsub.f32 %v1992, %v3588
    %v3590 = vand.u32 %v3589, 4294901760
    %3591 = vmatpush1.msra.mxu0 %v3590
    %3592 = vmatprep.subr.mxu0 0.0
    %v3593 = vand.u32 %v1993, 4294901760
    %v3594 = vsub.f32 %v1993, %v3593
    %v3595 = vand.u32 %v3594, 4294901760
    %3596 = vmatpush1.msra.mxu0 %v3595
    %3597 = vmatprep.subr.mxu0 0.0
    %v3598 = vand.u32 %v1994, 4294901760
    %v3599 = vsub.f32 %v1994, %v3598
    %v3600 = vand.u32 %v3599, 4294901760
    %3601 = vmatpush1.msra.mxu0 %v3600
    %3602 = vmatprep.subr.mxu0 0.0
    %v3603 = vand.u32 %v1995, 4294901760
    %v3604 = vsub.f32 %v1995, %v3603
    %v3605 = vand.u32 %v3604, 4294901760
    %3606 = vmatpush1.msra.mxu0 %v3605
    %3607 = vmatprep.subr.mxu0 0.0
    %v3608 = vand.u32 %v1996, 4294901760
    %v3609 = vsub.f32 %v1996, %v3608
    %v3610 = vand.u32 %v3609, 4294901760
    %3611 = vmatpush1.msra.mxu0 %v3610
    %3612 = vmatprep.subr.mxu0 0.0
    %v3613 = vand.u32 %v1997, 4294901760
    %v3614 = vsub.f32 %v1997, %v3613
    %v3615 = vand.u32 %v3614, 4294901760
    %3616 = vmatpush1.msra.mxu0 %v3615
    %v3617 = vand.u32 %v1933, 4294901760
    %3618 = vmatprep.mubr.f32.mxu0 %v3617
    %v3619 = vand.u32 %v1932, 4294901760
    %3620 = vmatmul.mubr.f32.gmra.mrb[0].mxu0 %v3619
    %v3621 = vpop.f32.mrb[0].mxu0
    %v3622 = vadd.f32 %v3454, %v3621
    %v3623 = vpop.f32.mrb[0].mxu0
    %3624 = vdwg.mxu0
    %3625 = vmatprep.subr.mxu0 0.0
    %v3626 = vand.u32 %v1966, 4294901760
    %3627 = vmatpush1.msra.mxu0 %v3626
    %3628 = vmatprep.subr.mxu0 0.0
    %v3629 = vand.u32 %v1967, 4294901760
    %3630 = vmatpush1.msra.mxu0 %v3629
    %3631 = vmatprep.subr.mxu0 0.0
    %v3632 = vand.u32 %v1968, 4294901760
    %3633 = vmatpush1.msra.mxu0 %v3632
    %3634 = vmatprep.subr.mxu0 0.0
    %v3635 = vand.u32 %v1969, 4294901760
    %3636 = vmatpush1.msra.mxu0 %v3635
    %3637 = vmatprep.subr.mxu0 0.0
    %v3638 = vand.u32 %v1970, 4294901760
    %3639 = vmatpush1.msra.mxu0 %v3638
    %3640 = vmatprep.subr.mxu0 0.0
    %v3641 = vand.u32 %v1971, 4294901760
    %3642 = vmatpush1.msra.mxu0 %v3641
    %3643 = vmatprep.subr.mxu0 0.0
    %v3644 = vand.u32 %v1972, 4294901760
    %3645 = vmatpush1.msra.mxu0 %v3644
    %3646 = vmatprep.subr.mxu0 0.0
    %v3647 = vand.u32 %v1973, 4294901760
    %3648 = vmatpush1.msra.mxu0 %v3647
    %3649 = vmatprep.subr.mxu0 0.0
    %v3650 = vand.u32 %v1974, 4294901760
    %3651 = vmatpush1.msra.mxu0 %v3650
    %3652 = vmatprep.subr.mxu0 0.0
    %v3653 = vand.u32 %v1975, 4294901760
    %3654 = vmatpush1.msra.mxu0 %v3653
    %3655 = vmatprep.subr.mxu0 0.0
    %v3656 = vand.u32 %v1976, 4294901760
    %3657 = vmatpush1.msra.mxu0 %v3656
    %3658 = vmatprep.subr.mxu0 0.0
    %v3659 = vand.u32 %v1977, 4294901760
    %3660 = vmatpush1.msra.mxu0 %v3659
    %3661 = vmatprep.subr.mxu0 0.0
    %v3662 = vand.u32 %v1978, 4294901760
    %3663 = vmatpush1.msra.mxu0 %v3662
    %3664 = vmatprep.subr.mxu0 0.0
    %v3665 = vand.u32 %v1979, 4294901760
    %3666 = vmatpush1.msra.mxu0 %v3665
    %3667 = vmatprep.subr.mxu0 0.0
    %v3668 = vand.u32 %v1980, 4294901760
    %3669 = vmatpush1.msra.mxu0 %v3668
    %3670 = vmatprep.subr.mxu0 0.0
    %v3671 = vand.u32 %v1981, 4294901760
    %3672 = vmatpush1.msra.mxu0 %v3671
    %3673 = vmatprep.subr.mxu0 0.0
    %v3674 = vand.u32 %v1982, 4294901760
    %3675 = vmatpush1.msra.mxu0 %v3674
    %3676 = vmatprep.subr.mxu0 0.0
    %v3677 = vand.u32 %v1983, 4294901760
    %3678 = vmatpush1.msra.mxu0 %v3677
    %3679 = vmatprep.subr.mxu0 0.0
    %v3680 = vand.u32 %v1984, 4294901760
    %3681 = vmatpush1.msra.mxu0 %v3680
    %3682 = vmatprep.subr.mxu0 0.0
    %v3683 = vand.u32 %v1985, 4294901760
    %3684 = vmatpush1.msra.mxu0 %v3683
    %3685 = vmatprep.subr.mxu0 0.0
    %v3686 = vand.u32 %v1986, 4294901760
    %3687 = vmatpush1.msra.mxu0 %v3686
    %3688 = vmatprep.subr.mxu0 0.0
    %v3689 = vand.u32 %v1987, 4294901760
    %3690 = vmatpush1.msra.mxu0 %v3689
    %3691 = vmatprep.subr.mxu0 0.0
    %v3692 = vand.u32 %v1988, 4294901760
    %3693 = vmatpush1.msra.mxu0 %v3692
    %3694 = vmatprep.subr.mxu0 0.0
    %v3695 = vand.u32 %v1989, 4294901760
    %3696 = vmatpush1.msra.mxu0 %v3695
    %3697 = vmatprep.subr.mxu0 0.0
    %v3698 = vand.u32 %v1990, 4294901760
    %3699 = vmatpush1.msra.mxu0 %v3698
    %3700 = vmatprep.subr.mxu0 0.0
    %v3701 = vand.u32 %v1991, 4294901760
    %3702 = vmatpush1.msra.mxu0 %v3701
    %3703 = vmatprep.subr.mxu0 0.0
    %v3704 = vand.u32 %v1992, 4294901760
    %3705 = vmatpush1.msra.mxu0 %v3704
    %3706 = vmatprep.subr.mxu0 0.0
    %v3707 = vand.u32 %v1993, 4294901760
    %3708 = vmatpush1.msra.mxu0 %v3707
    %3709 = vmatprep.subr.mxu0 0.0
    %v3710 = vand.u32 %v1994, 4294901760
    %3711 = vmatpush1.msra.mxu0 %v3710
    %3712 = vmatprep.subr.mxu0 0.0
    %v3713 = vand.u32 %v1995, 4294901760
    %3714 = vmatpush1.msra.mxu0 %v3713
    %3715 = vmatprep.subr.mxu0 0.0
    %v3716 = vand.u32 %v1996, 4294901760
    %3717 = vmatpush1.msra.mxu0 %v3716
    %3718 = vmatprep.subr.mxu0 0.0
    %v3719 = vand.u32 %v1997, 4294901760
    %3720 = vmatpush1.msra.mxu0 %v3719
    %v3721 = vand.u32 %v1933, 4294901760
    %3722 = vmatprep.mubr.f32.mxu0 %v3721
    %v3723 = vand.u32 %v1932, 4294901760
    %3724 = vmatmul.mubr.f32.gmra.mrb[0].mxu0 %v3723
    %v3725 = vpop.f32.mrb[0].mxu0
    %v3726 = vadd.f32 %v3622, %v3725
    %v3727 = vpop.f32.mrb[0].mxu0
    %3728 = vdwg.mxu0
    %v3729 = vld [vmem:[%s7] sm:$0xff]
    %v3730 = vld [vmem:[%s7 + $0x8] sm:$0xff]
    %v3731 = vld [vmem:[%s7 + $0x10] sm:$0xff]
    %v3732 = vld [vmem:[%s7 + $0x18] sm:$0xff]
    %v3733 = vld [vmem:[%s7 + $0x20] sm:$0xff]
    %v3734 = vld [vmem:[%s7 + $0x28] sm:$0xff]
    %v3735 = vld [vmem:[%s7 + $0x30] sm:$0xff]
    %v3736 = vld [vmem:[%s7 + $0x38] sm:$0xff]
    %v3737 = vld [vmem:[%s7 + $0x40] sm:$0xff]
    %v3738 = vld [vmem:[%s7 + $0x48] sm:$0xff]
    %v3739 = vld [vmem:[%s7 + $0x50] sm:$0xff]
    %v3740 = vld [vmem:[%s7 + $0x58] sm:$0xff]
    %v3741 = vld [vmem:[%s7 + $0x60] sm:$0xff]
    %v3742 = vld [vmem:[%s7 + $0x68] sm:$0xff]
    %v3743 = vld [vmem:[%s7 + $0x70] sm:$0xff]
    %v3744 = vld [vmem:[%s7 + $0x78] sm:$0xff]
    %v3745 = vld [vmem:[%s8] sm:$0x1]
    %v3747 = vlaneseq
    %v3748 = vshrl.u32 %v3747, 7
    %v3749 = vsub.s32 0, %v3748
    %v3750 = vrot.slane %v3745, %v3749
    %3752 = vmatprep.subr.mxu0 0.0
    %v3753 = vand.u32 %v3729, 4294901760
    %3754 = vmatpush1.msra.mxu0 %v3753
    %3755 = vmatprep.subr.mxu0 0.0
    %v3756 = vand.u32 %v3730, 4294901760
    %3757 = vmatpush1.msra.mxu0 %v3756
    %3758 = vmatprep.subr.mxu0 0.0
    %v3759 = vand.u32 %v3731, 4294901760
    %3760 = vmatpush1.msra.mxu0 %v3759
    %3761 = vmatprep.subr.mxu0 0.0
    %v3762 = vand.u32 %v3732, 4294901760
    %3763 = vmatpush1.msra.mxu0 %v3762
    %3764 = vmatprep.subr.mxu0 0.0
    %v3765 = vand.u32 %v3733, 4294901760
    %3766 = vmatpush1.msra.mxu0 %v3765
    %3767 = vmatprep.subr.mxu0 0.0
    %v3768 = vand.u32 %v3734, 4294901760
    %3769 = vmatpush1.msra.mxu0 %v3768
    %3770 = vmatprep.subr.mxu0 0.0
    %v3771 = vand.u32 %v3735, 4294901760
    %3772 = vmatpush1.msra.mxu0 %v3771
    %3773 = vmatprep.subr.mxu0 0.0
    %v3774 = vand.u32 %v3736, 4294901760
    %3775 = vmatpush1.msra.mxu0 %v3774
    %3776 = vmatprep.subr.mxu0 0.0
    %v3777 = vand.u32 %v3737, 4294901760
    %3778 = vmatpush1.msra.mxu0 %v3777
    %3779 = vmatprep.subr.mxu0 0.0
    %v3780 = vand.u32 %v3738, 4294901760
    %3781 = vmatpush1.msra.mxu0 %v3780
    %3782 = vmatprep.subr.mxu0 0.0
    %v3783 = vand.u32 %v3739, 4294901760
    %3784 = vmatpush1.msra.mxu0 %v3783
    %3785 = vmatprep.subr.mxu0 0.0
    %v3786 = vand.u32 %v3740, 4294901760
    %3787 = vmatpush1.msra.mxu0 %v3786
    %3788 = vmatprep.subr.mxu0 0.0
    %v3789 = vand.u32 %v3741, 4294901760
    %3790 = vmatpush1.msra.mxu0 %v3789
    %3791 = vmatprep.subr.mxu0 0.0
    %v3792 = vand.u32 %v3742, 4294901760
    %3793 = vmatpush1.msra.mxu0 %v3792
    %3794 = vmatprep.subr.mxu0 0.0
    %v3795 = vand.u32 %v3743, 4294901760
    %3796 = vmatpush1.msra.mxu0 %v3795
    %3797 = vmatprep.subr.mxu0 0.0
    %v3798 = vand.u32 %v3744, 4294901760
    %3799 = vmatpush1.msra.mxu0 %v3798
    %3800 = vmatprep.subr.mxu0 0.0
    %3801 = vmatpush1.msra.mxu0 0.0
    %3802 = vmatprep.subr.mxu0 0.0
    %3803 = vmatpush1.msra.mxu0 0.0
    %3804 = vmatprep.subr.mxu0 0.0
    %3805 = vmatpush1.msra.mxu0 0.0
    %3806 = vmatprep.subr.mxu0 0.0
    %3807 = vmatpush1.msra.mxu0 0.0
    %3808 = vmatprep.subr.mxu0 0.0
    %3809 = vmatpush1.msra.mxu0 0.0
    %3810 = vmatprep.subr.mxu0 0.0
    %3811 = vmatpush1.msra.mxu0 0.0
    %3812 = vmatprep.subr.mxu0 0.0
    %3813 = vmatpush1.msra.mxu0 0.0
    %3814 = vmatprep.subr.mxu0 0.0
    %3815 = vmatpush1.msra.mxu0 0.0
    %3816 = vmatprep.subr.mxu0 0.0
    %3817 = vmatpush1.msra.mxu0 0.0
    %3818 = vmatprep.subr.mxu0 0.0
    %3819 = vmatpush1.msra.mxu0 0.0
    %3820 = vmatprep.subr.mxu0 0.0
    %3821 = vmatpush1.msra.mxu0 0.0
    %3822 = vmatprep.subr.mxu0 0.0
    %3823 = vmatpush1.msra.mxu0 0.0
    %3824 = vmatprep.subr.mxu0 0.0
    %3825 = vmatpush1.msra.mxu0 0.0
    %3826 = vmatprep.subr.mxu0 0.0
    %3827 = vmatpush1.msra.mxu0 0.0
    %3828 = vmatprep.subr.mxu0 0.0
    %3829 = vmatpush1.msra.mxu0 0.0
    %3830 = vmatprep.subr.mxu0 0.0
    %3831 = vmatpush1.msra.mxu0 0.0
    %3832 = vmatprep.mubr.f32.mxu0 0.0
    %v3833 = vand.u32 %v3726, 4294901760
    %v3834 = vsub.f32 %v3726, %v3833
    %v3835 = vand.u32 %v3834, 4294901760
    %v3836 = vsub.f32 %v3834, %v3835
    %v3837 = vand.u32 %v3836, 4294901760
    %3838 = vmatmul.mubr.f32.gmra.mrb[0].mxu0 %v3837
    %v3839 = vpop.f32.mrb[0].mxu0
    %v3840 = vadd.f32 %v3750, %v3839
    %v3841 = vpop.f32.mrb[0].mxu0
    %3842 = vdwg.mxu0
    %3843 = vmatprep.subr.mxu0 0.0
    %v3844 = vand.u32 %v3729, 4294901760
    %v3845 = vsub.f32 %v3729, %v3844
    %v3846 = vand.u32 %v3845, 4294901760
    %v3847 = vsub.f32 %v3845, %v3846
    %v3848 = vand.u32 %v3847, 4294901760
    %3849 = vmatpush1.msra.mxu0 %v3848
    %3850 = vmatprep.subr.mxu0 0.0
    %v3851 = vand.u32 %v3730, 4294901760
    %v3852 = vsub.f32 %v3730, %v3851
    %v3853 = vand.u32 %v3852, 4294901760
    %v3854 = vsub.f32 %v3852, %v3853
    %v3855 = vand.u32 %v3854, 4294901760
    %3856 = vmatpush1.msra.mxu0 %v3855
    %3857 = vmatprep.subr.mxu0 0.0
    %v3858 = vand.u32 %v3731, 4294901760
    %v3859 = vsub.f32 %v3731, %v3858
    %v3860 = vand.u32 %v3859, 4294901760
    %v3861 = vsub.f32 %v3859, %v3860
    %v3862 = vand.u32 %v3861, 4294901760
    %3863 = vmatpush1.msra.mxu0 %v3862
    %3864 = vmatprep.subr.mxu0 0.0
    %v3865 = vand.u32 %v3732, 4294901760
    %v3866 = vsub.f32 %v3732, %v3865
    %v3867 = vand.u32 %v3866, 4294901760
    %v3868 = vsub.f32 %v3866, %v3867
    %v3869 = vand.u32 %v3868, 4294901760
    %3870 = vmatpush1.msra.mxu0 %v3869
    %3871 = vmatprep.subr.mxu0 0.0
    %v3872 = vand.u32 %v3733, 4294901760
    %v3873 = vsub.f32 %v3733, %v3872
    %v3874 = vand.u32 %v3873, 4294901760
    %v3875 = vsub.f32 %v3873, %v3874
    %v3876 = vand.u32 %v3875, 4294901760
    %3877 = vmatpush1.msra.mxu0 %v3876
    %3878 = vmatprep.subr.mxu0 0.0
    %v3879 = vand.u32 %v3734, 4294901760
    %v3880 = vsub.f32 %v3734, %v3879
    %v3881 = vand.u32 %v3880, 4294901760
    %v3882 = vsub.f32 %v3880, %v3881
    %v3883 = vand.u32 %v3882, 4294901760
    %3884 = vmatpush1.msra.mxu0 %v3883
    %3885 = vmatprep.subr.mxu0 0.0
    %v3886 = vand.u32 %v3735, 4294901760
    %v3887 = vsub.f32 %v3735, %v3886
    %v3888 = vand.u32 %v3887, 4294901760
    %v3889 = vsub.f32 %v3887, %v3888
    %v3890 = vand.u32 %v3889, 4294901760
    %3891 = vmatpush1.msra.mxu0 %v3890
    %3892 = vmatprep.subr.mxu0 0.0
    %v3893 = vand.u32 %v3736, 4294901760
    %v3894 = vsub.f32 %v3736, %v3893
    %v3895 = vand.u32 %v3894, 4294901760
    %v3896 = vsub.f32 %v3894, %v3895
    %v3897 = vand.u32 %v3896, 4294901760
    %3898 = vmatpush1.msra.mxu0 %v3897
    %3899 = vmatprep.subr.mxu0 0.0
    %v3900 = vand.u32 %v3737, 4294901760
    %v3901 = vsub.f32 %v3737, %v3900
    %v3902 = vand.u32 %v3901, 4294901760
    %v3903 = vsub.f32 %v3901, %v3902
    %v3904 = vand.u32 %v3903, 4294901760
    %3905 = vmatpush1.msra.mxu0 %v3904
    %3906 = vmatprep.subr.mxu0 0.0
    %v3907 = vand.u32 %v3738, 4294901760
    %v3908 = vsub.f32 %v3738, %v3907
    %v3909 = vand.u32 %v3908, 4294901760
    %v3910 = vsub.f32 %v3908, %v3909
    %v3911 = vand.u32 %v3910, 4294901760
    %3912 = vmatpush1.msra.mxu0 %v3911
    %3913 = vmatprep.subr.mxu0 0.0
    %v3914 = vand.u32 %v3739, 4294901760
    %v3915 = vsub.f32 %v3739, %v3914
    %v3916 = vand.u32 %v3915, 4294901760
    %v3917 = vsub.f32 %v3915, %v3916
    %v3918 = vand.u32 %v3917, 4294901760
    %3919 = vmatpush1.msra.mxu0 %v3918
    %3920 = vmatprep.subr.mxu0 0.0
    %v3921 = vand.u32 %v3740, 4294901760
    %v3922 = vsub.f32 %v3740, %v3921
    %v3923 = vand.u32 %v3922, 4294901760
    %v3924 = vsub.f32 %v3922, %v3923
    %v3925 = vand.u32 %v3924, 4294901760
    %3926 = vmatpush1.msra.mxu0 %v3925
    %3927 = vmatprep.subr.mxu0 0.0
    %v3928 = vand.u32 %v3741, 4294901760
    %v3929 = vsub.f32 %v3741, %v3928
    %v3930 = vand.u32 %v3929, 4294901760
    %v3931 = vsub.f32 %v3929, %v3930
    %v3932 = vand.u32 %v3931, 4294901760
    %3933 = vmatpush1.msra.mxu0 %v3932
    %3934 = vmatprep.subr.mxu0 0.0
    %v3935 = vand.u32 %v3742, 4294901760
    %v3936 = vsub.f32 %v3742, %v3935
    %v3937 = vand.u32 %v3936, 4294901760
    %v3938 = vsub.f32 %v3936, %v3937
    %v3939 = vand.u32 %v3938, 4294901760
    %3940 = vmatpush1.msra.mxu0 %v3939
    %3941 = vmatprep.subr.mxu0 0.0
    %v3942 = vand.u32 %v3743, 4294901760
    %v3943 = vsub.f32 %v3743, %v3942
    %v3944 = vand.u32 %v3943, 4294901760
    %v3945 = vsub.f32 %v3943, %v3944
    %v3946 = vand.u32 %v3945, 4294901760
    %3947 = vmatpush1.msra.mxu0 %v3946
    %3948 = vmatprep.subr.mxu0 0.0
    %v3949 = vand.u32 %v3744, 4294901760
    %v3950 = vsub.f32 %v3744, %v3949
    %v3951 = vand.u32 %v3950, 4294901760
    %v3952 = vsub.f32 %v3950, %v3951
    %v3953 = vand.u32 %v3952, 4294901760
    %3954 = vmatpush1.msra.mxu0 %v3953
    %3955 = vmatprep.subr.mxu0 0.0
    %3956 = vmatpush1.msra.mxu0 0.0
    %3957 = vmatprep.subr.mxu0 0.0
    %3958 = vmatpush1.msra.mxu0 0.0
    %3959 = vmatprep.subr.mxu0 0.0
    %3960 = vmatpush1.msra.mxu0 0.0
    %3961 = vmatprep.subr.mxu0 0.0
    %3962 = vmatpush1.msra.mxu0 0.0
    %3963 = vmatprep.subr.mxu0 0.0
    %3964 = vmatpush1.msra.mxu0 0.0
    %3965 = vmatprep.subr.mxu0 0.0
    %3966 = vmatpush1.msra.mxu0 0.0
    %3967 = vmatprep.subr.mxu0 0.0
    %3968 = vmatpush1.msra.mxu0 0.0
    %3969 = vmatprep.subr.mxu0 0.0
    %3970 = vmatpush1.msra.mxu0 0.0
    %3971 = vmatprep.subr.mxu0 0.0
    %3972 = vmatpush1.msra.mxu0 0.0
    %3973 = vmatprep.subr.mxu0 0.0
    %3974 = vmatpush1.msra.mxu0 0.0
    %3975 = vmatprep.subr.mxu0 0.0
    %3976 = vmatpush1.msra.mxu0 0.0
    %3977 = vmatprep.subr.mxu0 0.0
    %3978 = vmatpush1.msra.mxu0 0.0
    %3979 = vmatprep.subr.mxu0 0.0
    %3980 = vmatpush1.msra.mxu0 0.0
    %3981 = vmatprep.subr.mxu0 0.0
    %3982 = vmatpush1.msra.mxu0 0.0
    %3983 = vmatprep.subr.mxu0 0.0
    %3984 = vmatpush1.msra.mxu0 0.0
    %3985 = vmatprep.subr.mxu0 0.0
    %3986 = vmatpush1.msra.mxu0 0.0
    %3987 = vmatprep.mubr.f32.mxu0 0.0
    %v3988 = vand.u32 %v3726, 4294901760
    %3989 = vmatmul.mubr.f32.gmra.mrb[0].mxu0 %v3988
    %v3990 = vpop.f32.mrb[0].mxu0
    %v3991 = vadd.f32 %v3840, %v3990
    %v3992 = vpop.f32.mrb[0].mxu0
    %3993 = vdwg.mxu0
    %3994 = vmatprep.subr.mxu0 0.0
    %v3995 = vand.u32 %v3729, 4294901760
    %v3996 = vsub.f32 %v3729, %v3995
    %3997 = vmatpush1.msra.mxu0 %v3996
    %3998 = vmatprep.subr.mxu0 0.0
    %v3999 = vand.u32 %v3730, 4294901760
    %v4000 = vsub.f32 %v3730, %v3999
    %4001 = vmatpush1.msra.mxu0 %v4000
    %4002 = vmatprep.subr.mxu0 0.0
    %v4003 = vand.u32 %v3731, 4294901760
    %v4004 = vsub.f32 %v3731, %v4003
    %4005 = vmatpush1.msra.mxu0 %v4004
    %4006 = vmatprep.subr.mxu0 0.0
    %v4007 = vand.u32 %v3732, 4294901760
    %v4008 = vsub.f32 %v3732, %v4007
    %4009 = vmatpush1.msra.mxu0 %v4008
    %4010 = vmatprep.subr.mxu0 0.0
    %v4011 = vand.u32 %v3733, 4294901760
    %v4012 = vsub.f32 %v3733, %v4011
    %4013 = vmatpush1.msra.mxu0 %v4012
    %4014 = vmatprep.subr.mxu0 0.0
    %v4015 = vand.u32 %v3734, 4294901760
    %v4016 = vsub.f32 %v3734, %v4015
    %4017 = vmatpush1.msra.mxu0 %v4016
    %4018 = vmatprep.subr.mxu0 0.0
    %v4019 = vand.u32 %v3735, 4294901760
    %v4020 = vsub.f32 %v3735, %v4019
    %4021 = vmatpush1.msra.mxu0 %v4020
    %4022 = vmatprep.subr.mxu0 0.0
    %v4023 = vand.u32 %v3736, 4294901760
    %v4024 = vsub.f32 %v3736, %v4023
    %4025 = vmatpush1.msra.mxu0 %v4024
    %4026 = vmatprep.subr.mxu0 0.0
    %v4027 = vand.u32 %v3737, 4294901760
    %v4028 = vsub.f32 %v3737, %v4027
    %4029 = vmatpush1.msra.mxu0 %v4028
    %4030 = vmatprep.subr.mxu0 0.0
    %v4031 = vand.u32 %v3738, 4294901760
    %v4032 = vsub.f32 %v3738, %v4031
    %4033 = vmatpush1.msra.mxu0 %v4032
    %4034 = vmatprep.subr.mxu0 0.0
    %v4035 = vand.u32 %v3739, 4294901760
    %v4036 = vsub.f32 %v3739, %v4035
    %4037 = vmatpush1.msra.mxu0 %v4036
    %4038 = vmatprep.subr.mxu0 0.0
    %v4039 = vand.u32 %v3740, 4294901760
    %v4040 = vsub.f32 %v3740, %v4039
    %4041 = vmatpush1.msra.mxu0 %v4040
    %4042 = vmatprep.subr.mxu0 0.0
    %v4043 = vand.u32 %v3741, 4294901760
    %v4044 = vsub.f32 %v3741, %v4043
    %4045 = vmatpush1.msra.mxu0 %v4044
    %4046 = vmatprep.subr.mxu0 0.0
    %v4047 = vand.u32 %v3742, 4294901760
    %v4048 = vsub.f32 %v3742, %v4047
    %4049 = vmatpush1.msra.mxu0 %v4048
    %4050 = vmatprep.subr.mxu0 0.0
    %v4051 = vand.u32 %v3743, 4294901760
    %v4052 = vsub.f32 %v3743, %v4051
    %4053 = vmatpush1.msra.mxu0 %v4052
    %4054 = vmatprep.subr.mxu0 0.0
    %v4055 = vand.u32 %v3744, 4294901760
    %v4056 = vsub.f32 %v3744, %v4055
    %4057 = vmatpush1.msra.mxu0 %v4056
    %4058 = vmatprep.subr.mxu0 0.0
    %4059 = vmatpush1.msra.mxu0 0.0
    %4060 = vmatprep.subr.mxu0 0.0
    %4061 = vmatpush1.msra.mxu0 0.0
    %4062 = vmatprep.subr.mxu0 0.0
    %4063 = vmatpush1.msra.mxu0 0.0
    %4064 = vmatprep.subr.mxu0 0.0
    %4065 = vmatpush1.msra.mxu0 0.0
    %4066 = vmatprep.subr.mxu0 0.0
    %4067 = vmatpush1.msra.mxu0 0.0
    %4068 = vmatprep.subr.mxu0 0.0
    %4069 = vmatpush1.msra.mxu0 0.0
    %4070 = vmatprep.subr.mxu0 0.0
    %4071 = vmatpush1.msra.mxu0 0.0
    %4072 = vmatprep.subr.mxu0 0.0
    %4073 = vmatpush1.msra.mxu0 0.0
    %4074 = vmatprep.subr.mxu0 0.0
    %4075 = vmatpush1.msra.mxu0 0.0
    %4076 = vmatprep.subr.mxu0 0.0
    %4077 = vmatpush1.msra.mxu0 0.0
    %4078 = vmatprep.subr.mxu0 0.0
    %4079 = vmatpush1.msra.mxu0 0.0
    %4080 = vmatprep.subr.mxu0 0.0
    %4081 = vmatpush1.msra.mxu0 0.0
    %4082 = vmatprep.subr.mxu0 0.0
    %4083 = vmatpush1.msra.mxu0 0.0
    %4084 = vmatprep.subr.mxu0 0.0
    %4085 = vmatpush1.msra.mxu0 0.0
    %4086 = vmatprep.subr.mxu0 0.0
    %4087 = vmatpush1.msra.mxu0 0.0
    %4088 = vmatprep.subr.mxu0 0.0
    %4089 = vmatpush1.msra.mxu0 0.0
    %4090 = vmatprep.mubr.f32.mxu0 0.0
    %v4091 = vand.u32 %v3726, 4294901760
    %v4092 = vsub.f32 %v3726, %v4091
    %4093 = vmatmul.mubr.f32.gmra.mrb[0].mxu0 %v4092
    %v4094 = vpop.f32.mrb[0].mxu0
    %v4095 = vadd.f32 %v3991, %v4094
    %v4096 = vpop.f32.mrb[0].mxu0
    %4097 = vdwg.mxu0
    %4098 = vmatprep.subr.mxu0 0.0
    %v4099 = vand.u32 %v3729, 4294901760
    %4100 = vmatpush1.msra.mxu0 %v4099
    %4101 = vmatprep.subr.mxu0 0.0
    %v4102 = vand.u32 %v3730, 4294901760
    %4103 = vmatpush1.msra.mxu0 %v4102
    %4104 = vmatprep.subr.mxu0 0.0
    %v4105 = vand.u32 %v3731, 4294901760
    %4106 = vmatpush1.msra.mxu0 %v4105
    %4107 = vmatprep.subr.mxu0 0.0
    %v4108 = vand.u32 %v3732, 4294901760
    %4109 = vmatpush1.msra.mxu0 %v4108
    %4110 = vmatprep.subr.mxu0 0.0
    %v4111 = vand.u32 %v3733, 4294901760
    %4112 = vmatpush1.msra.mxu0 %v4111
    %4113 = vmatprep.subr.mxu0 0.0
    %v4114 = vand.u32 %v3734, 4294901760
    %4115 = vmatpush1.msra.mxu0 %v4114
    %4116 = vmatprep.subr.mxu0 0.0
    %v4117 = vand.u32 %v3735, 4294901760
    %4118 = vmatpush1.msra.mxu0 %v4117
    %4119 = vmatprep.subr.mxu0 0.0
    %v4120 = vand.u32 %v3736, 4294901760
    %4121 = vmatpush1.msra.mxu0 %v4120
    %4122 = vmatprep.subr.mxu0 0.0
    %v4123 = vand.u32 %v3737, 4294901760
    %4124 = vmatpush1.msra.mxu0 %v4123
    %4125 = vmatprep.subr.mxu0 0.0
    %v4126 = vand.u32 %v3738, 4294901760
    %4127 = vmatpush1.msra.mxu0 %v4126
    %4128 = vmatprep.subr.mxu0 0.0
    %v4129 = vand.u32 %v3739, 4294901760
    %4130 = vmatpush1.msra.mxu0 %v4129
    %4131 = vmatprep.subr.mxu0 0.0
    %v4132 = vand.u32 %v3740, 4294901760
    %4133 = vmatpush1.msra.mxu0 %v4132
    %4134 = vmatprep.subr.mxu0 0.0
    %v4135 = vand.u32 %v3741, 4294901760
    %4136 = vmatpush1.msra.mxu0 %v4135
    %4137 = vmatprep.subr.mxu0 0.0
    %v4138 = vand.u32 %v3742, 4294901760
    %4139 = vmatpush1.msra.mxu0 %v4138
    %4140 = vmatprep.subr.mxu0 0.0
    %v4141 = vand.u32 %v3743, 4294901760
    %4142 = vmatpush1.msra.mxu0 %v4141
    %4143 = vmatprep.subr.mxu0 0.0
    %v4144 = vand.u32 %v3744, 4294901760
    %4145 = vmatpush1.msra.mxu0 %v4144
    %4146 = vmatprep.subr.mxu0 0.0
    %4147 = vmatpush1.msra.mxu0 0.0
    %4148 = vmatprep.subr.mxu0 0.0
    %4149 = vmatpush1.msra.mxu0 0.0
    %4150 = vmatprep.subr.mxu0 0.0
    %4151 = vmatpush1.msra.mxu0 0.0
    %4152 = vmatprep.subr.mxu0 0.0
    %4153 = vmatpush1.msra.mxu0 0.0
    %4154 = vmatprep.subr.mxu0 0.0
    %4155 = vmatpush1.msra.mxu0 0.0
    %4156 = vmatprep.subr.mxu0 0.0
    %4157 = vmatpush1.msra.mxu0 0.0
    %4158 = vmatprep.subr.mxu0 0.0
    %4159 = vmatpush1.msra.mxu0 0.0
    %4160 = vmatprep.subr.mxu0 0.0
    %4161 = vmatpush1.msra.mxu0 0.0
    %4162 = vmatprep.subr.mxu0 0.0
    %4163 = vmatpush1.msra.mxu0 0.0
    %4164 = vmatprep.subr.mxu0 0.0
    %4165 = vmatpush1.msra.mxu0 0.0
    %4166 = vmatprep.subr.mxu0 0.0
    %4167 = vmatpush1.msra.mxu0 0.0
    %4168 = vmatprep.subr.mxu0 0.0
    %4169 = vmatpush1.msra.mxu0 0.0
    %4170 = vmatprep.subr.mxu0 0.0
    %4171 = vmatpush1.msra.mxu0 0.0
    %4172 = vmatprep.subr.mxu0 0.0
    %4173 = vmatpush1.msra.mxu0 0.0
    %4174 = vmatprep.subr.mxu0 0.0
    %4175 = vmatpush1.msra.mxu0 0.0
    %4176 = vmatprep.subr.mxu0 0.0
    %4177 = vmatpush1.msra.mxu0 0.0
    %4178 = vmatprep.mubr.f32.mxu0 0.0
    %v4179 = vand.u32 %v3726, 4294901760
    %v4180 = vsub.f32 %v3726, %v4179
    %v4181 = vand.u32 %v4180, 4294901760
    %4182 = vmatmul.mubr.f32.gmra.mrb[0].mxu0 %v4181
    %v4183 = vpop.f32.mrb[0].mxu0
    %v4184 = vadd.f32 %v4095, %v4183
    %v4185 = vpop.f32.mrb[0].mxu0
    %4186 = vdwg.mxu0
    %4187 = vmatprep.subr.mxu0 0.0
    %v4188 = vand.u32 %v3729, 4294901760
    %v4189 = vsub.f32 %v3729, %v4188
    %v4190 = vand.u32 %v4189, 4294901760
    %4191 = vmatpush1.msra.mxu0 %v4190
    %4192 = vmatprep.subr.mxu0 0.0
    %v4193 = vand.u32 %v3730, 4294901760
    %v4194 = vsub.f32 %v3730, %v4193
    %v4195 = vand.u32 %v4194, 4294901760
    %4196 = vmatpush1.msra.mxu0 %v4195
    %4197 = vmatprep.subr.mxu0 0.0
    %v4198 = vand.u32 %v3731, 4294901760
    %v4199 = vsub.f32 %v3731, %v4198
    %v4200 = vand.u32 %v4199, 4294901760
    %4201 = vmatpush1.msra.mxu0 %v4200
    %4202 = vmatprep.subr.mxu0 0.0
    %v4203 = vand.u32 %v3732, 4294901760
    %v4204 = vsub.f32 %v3732, %v4203
    %v4205 = vand.u32 %v4204, 4294901760
    %4206 = vmatpush1.msra.mxu0 %v4205
    %4207 = vmatprep.subr.mxu0 0.0
    %v4208 = vand.u32 %v3733, 4294901760
    %v4209 = vsub.f32 %v3733, %v4208
    %v4210 = vand.u32 %v4209, 4294901760
    %4211 = vmatpush1.msra.mxu0 %v4210
    %4212 = vmatprep.subr.mxu0 0.0
    %v4213 = vand.u32 %v3734, 4294901760
    %v4214 = vsub.f32 %v3734, %v4213
    %v4215 = vand.u32 %v4214, 4294901760
    %4216 = vmatpush1.msra.mxu0 %v4215
    %4217 = vmatprep.subr.mxu0 0.0
    %v4218 = vand.u32 %v3735, 4294901760
    %v4219 = vsub.f32 %v3735, %v4218
    %v4220 = vand.u32 %v4219, 4294901760
    %4221 = vmatpush1.msra.mxu0 %v4220
    %4222 = vmatprep.subr.mxu0 0.0
    %v4223 = vand.u32 %v3736, 4294901760
    %v4224 = vsub.f32 %v3736, %v4223
    %v4225 = vand.u32 %v4224, 4294901760
    %4226 = vmatpush1.msra.mxu0 %v4225
    %4227 = vmatprep.subr.mxu0 0.0
    %v4228 = vand.u32 %v3737, 4294901760
    %v4229 = vsub.f32 %v3737, %v4228
    %v4230 = vand.u32 %v4229, 4294901760
    %4231 = vmatpush1.msra.mxu0 %v4230
    %4232 = vmatprep.subr.mxu0 0.0
    %v4233 = vand.u32 %v3738, 4294901760
    %v4234 = vsub.f32 %v3738, %v4233
    %v4235 = vand.u32 %v4234, 4294901760
    %4236 = vmatpush1.msra.mxu0 %v4235
    %4237 = vmatprep.subr.mxu0 0.0
    %v4238 = vand.u32 %v3739, 4294901760
    %v4239 = vsub.f32 %v3739, %v4238
    %v4240 = vand.u32 %v4239, 4294901760
    %4241 = vmatpush1.msra.mxu0 %v4240
    %4242 = vmatprep.subr.mxu0 0.0
    %v4243 = vand.u32 %v3740, 4294901760
    %v4244 = vsub.f32 %v3740, %v4243
    %v4245 = vand.u32 %v4244, 4294901760
    %4246 = vmatpush1.msra.mxu0 %v4245
    %4247 = vmatprep.subr.mxu0 0.0
    %v4248 = vand.u32 %v3741, 4294901760
    %v4249 = vsub.f32 %v3741, %v4248
    %v4250 = vand.u32 %v4249, 4294901760
    %4251 = vmatpush1.msra.mxu0 %v4250
    %4252 = vmatprep.subr.mxu0 0.0
    %v4253 = vand.u32 %v3742, 4294901760
    %v4254 = vsub.f32 %v3742, %v4253
    %v4255 = vand.u32 %v4254, 4294901760
    %4256 = vmatpush1.msra.mxu0 %v4255
    %4257 = vmatprep.subr.mxu0 0.0
    %v4258 = vand.u32 %v3743, 4294901760
    %v4259 = vsub.f32 %v3743, %v4258
    %v4260 = vand.u32 %v4259, 4294901760
    %4261 = vmatpush1.msra.mxu0 %v4260
    %4262 = vmatprep.subr.mxu0 0.0
    %v4263 = vand.u32 %v3744, 4294901760
    %v4264 = vsub.f32 %v3744, %v4263
    %v4265 = vand.u32 %v4264, 4294901760
    %4266 = vmatpush1.msra.mxu0 %v4265
    %4267 = vmatprep.subr.mxu0 0.0
    %4268 = vmatpush1.msra.mxu0 0.0
    %4269 = vmatprep.subr.mxu0 0.0
    %4270 = vmatpush1.msra.mxu0 0.0
    %4271 = vmatprep.subr.mxu0 0.0
    %4272 = vmatpush1.msra.mxu0 0.0
    %4273 = vmatprep.subr.mxu0 0.0
    %4274 = vmatpush1.msra.mxu0 0.0
    %4275 = vmatprep.subr.mxu0 0.0
    %4276 = vmatpush1.msra.mxu0 0.0
    %4277 = vmatprep.subr.mxu0 0.0
    %4278 = vmatpush1.msra.mxu0 0.0
    %4279 = vmatprep.subr.mxu0 0.0
    %4280 = vmatpush1.msra.mxu0 0.0
    %4281 = vmatprep.subr.mxu0 0.0
    %4282 = vmatpush1.msra.mxu0 0.0
    %4283 = vmatprep.subr.mxu0 0.0
    %4284 = vmatpush1.msra.mxu0 0.0
    %4285 = vmatprep.subr.mxu0 0.0
    %4286 = vmatpush1.msra.mxu0 0.0
    %4287 = vmatprep.subr.mxu0 0.0
    %4288 = vmatpush1.msra.mxu0 0.0
    %4289 = vmatprep.subr.mxu0 0.0
    %4290 = vmatpush1.msra.mxu0 0.0
    %4291 = vmatprep.subr.mxu0 0.0
    %4292 = vmatpush1.msra.mxu0 0.0
    %4293 = vmatprep.subr.mxu0 0.0
    %4294 = vmatpush1.msra.mxu0 0.0
    %4295 = vmatprep.subr.mxu0 0.0
    %4296 = vmatpush1.msra.mxu0 0.0
    %4297 = vmatprep.subr.mxu0 0.0
    %4298 = vmatpush1.msra.mxu0 0.0
    %4299 = vmatprep.mubr.f32.mxu0 0.0
    %v4300 = vand.u32 %v3726, 4294901760
    %4301 = vmatmul.mubr.f32.gmra.mrb[0].mxu0 %v4300
    %v4302 = vpop.f32.mrb[0].mxu0
    %v4303 = vadd.f32 %v4184, %v4302
    %v4304 = vpop.f32.mrb[0].mxu0
    %4305 = vdwg.mxu0
    %4306 = vmatprep.subr.mxu0 0.0
    %v4307 = vand.u32 %v3729, 4294901760
    %4308 = vmatpush1.msra.mxu0 %v4307
    %4309 = vmatprep.subr.mxu0 0.0
    %v4310 = vand.u32 %v3730, 4294901760
    %4311 = vmatpush1.msra.mxu0 %v4310
    %4312 = vmatprep.subr.mxu0 0.0
    %v4313 = vand.u32 %v3731, 4294901760
    %4314 = vmatpush1.msra.mxu0 %v4313
    %4315 = vmatprep.subr.mxu0 0.0
    %v4316 = vand.u32 %v3732, 4294901760
    %4317 = vmatpush1.msra.mxu0 %v4316
    %4318 = vmatprep.subr.mxu0 0.0
    %v4319 = vand.u32 %v3733, 4294901760
    %4320 = vmatpush1.msra.mxu0 %v4319
    %4321 = vmatprep.subr.mxu0 0.0
    %v4322 = vand.u32 %v3734, 4294901760
    %4323 = vmatpush1.msra.mxu0 %v4322
    %4324 = vmatprep.subr.mxu0 0.0
    %v4325 = vand.u32 %v3735, 4294901760
    %4326 = vmatpush1.msra.mxu0 %v4325
    %4327 = vmatprep.subr.mxu0 0.0
    %v4328 = vand.u32 %v3736, 4294901760
    %4329 = vmatpush1.msra.mxu0 %v4328
    %4330 = vmatprep.subr.mxu0 0.0
    %v4331 = vand.u32 %v3737, 4294901760
    %4332 = vmatpush1.msra.mxu0 %v4331
    %4333 = vmatprep.subr.mxu0 0.0
    %v4334 = vand.u32 %v3738, 4294901760
    %4335 = vmatpush1.msra.mxu0 %v4334
    %4336 = vmatprep.subr.mxu0 0.0
    %v4337 = vand.u32 %v3739, 4294901760
    %4338 = vmatpush1.msra.mxu0 %v4337
    %4339 = vmatprep.subr.mxu0 0.0
    %v4340 = vand.u32 %v3740, 4294901760
    %4341 = vmatpush1.msra.mxu0 %v4340
    %4342 = vmatprep.subr.mxu0 0.0
    %v4343 = vand.u32 %v3741, 4294901760
    %4344 = vmatpush1.msra.mxu0 %v4343
    %4345 = vmatprep.subr.mxu0 0.0
    %v4346 = vand.u32 %v3742, 4294901760
    %4347 = vmatpush1.msra.mxu0 %v4346
    %4348 = vmatprep.subr.mxu0 0.0
    %v4349 = vand.u32 %v3743, 4294901760
    %4350 = vmatpush1.msra.mxu0 %v4349
    %4351 = vmatprep.subr.mxu0 0.0
    %v4352 = vand.u32 %v3744, 4294901760
    %4353 = vmatpush1.msra.mxu0 %v4352
    %4354 = vmatprep.subr.mxu0 0.0
    %4355 = vmatpush1.msra.mxu0 0.0
    %4356 = vmatprep.subr.mxu0 0.0
    %4357 = vmatpush1.msra.mxu0 0.0
    %4358 = vmatprep.subr.mxu0 0.0
    %4359 = vmatpush1.msra.mxu0 0.0
    %4360 = vmatprep.subr.mxu0 0.0
    %4361 = vmatpush1.msra.mxu0 0.0
    %4362 = vmatprep.subr.mxu0 0.0
    %4363 = vmatpush1.msra.mxu0 0.0
    %4364 = vmatprep.subr.mxu0 0.0
    %4365 = vmatpush1.msra.mxu0 0.0
    %4366 = vmatprep.subr.mxu0 0.0
    %4367 = vmatpush1.msra.mxu0 0.0
    %4368 = vmatprep.subr.mxu0 0.0
    %4369 = vmatpush1.msra.mxu0 0.0
    %4370 = vmatprep.subr.mxu0 0.0
    %4371 = vmatpush1.msra.mxu0 0.0
    %4372 = vmatprep.subr.mxu0 0.0
    %4373 = vmatpush1.msra.mxu0 0.0
    %4374 = vmatprep.subr.mxu0 0.0
    %4375 = vmatpush1.msra.mxu0 0.0
    %4376 = vmatprep.subr.mxu0 0.0
    %4377 = vmatpush1.msra.mxu0 0.0
    %4378 = vmatprep.subr.mxu0 0.0
    %4379 = vmatpush1.msra.mxu0 0.0
    %4380 = vmatprep.subr.mxu0 0.0
    %4381 = vmatpush1.msra.mxu0 0.0
    %4382 = vmatprep.subr.mxu0 0.0
    %4383 = vmatpush1.msra.mxu0 0.0
    %4384 = vmatprep.subr.mxu0 0.0
    %4385 = vmatpush1.msra.mxu0 0.0
    %4386 = vmatprep.mubr.f32.mxu0 0.0
    %v4387 = vand.u32 %v3726, 4294901760
    %4388 = vmatmul.mubr.f32.gmra.mrb[0].mxu0 %v4387
    %v4389 = vpop.f32.mrb[0].mxu0
    %v4390 = vadd.f32 %v4303, %v4389
    %v4391 = vpop.f32.mrb[0].mxu0
    %4392 = vdwg.mxu0
    %v4393 = vtanh.pop %v4390
    %v4394 = vld [vmem:[%s9] sm:$0xff]
    %v4395 = vld [vmem:[%s9 + $0x8] sm:$0xff]
    %v4396 = vld [vmem:[%s9 + $0x10] sm:$0xff]
    %v4397 = vld [vmem:[#allocation2] sm:$0x1]
    %v4399 = vlaneseq
    %v4400 = vshrl.u32 %v4399, 7
    %v4401 = vsub.s32 0, %v4400
    %v4402 = vrot.slane %v4397, %v4401
    %vm4404 = vcmask 195584
    %v4406 = vsel %vm4404, %v4393, 0
    %4408 = vmatprep.subr.mxu0 0.0
    %v4409 = vand.u32 %v4394, 4294901760
    %4410 = vmatpush1.msra.mxu0 %v4409
    %4411 = vmatprep.subr.mxu0 0.0
    %v4412 = vand.u32 %v4395, 4294901760
    %4413 = vmatpush1.msra.mxu0 %v4412
    %4414 = vmatprep.subr.mxu0 0.0
    %v4415 = vand.u32 %v4396, 4294901760
    %4416 = vmatpush1.msra.mxu0 %v4415
    %4417 = vmatprep.subr.mxu0 0.0
    %4418 = vmatpush1.msra.mxu0 0.0
    %4419 = vmatprep.subr.mxu0 0.0
    %4420 = vmatpush1.msra.mxu0 0.0
    %4421 = vmatprep.subr.mxu0 0.0
    %4422 = vmatpush1.msra.mxu0 0.0
    %4423 = vmatprep.subr.mxu0 0.0
    %4424 = vmatpush1.msra.mxu0 0.0
    %4425 = vmatprep.subr.mxu0 0.0
    %4426 = vmatpush1.msra.mxu0 0.0
    %4427 = vmatprep.subr.mxu0 0.0
    %4428 = vmatpush1.msra.mxu0 0.0
    %4429 = vmatprep.subr.mxu0 0.0
    %4430 = vmatpush1.msra.mxu0 0.0
    %4431 = vmatprep.subr.mxu0 0.0
    %4432 = vmatpush1.msra.mxu0 0.0
    %4433 = vmatprep.subr.mxu0 0.0
    %4434 = vmatpush1.msra.mxu0 0.0
    %4435 = vmatprep.subr.mxu0 0.0
    %4436 = vmatpush1.msra.mxu0 0.0
    %4437 = vmatprep.subr.mxu0 0.0
    %4438 = vmatpush1.msra.mxu0 0.0
    %4439 = vmatprep.subr.mxu0 0.0
    %4440 = vmatpush1.msra.mxu0 0.0
    %4441 = vmatprep.subr.mxu0 0.0
    %4442 = vmatpush1.msra.mxu0 0.0
    %4443 = vmatprep.subr.mxu0 0.0
    %4444 = vmatpush1.msra.mxu0 0.0
    %4445 = vmatprep.subr.mxu0 0.0
    %4446 = vmatpush1.msra.mxu0 0.0
    %4447 = vmatprep.subr.mxu0 0.0
    %4448 = vmatpush1.msra.mxu0 0.0
    %4449 = vmatprep.subr.mxu0 0.0
    %4450 = vmatpush1.msra.mxu0 0.0
    %4451 = vmatprep.subr.mxu0 0.0
    %4452 = vmatpush1.msra.mxu0 0.0
    %4453 = vmatprep.subr.mxu0 0.0
    %4454 = vmatpush1.msra.mxu0 0.0
    %4455 = vmatprep.subr.mxu0 0.0
    %4456 = vmatpush1.msra.mxu0 0.0
    %4457 = vmatprep.subr.mxu0 0.0
    %4458 = vmatpush1.msra.mxu0 0.0
    %4459 = vmatprep.subr.mxu0 0.0
    %4460 = vmatpush1.msra.mxu0 0.0
    %4461 = vmatprep.subr.mxu0 0.0
    %4462 = vmatpush1.msra.mxu0 0.0
    %4463 = vmatprep.subr.mxu0 0.0
    %4464 = vmatpush1.msra.mxu0 0.0
    %4465 = vmatprep.subr.mxu0 0.0
    %4466 = vmatpush1.msra.mxu0 0.0
    %4467 = vmatprep.subr.mxu0 0.0
    %4468 = vmatpush1.msra.mxu0 0.0
    %4469 = vmatprep.subr.mxu0 0.0
    %4470 = vmatpush1.msra.mxu0 0.0
    %4471 = vmatprep.subr.mxu0 0.0
    %4472 = vmatpush1.msra.mxu0 0.0
    %4473 = vmatprep.subr.mxu0 0.0
    %4474 = vmatpush1.msra.mxu0 0.0
    %4475 = vmatprep.mubr.f32.mxu0 0.0
    %v4476 = vand.u32 %v4406, 4294901760
    %v4477 = vsub.f32 %v4406, %v4476
    %v4478 = vand.u32 %v4477, 4294901760
    %v4479 = vsub.f32 %v4477, %v4478
    %v4480 = vand.u32 %v4479, 4294901760
    %4481 = vmatmul.mubr.f32.gmra.mrb[0].mxu0 %v4480
    %v4482 = vpop.f32.mrb[0].mxu0
    %v4483 = vadd.f32 %v4402, %v4482
    %v4484 = vpop.f32.mrb[0].mxu0
    %4485 = vdwg.mxu0
    %4486 = vmatprep.subr.mxu0 0.0
    %v4487 = vand.u32 %v4394, 4294901760
    %v4488 = vsub.f32 %v4394, %v4487
    %v4489 = vand.u32 %v4488, 4294901760
    %v4490 = vsub.f32 %v4488, %v4489
    %v4491 = vand.u32 %v4490, 4294901760
    %4492 = vmatpush1.msra.mxu0 %v4491
    %4493 = vmatprep.subr.mxu0 0.0
    %v4494 = vand.u32 %v4395, 4294901760
    %v4495 = vsub.f32 %v4395, %v4494
    %v4496 = vand.u32 %v4495, 4294901760
    %v4497 = vsub.f32 %v4495, %v4496
    %v4498 = vand.u32 %v4497, 4294901760
    %4499 = vmatpush1.msra.mxu0 %v4498
    %4500 = vmatprep.subr.mxu0 0.0
    %v4501 = vand.u32 %v4396, 4294901760
    %v4502 = vsub.f32 %v4396, %v4501
    %v4503 = vand.u32 %v4502, 4294901760
    %v4504 = vsub.f32 %v4502, %v4503
    %v4505 = vand.u32 %v4504, 4294901760
    %4506 = vmatpush1.msra.mxu0 %v4505
    %4507 = vmatprep.subr.mxu0 0.0
    %4508 = vmatpush1.msra.mxu0 0.0
    %4509 = vmatprep.subr.mxu0 0.0
    %4510 = vmatpush1.msra.mxu0 0.0
    %4511 = vmatprep.subr.mxu0 0.0
    %4512 = vmatpush1.msra.mxu0 0.0
    %4513 = vmatprep.subr.mxu0 0.0
    %4514 = vmatpush1.msra.mxu0 0.0
    %4515 = vmatprep.subr.mxu0 0.0
    %4516 = vmatpush1.msra.mxu0 0.0
    %4517 = vmatprep.subr.mxu0 0.0
    %4518 = vmatpush1.msra.mxu0 0.0
    %4519 = vmatprep.subr.mxu0 0.0
    %4520 = vmatpush1.msra.mxu0 0.0
    %4521 = vmatprep.subr.mxu0 0.0
    %4522 = vmatpush1.msra.mxu0 0.0
    %4523 = vmatprep.subr.mxu0 0.0
    %4524 = vmatpush1.msra.mxu0 0.0
    %4525 = vmatprep.subr.mxu0 0.0
    %4526 = vmatpush1.msra.mxu0 0.0
    %4527 = vmatprep.subr.mxu0 0.0
    %4528 = vmatpush1.msra.mxu0 0.0
    %4529 = vmatprep.subr.mxu0 0.0
    %4530 = vmatpush1.msra.mxu0 0.0
    %4531 = vmatprep.subr.mxu0 0.0
    %4532 = vmatpush1.msra.mxu0 0.0
    %4533 = vmatprep.subr.mxu0 0.0
    %4534 = vmatpush1.msra.mxu0 0.0
    %4535 = vmatprep.subr.mxu0 0.0
    %4536 = vmatpush1.msra.mxu0 0.0
    %4537 = vmatprep.subr.mxu0 0.0
    %4538 = vmatpush1.msra.mxu0 0.0
    %4539 = vmatprep.subr.mxu0 0.0
    %4540 = vmatpush1.msra.mxu0 0.0
    %4541 = vmatprep.subr.mxu0 0.0
    %4542 = vmatpush1.msra.mxu0 0.0
    %4543 = vmatprep.subr.mxu0 0.0
    %4544 = vmatpush1.msra.mxu0 0.0
    %4545 = vmatprep.subr.mxu0 0.0
    %4546 = vmatpush1.msra.mxu0 0.0
    %4547 = vmatprep.subr.mxu0 0.0
    %4548 = vmatpush1.msra.mxu0 0.0
    %4549 = vmatprep.subr.mxu0 0.0
    %4550 = vmatpush1.msra.mxu0 0.0
    %4551 = vmatprep.subr.mxu0 0.0
    %4552 = vmatpush1.msra.mxu0 0.0
    %4553 = vmatprep.subr.mxu0 0.0
    %4554 = vmatpush1.msra.mxu0 0.0
    %4555 = vmatprep.subr.mxu0 0.0
    %4556 = vmatpush1.msra.mxu0 0.0
    %4557 = vmatprep.subr.mxu0 0.0
    %4558 = vmatpush1.msra.mxu0 0.0
    %4559 = vmatprep.subr.mxu0 0.0
    %4560 = vmatpush1.msra.mxu0 0.0
    %4561 = vmatprep.subr.mxu0 0.0
    %4562 = vmatpush1.msra.mxu0 0.0
    %4563 = vmatprep.subr.mxu0 0.0
    %4564 = vmatpush1.msra.mxu0 0.0
    %4565 = vmatprep.mubr.f32.mxu0 0.0
    %v4566 = vand.u32 %v4406, 4294901760
    %4567 = vmatmul.mubr.f32.gmra.mrb[0].mxu0 %v4566
    %v4568 = vpop.f32.mrb[0].mxu0
    %v4569 = vadd.f32 %v4483, %v4568
    %v4570 = vpop.f32.mrb[0].mxu0
    %4571 = vdwg.mxu0
    %4572 = vmatprep.subr.mxu0 0.0
    %v4573 = vand.u32 %v4394, 4294901760
    %v4574 = vsub.f32 %v4394, %v4573
    %4575 = vmatpush1.msra.mxu0 %v4574
    %4576 = vmatprep.subr.mxu0 0.0
    %v4577 = vand.u32 %v4395, 4294901760
    %v4578 = vsub.f32 %v4395, %v4577
    %4579 = vmatpush1.msra.mxu0 %v4578
    %4580 = vmatprep.subr.mxu0 0.0
    %v4581 = vand.u32 %v4396, 4294901760
    %v4582 = vsub.f32 %v4396, %v4581
    %4583 = vmatpush1.msra.mxu0 %v4582
    %4584 = vmatprep.subr.mxu0 0.0
    %4585 = vmatpush1.msra.mxu0 0.0
    %4586 = vmatprep.subr.mxu0 0.0
    %4587 = vmatpush1.msra.mxu0 0.0
    %4588 = vmatprep.subr.mxu0 0.0
    %4589 = vmatpush1.msra.mxu0 0.0
    %4590 = vmatprep.subr.mxu0 0.0
    %4591 = vmatpush1.msra.mxu0 0.0
    %4592 = vmatprep.subr.mxu0 0.0
    %4593 = vmatpush1.msra.mxu0 0.0
    %4594 = vmatprep.subr.mxu0 0.0
    %4595 = vmatpush1.msra.mxu0 0.0
    %4596 = vmatprep.subr.mxu0 0.0
    %4597 = vmatpush1.msra.mxu0 0.0
    %4598 = vmatprep.subr.mxu0 0.0
    %4599 = vmatpush1.msra.mxu0 0.0
    %4600 = vmatprep.subr.mxu0 0.0
    %4601 = vmatpush1.msra.mxu0 0.0
    %4602 = vmatprep.subr.mxu0 0.0
    %4603 = vmatpush1.msra.mxu0 0.0
    %4604 = vmatprep.subr.mxu0 0.0
    %4605 = vmatpush1.msra.mxu0 0.0
    %4606 = vmatprep.subr.mxu0 0.0
    %4607 = vmatpush1.msra.mxu0 0.0
    %4608 = vmatprep.subr.mxu0 0.0
    %4609 = vmatpush1.msra.mxu0 0.0
    %4610 = vmatprep.subr.mxu0 0.0
    %4611 = vmatpush1.msra.mxu0 0.0
    %4612 = vmatprep.subr.mxu0 0.0
    %4613 = vmatpush1.msra.mxu0 0.0
    %4614 = vmatprep.subr.mxu0 0.0
    %4615 = vmatpush1.msra.mxu0 0.0
    %4616 = vmatprep.subr.mxu0 0.0
    %4617 = vmatpush1.msra.mxu0 0.0
    %4618 = vmatprep.subr.mxu0 0.0
    %4619 = vmatpush1.msra.mxu0 0.0
    %4620 = vmatprep.subr.mxu0 0.0
    %4621 = vmatpush1.msra.mxu0 0.0
    %4622 = vmatprep.subr.mxu0 0.0
    %4623 = vmatpush1.msra.mxu0 0.0
    %4624 = vmatprep.subr.mxu0 0.0
    %4625 = vmatpush1.msra.mxu0 0.0
    %4626 = vmatprep.subr.mxu0 0.0
    %4627 = vmatpush1.msra.mxu0 0.0
    %4628 = vmatprep.subr.mxu0 0.0
    %4629 = vmatpush1.msra.mxu0 0.0
    %4630 = vmatprep.subr.mxu0 0.0
    %4631 = vmatpush1.msra.mxu0 0.0
    %4632 = vmatprep.subr.mxu0 0.0
    %4633 = vmatpush1.msra.mxu0 0.0
    %4634 = vmatprep.subr.mxu0 0.0
    %4635 = vmatpush1.msra.mxu0 0.0
    %4636 = vmatprep.subr.mxu0 0.0
    %4637 = vmatpush1.msra.mxu0 0.0
    %4638 = vmatprep.subr.mxu0 0.0
    %4639 = vmatpush1.msra.mxu0 0.0
    %4640 = vmatprep.subr.mxu0 0.0
    %4641 = vmatpush1.msra.mxu0 0.0
    %4642 = vmatprep.mubr.f32.mxu0 0.0
    %v4643 = vand.u32 %v4406, 4294901760
    %v4644 = vsub.f32 %v4406, %v4643
    %4645 = vmatmul.mubr.f32.gmra.mrb[0].mxu0 %v4644
    %v4646 = vpop.f32.mrb[0].mxu0
    %v4647 = vadd.f32 %v4569, %v4646
    %v4648 = vpop.f32.mrb[0].mxu0
    %4649 = vdwg.mxu0
    %4650 = vmatprep.subr.mxu0 0.0
    %v4651 = vand.u32 %v4394, 4294901760
    %4652 = vmatpush1.msra.mxu0 %v4651
    %4653 = vmatprep.subr.mxu0 0.0
    %v4654 = vand.u32 %v4395, 4294901760
    %4655 = vmatpush1.msra.mxu0 %v4654
    %4656 = vmatprep.subr.mxu0 0.0
    %v4657 = vand.u32 %v4396, 4294901760
    %4658 = vmatpush1.msra.mxu0 %v4657
    %4659 = vmatprep.subr.mxu0 0.0
    %4660 = vmatpush1.msra.mxu0 0.0
    %4661 = vmatprep.subr.mxu0 0.0
    %4662 = vmatpush1.msra.mxu0 0.0
    %4663 = vmatprep.subr.mxu0 0.0
    %4664 = vmatpush1.msra.mxu0 0.0
    %4665 = vmatprep.subr.mxu0 0.0
    %4666 = vmatpush1.msra.mxu0 0.0
    %4667 = vmatprep.subr.mxu0 0.0
    %4668 = vmatpush1.msra.mxu0 0.0
    %4669 = vmatprep.subr.mxu0 0.0
    %4670 = vmatpush1.msra.mxu0 0.0
    %4671 = vmatprep.subr.mxu0 0.0
    %4672 = vmatpush1.msra.mxu0 0.0
    %4673 = vmatprep.subr.mxu0 0.0
    %4674 = vmatpush1.msra.mxu0 0.0
    %4675 = vmatprep.subr.mxu0 0.0
    %4676 = vmatpush1.msra.mxu0 0.0
    %4677 = vmatprep.subr.mxu0 0.0
    %4678 = vmatpush1.msra.mxu0 0.0
    %4679 = vmatprep.subr.mxu0 0.0
    %4680 = vmatpush1.msra.mxu0 0.0
    %4681 = vmatprep.subr.mxu0 0.0
    %4682 = vmatpush1.msra.mxu0 0.0
    %4683 = vmatprep.subr.mxu0 0.0
    %4684 = vmatpush1.msra.mxu0 0.0
    %4685 = vmatprep.subr.mxu0 0.0
    %4686 = vmatpush1.msra.mxu0 0.0
    %4687 = vmatprep.subr.mxu0 0.0
    %4688 = vmatpush1.msra.mxu0 0.0
    %4689 = vmatprep.subr.mxu0 0.0
    %4690 = vmatpush1.msra.mxu0 0.0
    %4691 = vmatprep.subr.mxu0 0.0
    %4692 = vmatpush1.msra.mxu0 0.0
    %4693 = vmatprep.subr.mxu0 0.0
    %4694 = vmatpush1.msra.mxu0 0.0
    %4695 = vmatprep.subr.mxu0 0.0
    %4696 = vmatpush1.msra.mxu0 0.0
    %4697 = vmatprep.subr.mxu0 0.0
    %4698 = vmatpush1.msra.mxu0 0.0
    %4699 = vmatprep.subr.mxu0 0.0
    %4700 = vmatpush1.msra.mxu0 0.0
    %4701 = vmatprep.subr.mxu0 0.0
    %4702 = vmatpush1.msra.mxu0 0.0
    %4703 = vmatprep.subr.mxu0 0.0
    %4704 = vmatpush1.msra.mxu0 0.0
    %4705 = vmatprep.subr.mxu0 0.0
    %4706 = vmatpush1.msra.mxu0 0.0
    %4707 = vmatprep.subr.mxu0 0.0
    %4708 = vmatpush1.msra.mxu0 0.0
    %4709 = vmatprep.subr.mxu0 0.0
    %4710 = vmatpush1.msra.mxu0 0.0
    %4711 = vmatprep.subr.mxu0 0.0
    %4712 = vmatpush1.msra.mxu0 0.0
    %4713 = vmatprep.subr.mxu0 0.0
    %4714 = vmatpush1.msra.mxu0 0.0
    %4715 = vmatprep.subr.mxu0 0.0
    %4716 = vmatpush1.msra.mxu0 0.0
    %4717 = vmatprep.mubr.f32.mxu0 0.0
    %v4718 = vand.u32 %v4406, 4294901760
    %v4719 = vsub.f32 %v4406, %v4718
    %v4720 = vand.u32 %v4719, 4294901760
    %4721 = vmatmul.mubr.f32.gmra.mrb[0].mxu0 %v4720
    %v4722 = vpop.f32.mrb[0].mxu0
    %v4723 = vadd.f32 %v4647, %v4722
    %v4724 = vpop.f32.mrb[0].mxu0
    %4725 = vdwg.mxu0
    %4726 = vmatprep.subr.mxu0 0.0
    %v4727 = vand.u32 %v4394, 4294901760
    %v4728 = vsub.f32 %v4394, %v4727
    %v4729 = vand.u32 %v4728, 4294901760
    %4730 = vmatpush1.msra.mxu0 %v4729
    %4731 = vmatprep.subr.mxu0 0.0
    %v4732 = vand.u32 %v4395, 4294901760
    %v4733 = vsub.f32 %v4395, %v4732
    %v4734 = vand.u32 %v4733, 4294901760
    %4735 = vmatpush1.msra.mxu0 %v4734
    %4736 = vmatprep.subr.mxu0 0.0
    %v4737 = vand.u32 %v4396, 4294901760
    %v4738 = vsub.f32 %v4396, %v4737
    %v4739 = vand.u32 %v4738, 4294901760
    %4740 = vmatpush1.msra.mxu0 %v4739
    %4741 = vmatprep.subr.mxu0 0.0
    %4742 = vmatpush1.msra.mxu0 0.0
    %4743 = vmatprep.subr.mxu0 0.0
    %4744 = vmatpush1.msra.mxu0 0.0
    %4745 = vmatprep.subr.mxu0 0.0
    %4746 = vmatpush1.msra.mxu0 0.0
    %4747 = vmatprep.subr.mxu0 0.0
    %4748 = vmatpush1.msra.mxu0 0.0
    %4749 = vmatprep.subr.mxu0 0.0
    %4750 = vmatpush1.msra.mxu0 0.0
    %4751 = vmatprep.subr.mxu0 0.0
    %4752 = vmatpush1.msra.mxu0 0.0
    %4753 = vmatprep.subr.mxu0 0.0
    %4754 = vmatpush1.msra.mxu0 0.0
    %4755 = vmatprep.subr.mxu0 0.0
    %4756 = vmatpush1.msra.mxu0 0.0
    %4757 = vmatprep.subr.mxu0 0.0
    %4758 = vmatpush1.msra.mxu0 0.0
    %4759 = vmatprep.subr.mxu0 0.0
    %4760 = vmatpush1.msra.mxu0 0.0
    %4761 = vmatprep.subr.mxu0 0.0
    %4762 = vmatpush1.msra.mxu0 0.0
    %4763 = vmatprep.subr.mxu0 0.0
    %4764 = vmatpush1.msra.mxu0 0.0
    %4765 = vmatprep.subr.mxu0 0.0
    %4766 = vmatpush1.msra.mxu0 0.0
    %4767 = vmatprep.subr.mxu0 0.0
    %4768 = vmatpush1.msra.mxu0 0.0
    %4769 = vmatprep.subr.mxu0 0.0
    %4770 = vmatpush1.msra.mxu0 0.0
    %4771 = vmatprep.subr.mxu0 0.0
    %4772 = vmatpush1.msra.mxu0 0.0
    %4773 = vmatprep.subr.mxu0 0.0
    %4774 = vmatpush1.msra.mxu0 0.0
    %4775 = vmatprep.subr.mxu0 0.0
    %4776 = vmatpush1.msra.mxu0 0.0
    %4777 = vmatprep.subr.mxu0 0.0
    %4778 = vmatpush1.msra.mxu0 0.0
    %4779 = vmatprep.subr.mxu0 0.0
    %4780 = vmatpush1.msra.mxu0 0.0
    %4781 = vmatprep.subr.mxu0 0.0
    %4782 = vmatpush1.msra.mxu0 0.0
    %4783 = vmatprep.subr.mxu0 0.0
    %4784 = vmatpush1.msra.mxu0 0.0
    %4785 = vmatprep.subr.mxu0 0.0
    %4786 = vmatpush1.msra.mxu0 0.0
    %4787 = vmatprep.subr.mxu0 0.0
    %4788 = vmatpush1.msra.mxu0 0.0
    %4789 = vmatprep.subr.mxu0 0.0
    %4790 = vmatpush1.msra.mxu0 0.0
    %4791 = vmatprep.subr.mxu0 0.0
    %4792 = vmatpush1.msra.mxu0 0.0
    %4793 = vmatprep.subr.mxu0 0.0
    %4794 = vmatpush1.msra.mxu0 0.0
    %4795 = vmatprep.subr.mxu0 0.0
    %4796 = vmatpush1.msra.mxu0 0.0
    %4797 = vmatprep.subr.mxu0 0.0
    %4798 = vmatpush1.msra.mxu0 0.0
    %4799 = vmatprep.mubr.f32.mxu0 0.0
    %v4800 = vand.u32 %v4406, 4294901760
    %4801 = vmatmul.mubr.f32.gmra.mrb[0].mxu0 %v4800
    %v4802 = vpop.f32.mrb[0].mxu0
    %v4803 = vadd.f32 %v4723, %v4802
    %v4804 = vpop.f32.mrb[0].mxu0
    %4805 = vdwg.mxu0
    %4806 = vmatprep.subr.mxu0 0.0
    %v4807 = vand.u32 %v4394, 4294901760
    %4808 = vmatpush1.msra.mxu0 %v4807
    %4809 = vmatprep.subr.mxu0 0.0
    %v4810 = vand.u32 %v4395, 4294901760
    %4811 = vmatpush1.msra.mxu0 %v4810
    %4812 = vmatprep.subr.mxu0 0.0
    %v4813 = vand.u32 %v4396, 4294901760
    %4814 = vmatpush1.msra.mxu0 %v4813
    %4815 = vmatprep.subr.mxu0 0.0
    %4816 = vmatpush1.msra.mxu0 0.0
    %4817 = vmatprep.subr.mxu0 0.0
    %4818 = vmatpush1.msra.mxu0 0.0
    %4819 = vmatprep.subr.mxu0 0.0
    %4820 = vmatpush1.msra.mxu0 0.0
    %4821 = vmatprep.subr.mxu0 0.0
    %4822 = vmatpush1.msra.mxu0 0.0
    %4823 = vmatprep.subr.mxu0 0.0
    %4824 = vmatpush1.msra.mxu0 0.0
    %4825 = vmatprep.subr.mxu0 0.0
    %4826 = vmatpush1.msra.mxu0 0.0
    %4827 = vmatprep.subr.mxu0 0.0
    %4828 = vmatpush1.msra.mxu0 0.0
    %4829 = vmatprep.subr.mxu0 0.0
    %4830 = vmatpush1.msra.mxu0 0.0
    %4831 = vmatprep.subr.mxu0 0.0
    %4832 = vmatpush1.msra.mxu0 0.0
    %4833 = vmatprep.subr.mxu0 0.0
    %4834 = vmatpush1.msra.mxu0 0.0
    %4835 = vmatprep.subr.mxu0 0.0
    %4836 = vmatpush1.msra.mxu0 0.0
    %4837 = vmatprep.subr.mxu0 0.0
    %4838 = vmatpush1.msra.mxu0 0.0
    %4839 = vmatprep.subr.mxu0 0.0
    %4840 = vmatpush1.msra.mxu0 0.0
    %4841 = vmatprep.subr.mxu0 0.0
    %4842 = vmatpush1.msra.mxu0 0.0
    %4843 = vmatprep.subr.mxu0 0.0
    %4844 = vmatpush1.msra.mxu0 0.0
    %4845 = vmatprep.subr.mxu0 0.0
    %4846 = vmatpush1.msra.mxu0 0.0
    %4847 = vmatprep.subr.mxu0 0.0
    %4848 = vmatpush1.msra.mxu0 0.0
    %4849 = vmatprep.subr.mxu0 0.0
    %4850 = vmatpush1.msra.mxu0 0.0
    %4851 = vmatprep.subr.mxu0 0.0
    %4852 = vmatpush1.msra.mxu0 0.0
    %4853 = vmatprep.subr.mxu0 0.0
    %4854 = vmatpush1.msra.mxu0 0.0
    %4855 = vmatprep.subr.mxu0 0.0
    %4856 = vmatpush1.msra.mxu0 0.0
    %4857 = vmatprep.subr.mxu0 0.0
    %4858 = vmatpush1.msra.mxu0 0.0
    %4859 = vmatprep.subr.mxu0 0.0
    %4860 = vmatpush1.msra.mxu0 0.0
    %4861 = vmatprep.subr.mxu0 0.0
    %4862 = vmatpush1.msra.mxu0 0.0
    %4863 = vmatprep.subr.mxu0 0.0
    %4864 = vmatpush1.msra.mxu0 0.0
    %4865 = vmatprep.subr.mxu0 0.0
    %4866 = vmatpush1.msra.mxu0 0.0
    %4867 = vmatprep.subr.mxu0 0.0
    %4868 = vmatpush1.msra.mxu0 0.0
    %4869 = vmatprep.subr.mxu0 0.0
    %4870 = vmatpush1.msra.mxu0 0.0
    %4871 = vmatprep.subr.mxu0 0.0
    %4872 = vmatpush1.msra.mxu0 0.0
    %4873 = vmatprep.mubr.f32.mxu0 0.0
    %v4874 = vand.u32 %v4406, 4294901760
    %4875 = vmatmul.mubr.f32.gmra.mrb[0].mxu0 %v4874
    %v4876 = vpop.f32.mrb[0].mxu0
    %v4877 = vadd.f32 %v4803, %v4876
    %v4878 = vpop.f32.mrb[0].mxu0
    %4879 = vdwg.mxu0
    %v4880 = vsub.f32 0.0, %v4877
    %v4881 = vmul.f32 %v4880, 1.442695
    %v4882 = vpow.pop %v4881
    %v4883 = vadd.f32 %v4882, 1.0
    %v4884 = vrcp.pop %v4883
    %v4885 = vmul.f32 1.0, %v4884
    %vm4886 = vcmask 1024
    %4887 = vst.msk [vmem:[%s11] sm:$0x3] %vm4886, %v4885
    // Predicated region
    $region54: #{tpu_custom_call.1} parent=1 // pred_check
      _
    $region55: #{tpu_custom_call.1} parent=1 // pred_check_branch
      %4889 = sbr.rel (0) target = $region57
    $region56: #{tpu_custom_call.1} parent=1 // pred_region
      _
    $region57: #{tpu_custom_call.1} parent=1 // pred_fallthru
      _
    // Predicated region
    $region58: #{tpu_custom_call.1} parent=1 // pred_check
      _
    $region59: #{tpu_custom_call.1} parent=1 // pred_check_branch
      %4891 = sbr.rel (0) target = $region61
    $region60: #{tpu_custom_call.1} parent=1 // pred_region
      _
    $region61: #{tpu_custom_call.1} parent=1 // pred_fallthru
      _
    %4892 = vsyncpa [#allocation4], 1
    %4893 = vsyncpa [#allocation6], 1

</llo_original>
